<compile_context>
chip_gen: v7x
topology: tpu7x:2x2x1
jax: 0.10.0
libtpu: 0.0.40
codegen_flags: <defaults>
</compile_context>

<pallas_src>
import functools
from typing import Any, NamedTuple

import jax
import jax.numpy as jnp
from jax.experimental import pallas as pl
from jax.experimental.pallas import tpu as pltpu


# ----------------------------------------------------------------------------
# Small helpers
# ----------------------------------------------------------------------------
def _round_up(x, m):
    return (x + m - 1) // m * m


def _choose_t_blk(seq_len, t_blk_max):
    """Largest divisor of seq_len that is <= t_blk_max (timesteps per grid step)."""
    for t in range(min(seq_len, t_blk_max), 0, -1):
        if seq_len % t == 0:
            return t
    return 1


class LSTMConfig(NamedTuple):
    input_size: int
    hidden_size: int
    num_layers: int
    output_size: int
    hidden_pad: int
    output_pad: int
    compute_dtype: Any


# ----------------------------------------------------------------------------
# Kernel 1: hoisted layer-0 input projection  (S*B, D) @ (D, 4Hp) + b
# ----------------------------------------------------------------------------
def _proj_kernel(x_ref, w_ref, b_ref, out_ref):
    out_ref[...] = (
        jnp.dot(x_ref[...], w_ref[...], preferred_element_type=jnp.float32)
        + b_ref[...]
    ).astype(out_ref.dtype)


def _input_projection(x2d, w, b):
    """x2d: (M, D), w: (D, N), b: (1, N) -> (M, N) float32, tiled over M."""
    m, d = x2d.shape
    n = w.shape[1]
    tm = m if m <= 512 else 256
    mp = _round_up(m, tm)
    if mp != m:
        x2d = jnp.pad(x2d, ((0, mp - m), (0, 0)))
    out = pl.pallas_call(
        _proj_kernel,
        out_shape=jax.ShapeDtypeStruct((mp, n), jnp.float32),
        grid=(mp // tm,),
        in_specs=[
            pl.BlockSpec((tm, d), lambda i: (i, 0)),
            pl.BlockSpec((d, n), lambda i: (0, 0)),
            pl.BlockSpec((1, n), lambda i: (0, 0)),
        ],
        out_specs=pl.BlockSpec((tm, n), lambda i: (i, 0)),
        compiler_params=pltpu.CompilerParams(
            dimension_semantics=("parallel",)),
    )(x2d, w, b)
    return out[:m] if mp != m else out


# ----------------------------------------------------------------------------
# Kernel 2: fused LSTM stack (all layers) + FC on the last timestep
# ----------------------------------------------------------------------------
def _make_fused_lstm_fc_kernel(num_layers, t_blk, hp, compute_dtype):
    """Builds the fused kernel body (argument list depends on num_layers)."""

    def kernel(*refs):
        r = 0
        gx0_ref = refs[r]; r += 1                 # (t_blk, Bp, 4Hp) precomputed x-gates
        if num_layers > 1:
            wih_ref = refs[r]; r += 1             # (L-1, Hp, 4Hp)
            brest_ref = refs[r]; r += 1           # (L-1, 1, 4Hp)
        whh_ref = refs[r]; r += 1                 # (L, Hp, 4Hp)
        wfc_ref = refs[r]; r += 1                 # (Hp, Op)
        bfc_ref = refs[r]; r += 1                 # (1, Op)
        out_ref = refs[r]; r += 1                 # (Bp, Op)
        h_scr = refs[r]; r += 1                   # (L, Bp, Hp) carried hidden
        c_scr = refs[r]; r += 1                   # (L, Bp, Hp) carried cell
        hblk_scr = refs[r]; r += 1                # (t_blk, Bp, Hp) layer handoff
        gxblk_scr = refs[r] if num_layers > 1 else None  # (t_blk, Bp, 4Hp)

        tb = pl.program_id(0)
        bp = hblk_scr.shape[1]

        @pl.when(tb == 0)
        def _():
            h_scr[...] = jnp.zeros_like(h_scr)
            c_scr[...] = jnp.zeros_like(c_scr)

        def run_layer(layer, gx_read):
            """Run t_blk recurrent steps of one layer; h/c carried in scratch."""

            def body(tt, carry):
                h, c = carry
                gates = gx_read(tt) + jnp.dot(
                    h.astype(compute_dtype), whh_ref[layer],
                    preferred_element_type=jnp.float32)
                i_g = jax.nn.sigmoid(gates[:, 0 * hp:1 * hp])
                f_g = jax.nn.sigmoid(gates[:, 1 * hp:2 * hp])
                g_g = jnp.tanh(gates[:, 2 * hp:3 * hp])
                o_g = jax.nn.sigmoid(gates[:, 3 * hp:4 * hp])
                c = f_g * c + i_g * g_g
                h = o_g * jnp.tanh(c)
                hblk_scr[tt] = h
                return h, c

            h, c = jax.lax.fori_loop(
                0, t_blk, body, (h_scr[layer], c_scr[layer]), unroll=True)
            h_scr[layer] = h
            c_scr[layer] = c
            return h

        # Layer 0: input projection was hoisted out of the recurrence.
        h_last = run_layer(0, lambda tt: gx0_ref[tt])

        # Layers 1..L-1: project the whole time block in one matmul, then recur.
        for layer in range(1, num_layers):
            hb = hblk_scr[...].reshape(t_blk * bp, hp).astype(compute_dtype)
            gx = (jnp.dot(hb, wih_ref[layer - 1],
                          preferred_element_type=jnp.float32)
                  + brest_ref[layer - 1])
            gxblk_scr[...] = gx.reshape(t_blk, bp, 4 * hp)
            h_last = run_layer(layer, lambda tt: gxblk_scr[tt])

        # Fused FC on the very last timestep of the last layer.
        @pl.when(tb == pl.num_programs(0) - 1)
        def _():
            out_ref[...] = (
                jnp.dot(h_last.astype(compute_dtype), wfc_ref[...],
                        preferred_element_type=jnp.float32)
                + bfc_ref[...]
            ).astype(out_ref.dtype)

    return kernel


def _vmem_limit_bytes(num_layers, t_blk, bp, hp, op, cbytes):
    f32 = 4
    gx_blk = t_blk * bp * 4 * hp * f32
    w = num_layers * hp * 4 * hp * cbytes + hp * op * cbytes + op * f32
    if num_layers > 1:
        w += (num_layers - 1) * (hp * 4 * hp * cbytes + 4 * hp * f32)
    out = bp * op * f32
    scr = 2 * num_layers * bp * hp * f32 + t_blk * bp * hp * f32
    if num_layers > 1:
        scr += t_blk * bp * 4 * hp * f32
    total = 2 * (gx_blk + w + out) + scr      # conservatively assume 2x buffering
    return int(min(64 * 1024 * 1024, max(32 * 1024 * 1024, 2 * total)))


# ----------------------------------------------------------------------------
# Parameters: PyTorch-shaped init + padded/stacked kernel params
# ----------------------------------------------------------------------------
def init_params(key, input_size, hidden_size, num_layers, output_size):
    """nn.LSTM / nn.Linear shaped params (gate order i, f, g, o)."""
    params = {"lstm": [], "fc": {}}
    bound = 1.0 / jnp.sqrt(hidden_size)
    for layer in range(num_layers):
        d_in = input_size if layer == 0 else hidden_size
        key, k1, k2, k3, k4 = jax.random.split(key, 5)
        params["lstm"].append({
            "w_ih": jax.random.uniform(k1, (4 * hidden_size, d_in),
                                       minval=-bound, maxval=bound, dtype=jnp.float32),
            "w_hh": jax.random.uniform(k2, (4 * hidden_size, hidden_size),
                                       minval=-bound, maxval=bound, dtype=jnp.float32),
            "b_ih": jax.random.uniform(k3, (4 * hidden_size,),
                                       minval=-bound, maxval=bound, dtype=jnp.float32),
            "b_hh": jax.random.uniform(k4, (4 * hidden_size,),
                                       minval=-bound, maxval=bound, dtype=jnp.float32),
        })
    key, k5, k6 = jax.random.split(key, 3)
    params["fc"] = {
        "w": jax.random.uniform(k5, (output_size, hidden_size),
                                minval=-bound, maxval=bound, dtype=jnp.float32),
        "b": jax.random.uniform(k6, (output_size,),
                                minval=-bound, maxval=bound, dtype=jnp.float32),
    }
    return params


def _pad_gate_cols(w_t, h, hp):
    """(d_in, 4h) with gate-major columns [i|f|g|o] -> (d_in, 4hp), per-gate zero pad."""
    d_in = w_t.shape[0]
    w4 = w_t.reshape(d_in, 4, h)
    w4 = jnp.pad(w4, ((0, 0), (0, 0), (0, hp - h)))
    return w4.reshape(d_in, 4 * hp)


def prepare_kernel_params(params, *, compute_dtype=jnp.float32):
    """Transpose / per-gate pad to Hp=mult(128) / stack layers for the kernels."""
    num_layers = len(params["lstm"])
    h = params["lstm"][0]["w_hh"].shape[1]
    d = params["lstm"][0]["w_ih"].shape[1]
    o = params["fc"]["w"].shape[0]
    hp = _round_up(h, 128)
    op = _round_up(o, 128)

    lp0 = params["lstm"][0]
    w_ih0 = _pad_gate_cols(lp0["w_ih"].T, h, hp).astype(compute_dtype)          # (D, 4Hp)
    b0 = _pad_gate_cols((lp0["b_ih"] + lp0["b_hh"]).reshape(1, 4 * h), h, hp)   # (1, 4Hp)

    def pad_hh(w_hh):
        w_t = _pad_gate_cols(w_hh.T, h, hp)                                     # (H, 4Hp)
        return jnp.pad(w_t, ((0, hp - h), (0, 0))).astype(compute_dtype)        # (Hp, 4Hp)

    kp = {
        "w_ih0": w_ih0,
        "b0": b0,
        "w_hh": jnp.stack([pad_hh(lp["w_hh"]) for lp in params["lstm"]]),       # (L, Hp, 4Hp)
        "w_fc": jnp.pad(params["fc"]["w"].T,
                        ((0, hp - h), (0, op - o))).astype(compute_dtype),      # (Hp, Op)
        "b_fc": jnp.pad(params["fc"]["b"].reshape(1, o), ((0, 0), (0, op - o))),
    }
    if num_layers > 1:
        w_rest, b_rest = [], []
        for lp in params["lstm"][1:]:
            w_t = _pad_gate_cols(lp["w_ih"].T, h, hp)
            w_rest.append(jnp.pad(w_t, ((0, hp - h), (0, 0))).astype(compute_dtype))
            b_rest.append(_pad_gate_cols((lp["b_ih"] + lp["b_hh"]).reshape(1, 4 * h), h, hp))
        kp["w_ih_rest"] = jnp.stack(w_rest)                                     # (L-1, Hp, 4Hp)
        kp["b_rest"] = jnp.stack(b_rest)                                        # (L-1, 1, 4Hp)

    cfg = LSTMConfig(input_size=d, hidden_size=h, num_layers=num_layers,
                     output_size=o, hidden_pad=hp, output_pad=op,
                     compute_dtype=compute_dtype)
    return kp, cfg


# ----------------------------------------------------------------------------
# Forward pass
# ----------------------------------------------------------------------------
@functools.partial(jax.jit, static_argnames=("cfg", "t_blk_max"))
def lstm_model_forward(kparams, x, *, cfg, t_blk_max=32):
    """x: (B, S, input_size) batch-first. Returns (B, output_size)."""
    b, s, d = x.shape
    hp, op, num_layers = cfg.hidden_pad, cfg.output_pad, cfg.num_layers
    cdt = cfg.compute_dtype
    bp = _round_up(b, 8)
    t_blk = _choose_t_blk(s, t_blk_max)

    # ---- Hoisted layer-0 input projection (one big matmul over all steps) ----
    x_tm = jnp.transpose(x, (1, 0, 2)).astype(jnp.float32)          # (S, B, D)
    if bp != b:
        x_tm = jnp.pad(x_tm, ((0, 0), (0, bp - b), (0, 0)))
    x2d = x_tm.reshape(s * bp, d).astype(cdt)
    gx0 = _input_projection(x2d, kparams["w_ih0"], kparams["b0"])   # (S*Bp, 4Hp) f32
    gx0 = gx0.reshape(s, bp, 4 * hp)

    # ---- Fused recurrent stack + FC ----
    kernel = _make_fused_lstm_fc_kernel(num_layers, t_blk, hp, cdt)

    in_specs = [pl.BlockSpec((t_blk, bp, 4 * hp), lambda tb: (tb, 0, 0))]
    inputs = [gx0]
    if num_layers > 1:
        in_specs += [
            pl.BlockSpec((num_layers - 1, hp, 4 * hp), lambda tb: (0, 0, 0)),
            pl.BlockSpec((num_layers - 1, 1, 4 * hp), lambda tb: (0, 0, 0)),
        ]
        inputs += [kparams["w_ih_rest"], kparams["b_rest"]]
    in_specs += [
        pl.BlockSpec((num_layers, hp, 4 * hp), lambda tb: (0, 0, 0)),
        pl.BlockSpec((hp, op), lambda tb: (0, 0)),
        pl.BlockSpec((1, op), lambda tb: (0, 0)),
    ]
    inputs += [kparams["w_hh"], kparams["w_fc"], kparams["b_fc"]]

    scratch = [
        pltpu.VMEM((num_layers, bp, hp), jnp.float32),    # h carry (per layer)
        pltpu.VMEM((num_layers, bp, hp), jnp.float32),    # c carry (per layer)
        pltpu.VMEM((t_blk, bp, hp), jnp.float32),         # in-VMEM layer handoff
    ]
    if num_layers > 1:
        scratch.append(pltpu.VMEM((t_blk, bp, 4 * hp), jnp.float32))

    cbytes = jnp.dtype(cdt).itemsize
    vmem = _vmem_limit_bytes(num_layers, t_blk, bp, hp, op, cbytes)

    out_p = pl.pallas_call(
        kernel,
        out_shape=jax.ShapeDtypeStruct((bp, op), jnp.float32),
        grid=(s // t_blk,),
        in_specs=in_specs,
        out_specs=pl.BlockSpec((bp, op), lambda tb: (0, 0)),
        scratch_shapes=scratch,
        compiler_params=pltpu.CompilerParams(
            dimension_semantics=("arbitrary",),           # time recurrence is sequential
            vmem_limit_bytes=vmem),
    )(*inputs)

    return out_p[:b, :cfg.output_size]


# ----------------------------------------------------------------------------
# Pure-JAX reference (unpadded) for the sanity check
# ----------------------------------------------------------------------------
def lstm_model_reference(params, x):
    x_tm = jnp.transpose(x, (1, 0, 2)).astype(jnp.float32)          # (S, B, D)
    h_seq = x_tm
    for lp in params["lstm"]:
        h_sz = lp["w_hh"].shape[1]
        b = h_seq.shape[1]
        w_ih_t, w_hh_t = lp["w_ih"].T, lp["w_hh"].T
        bias = (lp["b_ih"] + lp["b_hh"]).reshape(1, 4 * h_sz)

        def step(carry, x_t, w_ih_t=w_ih_t, w_hh_t=w_hh_t, bias=bias, h_sz=h_sz):
            hh, cc = carry
            gates = x_t @ w_ih_t + hh @ w_hh_t + bias
            i = jax.nn.sigmoid(gates[:, 0 * h_sz:1 * h_sz])
            f = jax.nn.sigmoid(gates[:, 1 * h_sz:2 * h_sz])
            g = jnp.tanh(gates[:, 2 * h_sz:3 * h_sz])
            o = jax.nn.sigmoid(gates[:, 3 * h_sz:4 * h_sz])
            cc = f * cc + i * g
            hh = o * jnp.tanh(cc)
            return (hh, cc), hh

        init = (jnp.zeros((b, h_sz), jnp.float32), jnp.zeros((b, h_sz), jnp.float32))
        _, h_seq = jax.lax.scan(step, init, h_seq)
    return h_seq[-1] @ params["fc"]["w"].T + params["fc"]["b"]


# ----------------------------------------------------------------------------
if __name__ == "__main__":
    def check(batch, seq, input_size, hidden_size, num_layers, output_size,
              t_blk_max, key):
        key, pkey, xkey = jax.random.split(key, 3)
        params = init_params(pkey, input_size, hidden_size, num_layers, output_size)
        kparams, cfg = prepare_kernel_params(params, compute_dtype=jnp.float32)
        x = jax.random.normal(xkey, (batch, seq, input_size), dtype=jnp.float32)

        out = lstm_model_forward(kparams, x, cfg=cfg, t_blk_max=t_blk_max)
        out = jax.block_until_ready(out)
        assert out.shape == (batch, output_size)

        ref = lstm_model_reference(params, x)
        assert jnp.allclose(out, ref, atol=1e-4, rtol=1e-4), (out, ref)
        return key

    key = jax.random.PRNGKey(0)
    # Main config (matches the module's intended small shapes); grid of 2 time blocks.
    key = check(batch=2, seq=8, input_size=16, hidden_size=32,
                num_layers=2, output_size=4, t_blk_max=4, key=key)
    # Padding / single-layer / 3-time-block path.
    key = check(batch=3, seq=12, input_size=10, hidden_size=20,
                num_layers=1, output_size=5, t_blk_max=4, key=key)

    print("KERNEL_OK")
</pallas_src>

<mosaic_0001>
module attributes {stable_mosaic.version = 11 : i64} {
  func.func @_proj_kernel(%arg0: i32, %arg1: memref<64x16xf32, #tpu.memory_space<vmem>>, %arg2: memref<16x512xf32, #tpu.memory_space<vmem>>, %arg3: memref<1x512xf32, #tpu.memory_space<vmem>>, %arg4: memref<64x512xf32, #tpu.memory_space<vmem>>) attributes {dimension_semantics = [#tpu.dimension_semantics<parallel>], iteration_bounds = array<i64: 1>, scalar_prefetch = 0 : i64, scratch_operands = 0 : i64, tpu.core_type = #tpu.core_type<tc>, window_params = [{transform_indices = @transform_0, window_bounds = array<i64: 64, 16>}, {pipeline_mode = #tpu.pipeline_mode<synchronous>, transform_indices = @transform_1, window_bounds = array<i64: 16, 512>}, {pipeline_mode = #tpu.pipeline_mode<synchronous>, transform_indices = @transform_2, window_bounds = array<i64: 1, 512>}, {transform_indices = @transform_3, window_bounds = array<i64: 64, 512>}]} {
    %c0 = arith.constant 0 : index
    %c0_0 = arith.constant 0 : index
    %0 = vector.load %arg1[%c0, %c0_0] : memref<64x16xf32, #tpu.memory_space<vmem>>, vector<64x16xf32>
    %c0_1 = arith.constant 0 : index
    %c0_2 = arith.constant 0 : index
    %1 = vector.load %arg2[%c0_1, %c0_2] : memref<16x512xf32, #tpu.memory_space<vmem>>, vector<16x512xf32>
    %cst = arith.constant dense<0.000000e+00> : vector<64x512xf32>
    %2 = tpu.matmul %0, %1, %cst {dimension_numbers = #tpu.dot_dimension_numbers<[1], [0], [0], [1], [0, 0, 1, 1], [], []>} : vector<64x16xf32>, vector<16x512xf32>, vector<64x512xf32> -> vector<64x512xf32>
    %c0_3 = arith.constant 0 : index
    %c0_4 = arith.constant 0 : index
    %3 = vector.load %arg3[%c0_3, %c0_4] : memref<1x512xf32, #tpu.memory_space<vmem>>, vector<1x512xf32>
    %4 = vector.broadcast %3 : vector<1x512xf32> to vector<64x512xf32>
    %5 = arith.addf %2, %4 : vector<64x512xf32>
    %c0_5 = arith.constant 0 : index
    %c0_6 = arith.constant 0 : index
    %6 = vector.load %arg4[%c0_5, %c0_6] : memref<64x512xf32, #tpu.memory_space<vmem>>, vector<64x512xf32>
    tpu.vector_store %arg4[%c0_5, %c0_6], %5 {strides = array<i32>} : memref<64x512xf32, #tpu.memory_space<vmem>>, vector<64x512xf32>,
    return
  }
  func.func @transform_0(%arg0: i32) -> (i32, i32) {
    %c0_i32 = arith.constant 0 : i32
    %c0_i32_0 = arith.constant 0 : i32
    return %arg0, %c0_i32 : i32, i32
  }
  func.func @transform_1(%arg0: i32) -> (i32, i32) {
    %c0_i32 = arith.constant 0 : i32
    %c0_i32_0 = arith.constant 0 : i32
    %c0_i32_1 = arith.constant 0 : i32
    return %c0_i32, %c0_i32_0 : i32, i32
  }
  func.func @transform_2(%arg0: i32) -> (i32, i32) {
    %c0_i32 = arith.constant 0 : i32
    %c0_i32_0 = arith.constant 0 : i32
    %c0_i32_1 = arith.constant 0 : i32
    return %c0_i32, %c0_i32_0 : i32, i32
  }
  func.func @transform_3(%arg0: i32) -> (i32, i32) {
    %c0_i32 = arith.constant 0 : i32
    %c0_i32_0 = arith.constant 0 : i32
    return %arg0, %c0_i32 : i32, i32
  }
}

module attributes {stable_mosaic.version = 11 : i64} {
  func.func @kernel(%arg0: i32, %arg1: memref<4x8x512xf32, #tpu.memory_space<vmem>>, %arg2: memref<1x128x512xf32, #tpu.memory_space<vmem>>, %arg3: memref<1x1x512xf32, #tpu.memory_space<vmem>>, %arg4: memref<2x128x512xf32, #tpu.memory_space<vmem>>, %arg5: memref<128x128xf32, #tpu.memory_space<vmem>>, %arg6: memref<1x128xf32, #tpu.memory_space<vmem>>, %arg7: memref<8x128xf32, #tpu.memory_space<vmem>>, %arg8: memref<2x8x128xf32, #tpu.memory_space<vmem>>, %arg9: memref<2x8x128xf32, #tpu.memory_space<vmem>>, %arg10: memref<4x8x128xf32, #tpu.memory_space<vmem>>, %arg11: memref<4x8x512xf32, #tpu.memory_space<vmem>>) attributes {dimension_semantics = [#tpu.dimension_semantics<arbitrary>], iteration_bounds = array<i64: 2>, scalar_prefetch = 0 : i64, scratch_operands = 4 : i64, tpu.core_type = #tpu.core_type<tc>, window_params = [{transform_indices = @transform_0, window_bounds = array<i64: 4, 8, 512>}, {pipeline_mode = #tpu.pipeline_mode<synchronous>, transform_indices = @transform_1, window_bounds = array<i64: 1, 128, 512>}, {pipeline_mode = #tpu.pipeline_mode<synchronous>, transform_indices = @transform_2, window_bounds = array<i64: 1, 1, 512>}, {pipeline_mode = #tpu.pipeline_mode<synchronous>, transform_indices = @transform_3, window_bounds = array<i64: 2, 128, 512>}, {pipeline_mode = #tpu.pipeline_mode<synchronous>, transform_indices = @transform_4, window_bounds = array<i64: 128, 128>}, {pipeline_mode = #tpu.pipeline_mode<synchronous>, transform_indices = @transform_5, window_bounds = array<i64: 1, 128>}, {pipeline_mode = #tpu.pipeline_mode<synchronous>, transform_indices = @transform_6, window_bounds = array<i64: 8, 128>}]} {
    %c0_i32 = arith.constant 0 : i32
    %0 = arith.cmpi eq, %arg0, %c0_i32 : i32
    %1 = arith.extui %0 : i1 to i32
    %c0_i32_0 = arith.constant 0 : i32
    %2 = arith.cmpi ne, %1, %c0_i32_0 : i32
    scf.if %2 {
      %cst_131 = arith.constant 0.000000e+00 : f32
      %325 = vector.broadcast %cst_131 : f32 to vector<2x8x128xf32>
      %c0_132 = arith.constant 0 : index
      %c0_133 = arith.constant 0 : index
      %c0_134 = arith.constant 0 : index
      %326 = vector.load %arg8[%c0_132, %c0_133, %c0_134] : memref<2x8x128xf32, #tpu.memory_space<vmem>>, vector<2x8x128xf32>
      tpu.vector_store %arg8[%c0_132, %c0_133, %c0_134], %325 {strides = array<i32>} : memref<2x8x128xf32, #tpu.memory_space<vmem>>, vector<2x8x128xf32>,
      %cst_135 = arith.constant 0.000000e+00 : f32
      %327 = vector.broadcast %cst_135 : f32 to vector<2x8x128xf32>
      %c0_136 = arith.constant 0 : index
      %c0_137 = arith.constant 0 : index
      %c0_138 = arith.constant 0 : index
      %328 = vector.load %arg9[%c0_136, %c0_137, %c0_138] : memref<2x8x128xf32, #tpu.memory_space<vmem>>, vector<2x8x128xf32>
      tpu.vector_store %arg9[%c0_136, %c0_137, %c0_138], %327 {strides = array<i32>} : memref<2x8x128xf32, #tpu.memory_space<vmem>>, vector<2x8x128xf32>,
    } else {
    }
    %c0 = arith.constant 0 : index
    %c0_1 = arith.constant 0 : index
    %c0_2 = arith.constant 0 : index
    %3 = vector.load %arg8[%c0, %c0_1, %c0_2] : memref<2x8x128xf32, #tpu.memory_space<vmem>>, vector<1x8x128xf32>
    %4 = vector.shape_cast %3 : vector<1x8x128xf32> to vector<8x128xf32>
    %c0_3 = arith.constant 0 : index
    %c0_4 = arith.constant 0 : index
    %c0_5 = arith.constant 0 : index
    %5 = vector.load %arg9[%c0_3, %c0_4, %c0_5] : memref<2x8x128xf32, #tpu.memory_space<vmem>>, vector<1x8x128xf32>
    %6 = vector.shape_cast %5 : vector<1x8x128xf32> to vector<8x128xf32>
    %c0_i32_6 = arith.constant 0 : i32
    %7 = arith.index_cast %c0_i32_6 : i32 to index
    %c0_7 = arith.constant 0 : index
    %c0_8 = arith.constant 0 : index
    %8 = vector.load %arg1[%7, %c0_7, %c0_8] : memref<4x8x512xf32, #tpu.memory_space<vmem>>, vector<1x8x512xf32>
    %9 = vector.shape_cast %8 : vector<1x8x512xf32> to vector<8x512xf32>
    %c0_9 = arith.constant 0 : index
    %c0_10 = arith.constant 0 : index
    %c0_11 = arith.constant 0 : index
    %10 = vector.load %arg4[%c0_9, %c0_10, %c0_11] : memref<2x128x512xf32, #tpu.memory_space<vmem>>, vector<1x128x512xf32>
    %11 = vector.shape_cast %10 : vector<1x128x512xf32> to vector<128x512xf32>
    %cst = arith.constant dense<0.000000e+00> : vector<8x512xf32>
    %12 = tpu.matmul %4, %11, %cst {dimension_numbers = #tpu.dot_dimension_numbers<[1], [0], [0], [1], [0, 0, 1, 1], [], []>} : vector<8x128xf32>, vector<128x512xf32>, vector<8x512xf32> -> vector<8x512xf32>
    %13 = arith.addf %9, %12 : vector<8x512xf32>
    %14 = vector.extract_strided_slice %13 {offsets = [0, 0], sizes = [8, 128], strides = [1, 1]} : vector<8x512xf32> to vector<8x128xf32>
    %15 = arith.negf %14 : vector<8x128xf32>
    %16 = math.exp %15 : vector<8x128xf32>
    %cst_12 = arith.constant 1.000000e+00 : f32
    %17 = vector.broadcast %cst_12 : f32 to vector<8x128xf32>
    %18 = arith.addf %17, %16 : vector<8x128xf32>
    %19 = arith.divf %17, %18 : vector<8x128xf32>
    %20 = vector.extract_strided_slice %13 {offsets = [0, 128], sizes = [8, 128], strides = [1, 1]} : vector<8x512xf32> to vector<8x128xf32>
    %21 = arith.negf %20 : vector<8x128xf32>
    %22 = math.exp %21 : vector<8x128xf32>
    %cst_13 = arith.constant 1.000000e+00 : f32
    %23 = vector.broadcast %cst_13 : f32 to vector<8x128xf32>
    %24 = arith.addf %23, %22 : vector<8x128xf32>
    %25 = arith.divf %23, %24 : vector<8x128xf32>
    %26 = vector.extract_strided_slice %13 {offsets = [0, 256], sizes = [8, 128], strides = [1, 1]} : vector<8x512xf32> to vector<8x128xf32>
    %27 = math.tanh %26 : vector<8x128xf32>
    %28 = vector.extract_strided_slice %13 {offsets = [0, 384], sizes = [8, 128], strides = [1, 1]} : vector<8x512xf32> to vector<8x128xf32>
    %29 = arith.negf %28 : vector<8x128xf32>
    %30 = math.exp %29 : vector<8x128xf32>
    %cst_14 = arith.constant 1.000000e+00 : f32
    %31 = vector.broadcast %cst_14 : f32 to vector<8x128xf32>
    %32 = arith.addf %31, %30 : vector<8x128xf32>
    %33 = arith.divf %31, %32 : vector<8x128xf32>
    %34 = arith.mulf %25, %6 : vector<8x128xf32>
    %35 = arith.mulf %19, %27 : vector<8x128xf32>
    %36 = arith.addf %34, %35 : vector<8x128xf32>
    %37 = math.tanh %36 : vector<8x128xf32>
    %38 = arith.mulf %33, %37 : vector<8x128xf32>
    %39 = arith.index_cast %c0_i32_6 : i32 to index
    %c0_15 = arith.constant 0 : index
    %c0_16 = arith.constant 0 : index
    %40 = vector.load %arg10[%39, %c0_15, %c0_16] : memref<4x8x128xf32, #tpu.memory_space<vmem>>, vector<1x8x128xf32>
    %41 = vector.shape_cast %40 : vector<1x8x128xf32> to vector<8x128xf32>
    %42 = vector.shape_cast %38 : vector<8x128xf32> to vector<1x8x128xf32>
    tpu.vector_store %arg10[%39, %c0_15, %c0_16], %42 {strides = array<i32>} : memref<4x8x128xf32, #tpu.memory_space<vmem>>, vector<1x8x128xf32>,
    %c1_i32 = arith.constant 1 : i32
    %43 = arith.index_cast %c1_i32 : i32 to index
    %c0_17 = arith.constant 0 : index
    %c0_18 = arith.constant 0 : index
    %44 = vector.load %arg1[%43, %c0_17, %c0_18] : memref<4x8x512xf32, #tpu.memory_space<vmem>>, vector<1x8x512xf32>
    %45 = vector.shape_cast %44 : vector<1x8x512xf32> to vector<8x512xf32>
    %c0_19 = arith.constant 0 : index
    %c0_20 = arith.constant 0 : index
    %c0_21 = arith.constant 0 : index
    %46 = vector.load %arg4[%c0_19, %c0_20, %c0_21] : memref<2x128x512xf32, #tpu.memory_space<vmem>>, vector<1x128x512xf32>
    %47 = vector.shape_cast %46 : vector<1x128x512xf32> to vector<128x512xf32>
    %cst_22 = arith.constant dense<0.000000e+00> : vector<8x512xf32>
    %48 = tpu.matmul %38, %47, %cst_22 {dimension_numbers = #tpu.dot_dimension_numbers<[1], [0], [0], [1], [0, 0, 1, 1], [], []>} : vector<8x128xf32>, vector<128x512xf32>, vector<8x512xf32> -> vector<8x512xf32>
    %49 = arith.addf %45, %48 : vector<8x512xf32>
    %50 = vector.extract_strided_slice %49 {offsets = [0, 0], sizes = [8, 128], strides = [1, 1]} : vector<8x512xf32> to vector<8x128xf32>
    %51 = arith.negf %50 : vector<8x128xf32>
    %52 = math.exp %51 : vector<8x128xf32>
    %cst_23 = arith.constant 1.000000e+00 : f32
    %53 = vector.broadcast %cst_23 : f32 to vector<8x128xf32>
    %54 = arith.addf %53, %52 : vector<8x128xf32>
    %55 = arith.divf %53, %54 : vector<8x128xf32>
    %56 = vector.extract_strided_slice %49 {offsets = [0, 128], sizes = [8, 128], strides = [1, 1]} : vector<8x512xf32> to vector<8x128xf32>
    %57 = arith.negf %56 : vector<8x128xf32>
    %58 = math.exp %57 : vector<8x128xf32>
    %cst_24 = arith.constant 1.000000e+00 : f32
    %59 = vector.broadcast %cst_24 : f32 to vector<8x128xf32>
    %60 = arith.addf %59, %58 : vector<8x128xf32>
    %61 = arith.divf %59, %60 : vector<8x128xf32>
    %62 = vector.extract_strided_slice %49 {offsets = [0, 256], sizes = [8, 128], strides = [1, 1]} : vector<8x512xf32> to vector<8x128xf32>
    %63 = math.tanh %62 : vector<8x128xf32>
    %64 = vector.extract_strided_slice %49 {offsets = [0, 384], sizes = [8, 128], strides = [1, 1]} : vector<8x512xf32> to vector<8x128xf32>
    %65 = arith.negf %64 : vector<8x128xf32>
    %66 = math.exp %65 : vector<8x128xf32>
    %cst_25 = arith.constant 1.000000e+00 : f32
    %67 = vector.broadcast %cst_25 : f32 to vector<8x128xf32>
    %68 = arith.addf %67, %66 : vector<8x128xf32>
    %69 = arith.divf %67, %68 : vector<8x128xf32>
    %70 = arith.mulf %61, %36 : vector<8x128xf32>
    %71 = arith.mulf %55, %63 : vector<8x128xf32>
    %72 = arith.addf %70, %71 : vector<8x128xf32>
    %73 = math.tanh %72 : vector<8x128xf32>
    %74 = arith.mulf %69, %73 : vector<8x128xf32>
    %75 = arith.index_cast %c1_i32 : i32 to index
    %c0_26 = arith.constant 0 : index
    %c0_27 = arith.constant 0 : index
    %76 = vector.load %arg10[%75, %c0_26, %c0_27] : memref<4x8x128xf32, #tpu.memory_space<vmem>>, vector<1x8x128xf32>
    %77 = vector.shape_cast %76 : vector<1x8x128xf32> to vector<8x128xf32>
    %78 = vector.shape_cast %74 : vector<8x128xf32> to vector<1x8x128xf32>
    tpu.vector_store %arg10[%75, %c0_26, %c0_27], %78 {strides = array<i32>} : memref<4x8x128xf32, #tpu.memory_space<vmem>>, vector<1x8x128xf32>,
    %c2_i32 = arith.constant 2 : i32
    %79 = arith.index_cast %c2_i32 : i32 to index
    %c0_28 = arith.constant 0 : index
    %c0_29 = arith.constant 0 : index
    %80 = vector.load %arg1[%79, %c0_28, %c0_29] : memref<4x8x512xf32, #tpu.memory_space<vmem>>, vector<1x8x512xf32>
    %81 = vector.shape_cast %80 : vector<1x8x512xf32> to vector<8x512xf32>
    %c0_30 = arith.constant 0 : index
    %c0_31 = arith.constant 0 : index
    %c0_32 = arith.constant 0 : index
    %82 = vector.load %arg4[%c0_30, %c0_31, %c0_32] : memref<2x128x512xf32, #tpu.memory_space<vmem>>, vector<1x128x512xf32>
    %83 = vector.shape_cast %82 : vector<1x128x512xf32> to vector<128x512xf32>
    %cst_33 = arith.constant dense<0.000000e+00> : vector<8x512xf32>
    %84 = tpu.matmul %74, %83, %cst_33 {dimension_numbers = #tpu.dot_dimension_numbers<[1], [0], [0], [1], [0, 0, 1, 1], [], []>} : vector<8x128xf32>, vector<128x512xf32>, vector<8x512xf32> -> vector<8x512xf32>
    %85 = arith.addf %81, %84 : vector<8x512xf32>
    %86 = vector.extract_strided_slice %85 {offsets = [0, 0], sizes = [8, 128], strides = [1, 1]} : vector<8x512xf32> to vector<8x128xf32>
    %87 = arith.negf %86 : vector<8x128xf32>
    %88 = math.exp %87 : vector<8x128xf32>
    %cst_34 = arith.constant 1.000000e+00 : f32
    %89 = vector.broadcast %cst_34 : f32 to vector<8x128xf32>
    %90 = arith.addf %89, %88 : vector<8x128xf32>
    %91 = arith.divf %89, %90 : vector<8x128xf32>
    %92 = vector.extract_strided_slice %85 {offsets = [0, 128], sizes = [8, 128], strides = [1, 1]} : vector<8x512xf32> to vector<8x128xf32>
    %93 = arith.negf %92 : vector<8x128xf32>
    %94 = math.exp %93 : vector<8x128xf32>
    %cst_35 = arith.constant 1.000000e+00 : f32
    %95 = vector.broadcast %cst_35 : f32 to vector<8x128xf32>
    %96 = arith.addf %95, %94 : vector<8x128xf32>
    %97 = arith.divf %95, %96 : vector<8x128xf32>
    %98 = vector.extract_strided_slice %85 {offsets = [0, 256], sizes = [8, 128], strides = [1, 1]} : vector<8x512xf32> to vector<8x128xf32>
    %99 = math.tanh %98 : vector<8x128xf32>
    %100 = vector.extract_strided_slice %85 {offsets = [0, 384], sizes = [8, 128], strides = [1, 1]} : vector<8x512xf32> to vector<8x128xf32>
    %101 = arith.negf %100 : vector<8x128xf32>
    %102 = math.exp %101 : vector<8x128xf32>
    %cst_36 = arith.constant 1.000000e+00 : f32
    %103 = vector.broadcast %cst_36 : f32 to vector<8x128xf32>
    %104 = arith.addf %103, %102 : vector<8x128xf32>
    %105 = arith.divf %103, %104 : vector<8x128xf32>
    %106 = arith.mulf %97, %72 : vector<8x128xf32>
    %107 = arith.mulf %91, %99 : vector<8x128xf32>
    %108 = arith.addf %106, %107 : vector<8x128xf32>
    %109 = math.tanh %108 : vector<8x128xf32>
    %110 = arith.mulf %105, %109 : vector<8x128xf32>
    %111 = arith.index_cast %c2_i32 : i32 to index
    %c0_37 = arith.constant 0 : index
    %c0_38 = arith.constant 0 : index
    %112 = vector.load %arg10[%111, %c0_37, %c0_38] : memref<4x8x128xf32, #tpu.memory_space<vmem>>, vector<1x8x128xf32>
    %113 = vector.shape_cast %112 : vector<1x8x128xf32> to vector<8x128xf32>
    %114 = vector.shape_cast %110 : vector<8x128xf32> to vector<1x8x128xf32>
    tpu.vector_store %arg10[%111, %c0_37, %c0_38], %114 {strides = array<i32>} : memref<4x8x128xf32, #tpu.memory_space<vmem>>, vector<1x8x128xf32>,
    %c3_i32 = arith.constant 3 : i32
    %115 = arith.index_cast %c3_i32 : i32 to index
    %c0_39 = arith.constant 0 : index
    %c0_40 = arith.constant 0 : index
    %116 = vector.load %arg1[%115, %c0_39, %c0_40] : memref<4x8x512xf32, #tpu.memory_space<vmem>>, vector<1x8x512xf32>
    %117 = vector.shape_cast %116 : vector<1x8x512xf32> to vector<8x512xf32>
    %c0_41 = arith.constant 0 : index
    %c0_42 = arith.constant 0 : index
    %c0_43 = arith.constant 0 : index
    %118 = vector.load %arg4[%c0_41, %c0_42, %c0_43] : memref<2x128x512xf32, #tpu.memory_space<vmem>>, vector<1x128x512xf32>
    %119 = vector.shape_cast %118 : vector<1x128x512xf32> to vector<128x512xf32>
    %cst_44 = arith.constant dense<0.000000e+00> : vector<8x512xf32>
    %120 = tpu.matmul %110, %119, %cst_44 {dimension_numbers = #tpu.dot_dimension_numbers<[1], [0], [0], [1], [0, 0, 1, 1], [], []>} : vector<8x128xf32>, vector<128x512xf32>, vector<8x512xf32> -> vector<8x512xf32>
    %121 = arith.addf %117, %120 : vector<8x512xf32>
    %122 = vector.extract_strided_slice %121 {offsets = [0, 0], sizes = [8, 128], strides = [1, 1]} : vector<8x512xf32> to vector<8x128xf32>
    %123 = arith.negf %122 : vector<8x128xf32>
    %124 = math.exp %123 : vector<8x128xf32>
    %cst_45 = arith.constant 1.000000e+00 : f32
    %125 = vector.broadcast %cst_45 : f32 to vector<8x128xf32>
    %126 = arith.addf %125, %124 : vector<8x128xf32>
    %127 = arith.divf %125, %126 : vector<8x128xf32>
    %128 = vector.extract_strided_slice %121 {offsets = [0, 128], sizes = [8, 128], strides = [1, 1]} : vector<8x512xf32> to vector<8x128xf32>
    %129 = arith.negf %128 : vector<8x128xf32>
    %130 = math.exp %129 : vector<8x128xf32>
    %cst_46 = arith.constant 1.000000e+00 : f32
    %131 = vector.broadcast %cst_46 : f32 to vector<8x128xf32>
    %132 = arith.addf %131, %130 : vector<8x128xf32>
    %133 = arith.divf %131, %132 : vector<8x128xf32>
    %134 = vector.extract_strided_slice %121 {offsets = [0, 256], sizes = [8, 128], strides = [1, 1]} : vector<8x512xf32> to vector<8x128xf32>
    %135 = math.tanh %134 : vector<8x128xf32>
    %136 = vector.extract_strided_slice %121 {offsets = [0, 384], sizes = [8, 128], strides = [1, 1]} : vector<8x512xf32> to vector<8x128xf32>
    %137 = arith.negf %136 : vector<8x128xf32>
    %138 = math.exp %137 : vector<8x128xf32>
    %cst_47 = arith.constant 1.000000e+00 : f32
    %139 = vector.broadcast %cst_47 : f32 to vector<8x128xf32>
    %140 = arith.addf %139, %138 : vector<8x128xf32>
    %141 = arith.divf %139, %140 : vector<8x128xf32>
    %142 = arith.mulf %133, %108 : vector<8x128xf32>
    %143 = arith.mulf %127, %135 : vector<8x128xf32>
    %144 = arith.addf %142, %143 : vector<8x128xf32>
    %145 = math.tanh %144 : vector<8x128xf32>
    %146 = arith.mulf %141, %145 : vector<8x128xf32>
    %147 = arith.index_cast %c3_i32 : i32 to index
    %c0_48 = arith.constant 0 : index
    %c0_49 = arith.constant 0 : index
    %148 = vector.load %arg10[%147, %c0_48, %c0_49] : memref<4x8x128xf32, #tpu.memory_space<vmem>>, vector<1x8x128xf32>
    %149 = vector.shape_cast %148 : vector<1x8x128xf32> to vector<8x128xf32>
    %150 = vector.shape_cast %146 : vector<8x128xf32> to vector<1x8x128xf32>
    tpu.vector_store %arg10[%147, %c0_48, %c0_49], %150 {strides = array<i32>} : memref<4x8x128xf32, #tpu.memory_space<vmem>>, vector<1x8x128xf32>,
    %c4_i32 = arith.constant 4 : i32
    %c0_50 = arith.constant 0 : index
    %c0_51 = arith.constant 0 : index
    %c0_52 = arith.constant 0 : index
    %151 = vector.load %arg8[%c0_50, %c0_51, %c0_52] : memref<2x8x128xf32, #tpu.memory_space<vmem>>, vector<1x8x128xf32>
    %152 = vector.shape_cast %151 : vector<1x8x128xf32> to vector<8x128xf32>
    %153 = vector.shape_cast %146 : vector<8x128xf32> to vector<1x8x128xf32>
    tpu.vector_store %arg8[%c0_50, %c0_51, %c0_52], %153 {strides = array<i32>} : memref<2x8x128xf32, #tpu.memory_space<vmem>>, vector<1x8x128xf32>,
    %c0_53 = arith.constant 0 : index
    %c0_54 = arith.constant 0 : index
    %c0_55 = arith.constant 0 : index
    %154 = vector.load %arg9[%c0_53, %c0_54, %c0_55] : memref<2x8x128xf32, #tpu.memory_space<vmem>>, vector<1x8x128xf32>
    %155 = vector.shape_cast %154 : vector<1x8x128xf32> to vector<8x128xf32>
    %156 = vector.shape_cast %144 : vector<8x128xf32> to vector<1x8x128xf32>
    tpu.vector_store %arg9[%c0_53, %c0_54, %c0_55], %156 {strides = array<i32>} : memref<2x8x128xf32, #tpu.memory_space<vmem>>, vector<1x8x128xf32>,
    %c0_56 = arith.constant 0 : index
    %c0_57 = arith.constant 0 : index
    %c0_58 = arith.constant 0 : index
    %157 = vector.load %arg10[%c0_56, %c0_57, %c0_58] : memref<4x8x128xf32, #tpu.memory_space<vmem>>, vector<4x8x128xf32>
    %158 = vector.shape_cast %157 : vector<4x8x128xf32> to vector<32x128xf32>
    %c0_59 = arith.constant 0 : index
    %c0_60 = arith.constant 0 : index
    %c0_61 = arith.constant 0 : index
    %159 = vector.load %arg2[%c0_59, %c0_60, %c0_61] : memref<1x128x512xf32, #tpu.memory_space<vmem>>, vector<1x128x512xf32>
    %160 = vector.shape_cast %159 : vector<1x128x512xf32> to vector<128x512xf32>
    %cst_62 = arith.constant dense<0.000000e+00> : vector<32x512xf32>
    %161 = tpu.matmul %158, %160, %cst_62 {dimension_numbers = #tpu.dot_dimension_numbers<[1], [0], [0], [1], [0, 0, 1, 1], [], []>} : vector<32x128xf32>, vector<128x512xf32>, vector<32x512xf32> -> vector<32x512xf32>
    %c0_63 = arith.constant 0 : index
    %c0_64 = arith.constant 0 : index
    %c0_65 = arith.constant 0 : index
    %162 = vector.load %arg3[%c0_63, %c0_64, %c0_65] : memref<1x1x512xf32, #tpu.memory_space<vmem>>, vector<1x1x512xf32>
    %163 = vector.shape_cast %162 : vector<1x1x512xf32> to vector<1x512xf32>
    %164 = vector.broadcast %163 : vector<1x512xf32> to vector<32x512xf32>
    %165 = arith.addf %161, %164 : vector<32x512xf32>
    %166 = vector.shape_cast %165 : vector<32x512xf32> to vector<4x8x512xf32>
    %c0_66 = arith.constant 0 : index
    %c0_67 = arith.constant 0 : index
    %c0_68 = arith.constant 0 : index
    %167 = vector.load %arg11[%c0_66, %c0_67, %c0_68] : memref<4x8x512xf32, #tpu.memory_space<vmem>>, vector<4x8x512xf32>
    tpu.vector_store %arg11[%c0_66, %c0_67, %c0_68], %166 {strides = array<i32>} : memref<4x8x512xf32, #tpu.memory_space<vmem>>, vector<4x8x512xf32>,
    %c1 = arith.constant 1 : index
    %c0_69 = arith.constant 0 : index
    %c0_70 = arith.constant 0 : index
    %168 = vector.load %arg8[%c1, %c0_69, %c0_70] : memref<2x8x128xf32, #tpu.memory_space<vmem>>, vector<1x8x128xf32>
    %169 = vector.shape_cast %168 : vector<1x8x128xf32> to vector<8x128xf32>
    %c1_71 = arith.constant 1 : index
    %c0_72 = arith.constant 0 : index
    %c0_73 = arith.constant 0 : index
    %170 = vector.load %arg9[%c1_71, %c0_72, %c0_73] : memref<2x8x128xf32, #tpu.memory_space<vmem>>, vector<1x8x128xf32>
    %171 = vector.shape_cast %170 : vector<1x8x128xf32> to vector<8x128xf32>
    %c0_i32_74 = arith.constant 0 : i32
    %172 = arith.index_cast %c0_i32_74 : i32 to index
    %c0_75 = arith.constant 0 : index
    %c0_76 = arith.constant 0 : index
    %173 = vector.load %arg11[%172, %c0_75, %c0_76] : memref<4x8x512xf32, #tpu.memory_space<vmem>>, vector<1x8x512xf32>
    %174 = vector.shape_cast %173 : vector<1x8x512xf32> to vector<8x512xf32>
    %c1_77 = arith.constant 1 : index
    %c0_78 = arith.constant 0 : index
    %c0_79 = arith.constant 0 : index
    %175 = vector.load %arg4[%c1_77, %c0_78, %c0_79] : memref<2x128x512xf32, #tpu.memory_space<vmem>>, vector<1x128x512xf32>
    %176 = vector.shape_cast %175 : vector<1x128x512xf32> to vector<128x512xf32>
    %cst_80 = arith.constant dense<0.000000e+00> : vector<8x512xf32>
    %177 = tpu.matmul %169, %176, %cst_80 {dimension_numbers = #tpu.dot_dimension_numbers<[1], [0], [0], [1], [0, 0, 1, 1], [], []>} : vector<8x128xf32>, vector<128x512xf32>, vector<8x512xf32> -> vector<8x512xf32>
    %178 = arith.addf %174, %177 : vector<8x512xf32>
    %179 = vector.extract_strided_slice %178 {offsets = [0, 0], sizes = [8, 128], strides = [1, 1]} : vector<8x512xf32> to vector<8x128xf32>
    %180 = arith.negf %179 : vector<8x128xf32>
    %181 = math.exp %180 : vector<8x128xf32>
    %cst_81 = arith.constant 1.000000e+00 : f32
    %182 = vector.broadcast %cst_81 : f32 to vector<8x128xf32>
    %183 = arith.addf %182, %181 : vector<8x128xf32>
    %184 = arith.divf %182, %183 : vector<8x128xf32>
    %185 = vector.extract_strided_slice %178 {offsets = [0, 128], sizes = [8, 128], strides = [1, 1]} : vector<8x512xf32> to vector<8x128xf32>
    %186 = arith.negf %185 : vector<8x128xf32>
    %187 = math.exp %186 : vector<8x128xf32>
    %cst_82 = arith.constant 1.000000e+00 : f32
    %188 = vector.broadcast %cst_82 : f32 to vector<8x128xf32>
    %189 = arith.addf %188, %187 : vector<8x128xf32>
    %190 = arith.divf %188, %189 : vector<8x128xf32>
    %191 = vector.extract_strided_slice %178 {offsets = [0, 256], sizes = [8, 128], strides = [1, 1]} : vector<8x512xf32> to vector<8x128xf32>
    %192 = math.tanh %191 : vector<8x128xf32>
    %193 = vector.extract_strided_slice %178 {offsets = [0, 384], sizes = [8, 128], strides = [1, 1]} : vector<8x512xf32> to vector<8x128xf32>
    %194 = arith.negf %193 : vector<8x128xf32>
    %195 = math.exp %194 : vector<8x128xf32>
    %cst_83 = arith.constant 1.000000e+00 : f32
    %196 = vector.broadcast %cst_83 : f32 to vector<8x128xf32>
    %197 = arith.addf %196, %195 : vector<8x128xf32>
    %198 = arith.divf %196, %197 : vector<8x128xf32>
    %199 = arith.mulf %190, %171 : vector<8x128xf32>
    %200 = arith.mulf %184, %192 : vector<8x128xf32>
    %201 = arith.addf %199, %200 : vector<8x128xf32>
    %202 = math.tanh %201 : vector<8x128xf32>
    %203 = arith.mulf %198, %202 : vector<8x128xf32>
    %204 = arith.index_cast %c0_i32_74 : i32 to index
    %c0_84 = arith.constant 0 : index
    %c0_85 = arith.constant 0 : index
    %205 = vector.load %arg10[%204, %c0_84, %c0_85] : memref<4x8x128xf32, #tpu.memory_space<vmem>>, vector<1x8x128xf32>
    %206 = vector.shape_cast %205 : vector<1x8x128xf32> to vector<8x128xf32>
    %207 = vector.shape_cast %203 : vector<8x128xf32> to vector<1x8x128xf32>
    tpu.vector_store %arg10[%204, %c0_84, %c0_85], %207 {strides = array<i32>} : memref<4x8x128xf32, #tpu.memory_space<vmem>>, vector<1x8x128xf32>,
    %c1_i32_86 = arith.constant 1 : i32
    %208 = arith.index_cast %c1_i32_86 : i32 to index
    %c0_87 = arith.constant 0 : index
    %c0_88 = arith.constant 0 : index
    %209 = vector.load %arg11[%208, %c0_87, %c0_88] : memref<4x8x512xf32, #tpu.memory_space<vmem>>, vector<1x8x512xf32>
    %210 = vector.shape_cast %209 : vector<1x8x512xf32> to vector<8x512xf32>
    %c1_89 = arith.constant 1 : index
    %c0_90 = arith.constant 0 : index
    %c0_91 = arith.constant 0 : index
    %211 = vector.load %arg4[%c1_89, %c0_90, %c0_91] : memref<2x128x512xf32, #tpu.memory_space<vmem>>, vector<1x128x512xf32>
    %212 = vector.shape_cast %211 : vector<1x128x512xf32> to vector<128x512xf32>
    %cst_92 = arith.constant dense<0.000000e+00> : vector<8x512xf32>
    %213 = tpu.matmul %203, %212, %cst_92 {dimension_numbers = #tpu.dot_dimension_numbers<[1], [0], [0], [1], [0, 0, 1, 1], [], []>} : vector<8x128xf32>, vector<128x512xf32>, vector<8x512xf32> -> vector<8x512xf32>
    %214 = arith.addf %210, %213 : vector<8x512xf32>
    %215 = vector.extract_strided_slice %214 {offsets = [0, 0], sizes = [8, 128], strides = [1, 1]} : vector<8x512xf32> to vector<8x128xf32>
    %216 = arith.negf %215 : vector<8x128xf32>
    %217 = math.exp %216 : vector<8x128xf32>
    %cst_93 = arith.constant 1.000000e+00 : f32
    %218 = vector.broadcast %cst_93 : f32 to vector<8x128xf32>
    %219 = arith.addf %218, %217 : vector<8x128xf32>
    %220 = arith.divf %218, %219 : vector<8x128xf32>
    %221 = vector.extract_strided_slice %214 {offsets = [0, 128], sizes = [8, 128], strides = [1, 1]} : vector<8x512xf32> to vector<8x128xf32>
    %222 = arith.negf %221 : vector<8x128xf32>
    %223 = math.exp %222 : vector<8x128xf32>
    %cst_94 = arith.constant 1.000000e+00 : f32
    %224 = vector.broadcast %cst_94 : f32 to vector<8x128xf32>
    %225 = arith.addf %224, %223 : vector<8x128xf32>
    %226 = arith.divf %224, %225 : vector<8x128xf32>
    %227 = vector.extract_strided_slice %214 {offsets = [0, 256], sizes = [8, 128], strides = [1, 1]} : vector<8x512xf32> to vector<8x128xf32>
    %228 = math.tanh %227 : vector<8x128xf32>
    %229 = vector.extract_strided_slice %214 {offsets = [0, 384], sizes = [8, 128], strides = [1, 1]} : vector<8x512xf32> to vector<8x128xf32>
    %230 = arith.negf %229 : vector<8x128xf32>
    %231 = math.exp %230 : vector<8x128xf32>
    %cst_95 = arith.constant 1.000000e+00 : f32
    %232 = vector.broadcast %cst_95 : f32 to vector<8x128xf32>
    %233 = arith.addf %232, %231 : vector<8x128xf32>
    %234 = arith.divf %232, %233 : vector<8x128xf32>
    %235 = arith.mulf %226, %201 : vector<8x128xf32>
    %236 = arith.mulf %220, %228 : vector<8x128xf32>
    %237 = arith.addf %235, %236 : vector<8x128xf32>
    %238 = math.tanh %237 : vector<8x128xf32>
    %239 = arith.mulf %234, %238 : vector<8x128xf32>
    %240 = arith.index_cast %c1_i32_86 : i32 to index
    %c0_96 = arith.constant 0 : index
    %c0_97 = arith.constant 0 : index
    %241 = vector.load %arg10[%240, %c0_96, %c0_97] : memref<4x8x128xf32, #tpu.memory_space<vmem>>, vector<1x8x128xf32>
    %242 = vector.shape_cast %241 : vector<1x8x128xf32> to vector<8x128xf32>
    %243 = vector.shape_cast %239 : vector<8x128xf32> to vector<1x8x128xf32>
    tpu.vector_store %arg10[%240, %c0_96, %c0_97], %243 {strides = array<i32>} : memref<4x8x128xf32, #tpu.memory_space<vmem>>, vector<1x8x128xf32>,
    %c2_i32_98 = arith.constant 2 : i32
    %244 = arith.index_cast %c2_i32_98 : i32 to index
    %c0_99 = arith.constant 0 : index
    %c0_100 = arith.constant 0 : index
    %245 = vector.load %arg11[%244, %c0_99, %c0_100] : memref<4x8x512xf32, #tpu.memory_space<vmem>>, vector<1x8x512xf32>
    %246 = vector.shape_cast %245 : vector<1x8x512xf32> to vector<8x512xf32>
    %c1_101 = arith.constant 1 : index
    %c0_102 = arith.constant 0 : index
    %c0_103 = arith.constant 0 : index
    %247 = vector.load %arg4[%c1_101, %c0_102, %c0_103] : memref<2x128x512xf32, #tpu.memory_space<vmem>>, vector<1x128x512xf32>
    %248 = vector.shape_cast %247 : vector<1x128x512xf32> to vector<128x512xf32>
    %cst_104 = arith.constant dense<0.000000e+00> : vector<8x512xf32>
    %249 = tpu.matmul %239, %248, %cst_104 {dimension_numbers = #tpu.dot_dimension_numbers<[1], [0], [0], [1], [0, 0, 1, 1], [], []>} : vector<8x128xf32>, vector<128x512xf32>, vector<8x512xf32> -> vector<8x512xf32>
    %250 = arith.addf %246, %249 : vector<8x512xf32>
    %251 = vector.extract_strided_slice %250 {offsets = [0, 0], sizes = [8, 128], strides = [1, 1]} : vector<8x512xf32> to vector<8x128xf32>
    %252 = arith.negf %251 : vector<8x128xf32>
    %253 = math.exp %252 : vector<8x128xf32>
    %cst_105 = arith.constant 1.000000e+00 : f32
    %254 = vector.broadcast %cst_105 : f32 to vector<8x128xf32>
    %255 = arith.addf %254, %253 : vector<8x128xf32>
    %256 = arith.divf %254, %255 : vector<8x128xf32>
    %257 = vector.extract_strided_slice %250 {offsets = [0, 128], sizes = [8, 128], strides = [1, 1]} : vector<8x512xf32> to vector<8x128xf32>
    %258 = arith.negf %257 : vector<8x128xf32>
    %259 = math.exp %258 : vector<8x128xf32>
    %cst_106 = arith.constant 1.000000e+00 : f32
    %260 = vector.broadcast %cst_106 : f32 to vector<8x128xf32>
    %261 = arith.addf %260, %259 : vector<8x128xf32>
    %262 = arith.divf %260, %261 : vector<8x128xf32>
    %263 = vector.extract_strided_slice %250 {offsets = [0, 256], sizes = [8, 128], strides = [1, 1]} : vector<8x512xf32> to vector<8x128xf32>
    %264 = math.tanh %263 : vector<8x128xf32>
    %265 = vector.extract_strided_slice %250 {offsets = [0, 384], sizes = [8, 128], strides = [1, 1]} : vector<8x512xf32> to vector<8x128xf32>
    %266 = arith.negf %265 : vector<8x128xf32>
    %267 = math.exp %266 : vector<8x128xf32>
    %cst_107 = arith.constant 1.000000e+00 : f32
    %268 = vector.broadcast %cst_107 : f32 to vector<8x128xf32>
    %269 = arith.addf %268, %267 : vector<8x128xf32>
    %270 = arith.divf %268, %269 : vector<8x128xf32>
    %271 = arith.mulf %262, %237 : vector<8x128xf32>
    %272 = arith.mulf %256, %264 : vector<8x128xf32>
    %273 = arith.addf %271, %272 : vector<8x128xf32>
    %274 = math.tanh %273 : vector<8x128xf32>
    %275 = arith.mulf %270, %274 : vector<8x128xf32>
    %276 = arith.index_cast %c2_i32_98 : i32 to index
    %c0_108 = arith.constant 0 : index
    %c0_109 = arith.constant 0 : index
    %277 = vector.load %arg10[%276, %c0_108, %c0_109] : memref<4x8x128xf32, #tpu.memory_space<vmem>>, vector<1x8x128xf32>
    %278 = vector.shape_cast %277 : vector<1x8x128xf32> to vector<8x128xf32>
    %279 = vector.shape_cast %275 : vector<8x128xf32> to vector<1x8x128xf32>
    tpu.vector_store %arg10[%276, %c0_108, %c0_109], %279 {strides = array<i32>} : memref<4x8x128xf32, #tpu.memory_space<vmem>>, vector<1x8x128xf32>,
    %c3_i32_110 = arith.constant 3 : i32
    %280 = arith.index_cast %c3_i32_110 : i32 to index
    %c0_111 = arith.constant 0 : index
    %c0_112 = arith.constant 0 : index
    %281 = vector.load %arg11[%280, %c0_111, %c0_112] : memref<4x8x512xf32, #tpu.memory_space<vmem>>, vector<1x8x512xf32>
    %282 = vector.shape_cast %281 : vector<1x8x512xf32> to vector<8x512xf32>
    %c1_113 = arith.constant 1 : index
    %c0_114 = arith.constant 0 : index
    %c0_115 = arith.constant 0 : index
    %283 = vector.load %arg4[%c1_113, %c0_114, %c0_115] : memref<2x128x512xf32, #tpu.memory_space<vmem>>, vector<1x128x512xf32>
    %284 = vector.shape_cast %283 : vector<1x128x512xf32> to vector<128x512xf32>
    %cst_116 = arith.constant dense<0.000000e+00> : vector<8x512xf32>
    %285 = tpu.matmul %275, %284, %cst_116 {dimension_numbers = #tpu.dot_dimension_numbers<[1], [0], [0], [1], [0, 0, 1, 1], [], []>} : vector<8x128xf32>, vector<128x512xf32>, vector<8x512xf32> -> vector<8x512xf32>
    %286 = arith.addf %282, %285 : vector<8x512xf32>
    %287 = vector.extract_strided_slice %286 {offsets = [0, 0], sizes = [8, 128], strides = [1, 1]} : vector<8x512xf32> to vector<8x128xf32>
    %288 = arith.negf %287 : vector<8x128xf32>
    %289 = math.exp %288 : vector<8x128xf32>
    %cst_117 = arith.constant 1.000000e+00 : f32
    %290 = vector.broadcast %cst_117 : f32 to vector<8x128xf32>
    %291 = arith.addf %290, %289 : vector<8x128xf32>
    %292 = arith.divf %290, %291 : vector<8x128xf32>
    %293 = vector.extract_strided_slice %286 {offsets = [0, 128], sizes = [8, 128], strides = [1, 1]} : vector<8x512xf32> to vector<8x128xf32>
    %294 = arith.negf %293 : vector<8x128xf32>
    %295 = math.exp %294 : vector<8x128xf32>
    %cst_118 = arith.constant 1.000000e+00 : f32
    %296 = vector.broadcast %cst_118 : f32 to vector<8x128xf32>
    %297 = arith.addf %296, %295 : vector<8x128xf32>
    %298 = arith.divf %296, %297 : vector<8x128xf32>
    %299 = vector.extract_strided_slice %286 {offsets = [0, 256], sizes = [8, 128], strides = [1, 1]} : vector<8x512xf32> to vector<8x128xf32>
    %300 = math.tanh %299 : vector<8x128xf32>
    %301 = vector.extract_strided_slice %286 {offsets = [0, 384], sizes = [8, 128], strides = [1, 1]} : vector<8x512xf32> to vector<8x128xf32>
    %302 = arith.negf %301 : vector<8x128xf32>
    %303 = math.exp %302 : vector<8x128xf32>
    %cst_119 = arith.constant 1.000000e+00 : f32
    %304 = vector.broadcast %cst_119 : f32 to vector<8x128xf32>
    %305 = arith.addf %304, %303 : vector<8x128xf32>
    %306 = arith.divf %304, %305 : vector<8x128xf32>
    %307 = arith.mulf %298, %273 : vector<8x128xf32>
    %308 = arith.mulf %292, %300 : vector<8x128xf32>
    %309 = arith.addf %307, %308 : vector<8x128xf32>
    %310 = math.tanh %309 : vector<8x128xf32>
    %311 = arith.mulf %306, %310 : vector<8x128xf32>
    %312 = arith.index_cast %c3_i32_110 : i32 to index
    %c0_120 = arith.constant 0 : index
    %c0_121 = arith.constant 0 : index
    %313 = vector.load %arg10[%312, %c0_120, %c0_121] : memref<4x8x128xf32, #tpu.memory_space<vmem>>, vector<1x8x128xf32>
    %314 = vector.shape_cast %313 : vector<1x8x128xf32> to vector<8x128xf32>
    %315 = vector.shape_cast %311 : vector<8x128xf32> to vector<1x8x128xf32>
    tpu.vector_store %arg10[%312, %c0_120, %c0_121], %315 {strides = array<i32>} : memref<4x8x128xf32, #tpu.memory_space<vmem>>, vector<1x8x128xf32>,
    %c4_i32_122 = arith.constant 4 : i32
    %c1_123 = arith.constant 1 : index
    %c0_124 = arith.constant 0 : index
    %c0_125 = arith.constant 0 : index
    %316 = vector.load %arg8[%c1_123, %c0_124, %c0_125] : memref<2x8x128xf32, #tpu.memory_space<vmem>>, vector<1x8x128xf32>
    %317 = vector.shape_cast %316 : vector<1x8x128xf32> to vector<8x128xf32>
    %318 = vector.shape_cast %311 : vector<8x128xf32> to vector<1x8x128xf32>
    tpu.vector_store %arg8[%c1_123, %c0_124, %c0_125], %318 {strides = array<i32>} : memref<2x8x128xf32, #tpu.memory_space<vmem>>, vector<1x8x128xf32>,
    %c1_126 = arith.constant 1 : index
    %c0_127 = arith.constant 0 : index
    %c0_128 = arith.constant 0 : index
    %319 = vector.load %arg9[%c1_126, %c0_127, %c0_128] : memref<2x8x128xf32, #tpu.memory_space<vmem>>, vector<1x8x128xf32>
    %320 = vector.shape_cast %319 : vector<1x8x128xf32> to vector<8x128xf32>
    %321 = vector.shape_cast %309 : vector<8x128xf32> to vector<1x8x128xf32>
    tpu.vector_store %arg9[%c1_126, %c0_127, %c0_128], %321 {strides = array<i32>} : memref<2x8x128xf32, #tpu.memory_space<vmem>>, vector<1x8x128xf32>,
    %c1_i32_129 = arith.constant 1 : i32
    %322 = arith.cmpi eq, %arg0, %c1_i32_129 : i32
    %323 = arith.extui %322 : i1 to i32
    %c0_i32_130 = arith.constant 0 : i32
    %324 = arith.cmpi ne, %323, %c0_i32_130 : i32
    scf.if %324 {
      %c0_131 = arith.constant 0 : index
      %c0_132 = arith.constant 0 : index
      %325 = vector.load %arg5[%c0_131, %c0_132] : memref<128x128xf32, #tpu.memory_space<vmem>>, vector<128x128xf32>
      %cst_133 = arith.constant dense<0.000000e+00> : vector<8x128xf32>
      %326 = tpu.matmul %311, %325, %cst_133 {dimension_numbers = #tpu.dot_dimension_numbers<[1], [0], [0], [1], [0, 0, 1, 1], [], []>} : vector<8x128xf32>, vector<128x128xf32>, vector<8x128xf32> -> vector<8x128xf32>
      %c0_134 = arith.constant 0 : index
      %c0_135 = arith.constant 0 : index
      %327 = vector.load %arg6[%c0_134, %c0_135] : memref<1x128xf32, #tpu.memory_space<vmem>>, vector<1x128xf32>
      %328 = vector.broadcast %327 : vector<1x128xf32> to vector<8x128xf32>
      %329 = arith.addf %326, %328 : vector<8x128xf32>
      %c0_136 = arith.constant 0 : index
      %c0_137 = arith.constant 0 : index
      %330 = vector.load %arg7[%c0_136, %c0_137] : memref<8x128xf32, #tpu.memory_space<vmem>>, vector<8x128xf32>
      tpu.vector_store %arg7[%c0_136, %c0_137], %329 {strides = array<i32>} : memref<8x128xf32, #tpu.memory_space<vmem>>, vector<8x128xf32>,
    } else {
    }
    return
  }
  func.func @transform_0(%arg0: i32) -> (i32, i32, i32) {
    %c0_i32 = arith.constant 0 : i32
    %c0_i32_0 = arith.constant 0 : i32
    %c0_i32_1 = arith.constant 0 : i32
    return %arg0, %c0_i32, %c0_i32_0 : i32, i32, i32
  }
  func.func @transform_1(%arg0: i32) -> (i32, i32, i32) {
    %c0_i32 = arith.constant 0 : i32
    %c0_i32_0 = arith.constant 0 : i32
    %c0_i32_1 = arith.constant 0 : i32
    %c0_i32_2 = arith.constant 0 : i32
    return %c0_i32, %c0_i32_0, %c0_i32_1 : i32, i32, i32
  }
  func.func @transform_2(%arg0: i32) -> (i32, i32, i32) {
    %c0_i32 = arith.constant 0 : i32
    %c0_i32_0 = arith.constant 0 : i32
    %c0_i32_1 = arith.constant 0 : i32
    %c0_i32_2 = arith.constant 0 : i32
    return %c0_i32, %c0_i32_0, %c0_i32_1 : i32, i32, i32
  }
  func.func @transform_3(%arg0: i32) -> (i32, i32, i32) {
    %c0_i32 = arith.constant 0 : i32
    %c0_i32_0 = arith.constant 0 : i32
    %c0_i32_1 = arith.constant 0 : i32
    %c0_i32_2 = arith.constant 0 : i32
    return %c0_i32, %c0_i32_0, %c0_i32_1 : i32, i32, i32
  }
  func.func @transform_4(%arg0: i32) -> (i32, i32) {
    %c0_i32 = arith.constant 0 : i32
    %c0_i32_0 = arith.constant 0 : i32
    %c0_i32_1 = arith.constant 0 : i32
    return %c0_i32, %c0_i32_0 : i32, i32
  }
  func.func @transform_5(%arg0: i32) -> (i32, i32) {
    %c0_i32 = arith.constant 0 : i32
    %c0_i32_0 = arith.constant 0 : i32
    %c0_i32_1 = arith.constant 0 : i32
    return %c0_i32, %c0_i32_0 : i32, i32
  }
  func.func @transform_6(%arg0: i32) -> (i32, i32) {
    %c0_i32 = arith.constant 0 : i32
    %c0_i32_0 = arith.constant 0 : i32
    %c0_i32_1 = arith.constant 0 : i32
    return %c0_i32, %c0_i32_0 : i32, i32
  }
}

</mosaic_0001>

<llo_original>
// kernel: lstm_model_forward.2
$region0: #{lstm_model_forward.2}
  #allocation0 [shape = 'u32[]', space=smem, size = 0x4, offset = 0x4, fixed_abs, tag = 'smem constant byte address 0x4 - core index']
  #allocation1 [shape = 'u32[144,128]{1,0:T(1,128)}', space=vmem, size = 0x12000, scoped, tag = 'internal scratch']
  %s0 = inlined_call_operand.vmem [shape: f32[64,16], index: 0, kind: input, shape index: {}]
  %s1 = inlined_call_operand.hbm [shape: f32[16,512], index: 1, kind: input, shape index: {}]
  %s2 = inlined_call_operand.hbm [shape: f32[1,512], index: 2, kind: input, shape index: {}]
  %s3 = inlined_call_operand.vmem [shape: f32[64,512], index: 3, kind: output, shape index: {}]
  %s4 = sld [smem:[#allocation0]]
  $region30: #{lstm_model_forward.2} parent=0
    _
  %s6 = ssub.s32 1, %s4
  %s7 = scalar_select 0, %s6, %s4
  $region1: #{lstm_model_forward.2} parent=0
    #allocation2 [shape = 'u8[32768]{0}', space=vmem, size = 0x8000, scoped, tag = 'input window, operand 1, single buffered']
    #allocation3 [shape = 's32[1]{0}', space=sflag, size = 0x4, scoped, tag = 'scoped memory for lstm_model_forward.2']
    #allocation4 [shape = 'u8[2048]{0}', space=vmem, size = 0x800, scoped, tag = 'input window, operand 2, single buffered']
    #allocation5 [shape = 's32[1]{0}', space=sflag, size = 0x4, scoped, tag = 'scoped memory for lstm_model_forward.2']
    %8 = vsyncpa [#allocation3], 0
    %9 = vsyncpa [#allocation5], 0
    // Predicated region
    $region2: #{lstm_model_forward.2} parent=1 // pred_check
      _
    $region3: #{lstm_model_forward.2} parent=1 // pred_check_branch
      %11 = sbr.rel (0) target = $region5
    $region4: #{lstm_model_forward.2} parent=1 // pred_region
      _
    $region5: #{lstm_model_forward.2} parent=1 // pred_fallthru
      _
    // Predicated region
    $region6: #{lstm_model_forward.2} parent=1 // pred_check
      _
    $region7: #{lstm_model_forward.2} parent=1 // pred_check_branch
      %13 = sbr.rel (0) target = $region9
    $region8: #{lstm_model_forward.2} parent=1 // pred_region
      %s15 = ssub.s32 1024, 1024
      %16 = vsyncadd [#allocation3], %s15
      %s17 = sshll.u32 [#allocation2], 4
      %s18 = int_to_ptr.vmem [resolvable:$true] %s17
      %23 = dma.hbm_to_vmem [thread:$0]  %s1, 1024, %s18, [#allocation3], 512, 512, 32
    $region9: #{lstm_model_forward.2} parent=1 // pred_fallthru
      _
    // Predicated region
    $region10: #{lstm_model_forward.2} parent=1 // pred_check
      _
    $region11: #{lstm_model_forward.2} parent=1 // pred_check_branch
      %25 = sbr.rel (0) target = $region13
    $region12: #{lstm_model_forward.2} parent=1 // pred_region
      %s27 = ssub.s32 64, 64
      %28 = vsyncadd [#allocation5], %s27
      %s30 = sshll.u32 [#allocation4], 4
      %s31 = int_to_ptr.vmem [resolvable:$true] %s30
      %33 = dma.hbm_to_vmem [thread:$0]  %s2, 64, %s31, [#allocation5]
    $region13: #{lstm_model_forward.2} parent=1 // pred_fallthru
      _
    // Predicated region
    $region14: #{lstm_model_forward.2} parent=1 // pred_check
      _
    $region15: #{lstm_model_forward.2} parent=1 // pred_check_branch
      %35 = sbr.rel (0) target = $region17
    $region16: #{lstm_model_forward.2} parent=1 // pred_region
      %36 = dma.done [#allocation3], 1024
    $region17: #{lstm_model_forward.2} parent=1 // pred_fallthru
      _
    // Predicated region
    $region18: #{lstm_model_forward.2} parent=1 // pred_check
      _
    $region19: #{lstm_model_forward.2} parent=1 // pred_check_branch
      %38 = sbr.rel (0) target = $region21
    $region20: #{lstm_model_forward.2} parent=1 // pred_region
      %39 = dma.done [#allocation5], 64
    $region21: #{lstm_model_forward.2} parent=1 // pred_fallthru
      _
    %v40 = vld [vmem:[%s0] sm:$0xff]
    %v41 = vld [vmem:[%s0 + $0x8] sm:$0xff]
    %v42 = vld [vmem:[%s0 + $0x10] sm:$0xff]
    %v43 = vld [vmem:[%s0 + $0x18] sm:$0xff]
    %v44 = vld [vmem:[%s0 + $0x20] sm:$0xff]
    %v45 = vld [vmem:[%s0 + $0x28] sm:$0xff]
    %v46 = vld [vmem:[%s0 + $0x30] sm:$0xff]
    %v47 = vld [vmem:[%s0 + $0x38] sm:$0xff]
    %v48 = vld [vmem:[#allocation2] sm:$0xff]
    %v49 = vld [vmem:[#allocation2 + $0x8] sm:$0xff]
    %v50 = vld [vmem:[#allocation2 + $0x10] sm:$0xff]
    %v51 = vld [vmem:[#allocation2 + $0x18] sm:$0xff]
    %v52 = vld [vmem:[#allocation2 + $0x20] sm:$0xff]
    %v53 = vld [vmem:[#allocation2 + $0x28] sm:$0xff]
    %v54 = vld [vmem:[#allocation2 + $0x30] sm:$0xff]
    %v55 = vld [vmem:[#allocation2 + $0x38] sm:$0xff]
    %v56 = vld [vmem:[#allocation4] sm:$0xf]
    %v58 = vlaneseq
    %v59 = vshrl.u32 %v58, 7
    %v60 = vsub.s32 0, %v59
    %v61 = vrot.slane %v56, %v60
    %v62 = vlaneseq
    %v63 = vshrl.u32 %v62, 7
    %v64 = vsub.s32 1, %v63
    %v65 = vrot.slane %v56, %v64
    %v66 = vlaneseq
    %v67 = vshrl.u32 %v66, 7
    %v68 = vsub.s32 2, %v67
    %v69 = vrot.slane %v56, %v68
    %v70 = vlaneseq
    %v71 = vshrl.u32 %v70, 7
    %v72 = vsub.s32 3, %v71
    %v73 = vrot.slane %v56, %v72
    %vm78 = vcmask 130048
    %v80 = vsel %vm78, %v40, 0
    %v83 = vsel %vm78, %v41, 0
    %v86 = vsel %vm78, %v42, 0
    %v89 = vsel %vm78, %v43, 0
    %v92 = vsel %vm78, %v44, 0
    %v95 = vsel %vm78, %v45, 0
    %v98 = vsel %vm78, %v46, 0
    %v101 = vsel %vm78, %v47, 0
    %103 = vmatprep.subr.mxu0 %v49
    %104 = vmatpush1.msra.mxu0 %v48
    %105 = vmatprep.subr.mxu0 %v53
    %106 = vmatpush1.msra.mxu0 %v52
    %107 = vmatprep.subr.mxu0 0.0
    %108 = vmatpush1.msra.mxu0 0.0
    %109 = vmatprep.subr.mxu0 0.0
    %110 = vmatpush1.msra.mxu0 0.0
    %111 = vmatprep.subr.mxu0 0.0
    %112 = vmatpush1.msra.mxu0 0.0
    %113 = vmatprep.subr.mxu0 0.0
    %114 = vmatpush1.msra.mxu0 0.0
    %115 = vmatprep.subr.mxu0 0.0
    %116 = vmatpush1.msra.mxu0 0.0
    %117 = vmatprep.subr.mxu0 0.0
    %118 = vmatpush1.msra.mxu0 0.0
    %119 = vmatprep.subr.mxu0 0.0
    %120 = vmatpush1.msra.mxu0 0.0
    %121 = vmatprep.subr.mxu0 0.0
    %122 = vmatpush1.msra.mxu0 0.0
    %123 = vmatprep.subr.mxu0 0.0
    %124 = vmatpush1.msra.mxu0 0.0
    %125 = vmatprep.subr.mxu0 0.0
    %126 = vmatpush1.msra.mxu0 0.0
    %127 = vmatprep.subr.mxu0 0.0
    %128 = vmatpush1.msra.mxu0 0.0
    %129 = vmatprep.subr.mxu0 0.0
    %130 = vmatpush1.msra.mxu0 0.0
    %131 = vmatprep.subr.mxu0 0.0
    %132 = vmatpush1.msra.mxu0 0.0
    %133 = vmatprep.subr.mxu0 0.0
    %134 = vmatpush1.msra.mxu0 0.0
    %135 = vmatprep.subr.mxu0 0.0
    %136 = vmatpush1.msra.mxu0 0.0
    %137 = vmatprep.subr.mxu0 0.0
    %138 = vmatpush1.msra.mxu0 0.0
    %139 = vmatprep.subr.mxu0 0.0
    %140 = vmatpush1.msra.mxu0 0.0
    %141 = vmatprep.subr.mxu0 0.0
    %142 = vmatpush1.msra.mxu0 0.0
    %143 = vmatprep.subr.mxu0 0.0
    %144 = vmatpush1.msra.mxu0 0.0
    %145 = vmatprep.subr.mxu0 0.0
    %146 = vmatpush1.msra.mxu0 0.0
    %147 = vmatprep.subr.mxu0 0.0
    %148 = vmatpush1.msra.mxu0 0.0
    %149 = vmatprep.subr.mxu0 0.0
    %150 = vmatpush1.msra.mxu0 0.0
    %151 = vmatprep.subr.mxu0 0.0
    %152 = vmatpush1.msra.mxu0 0.0
    %153 = vmatprep.subr.mxu0 0.0
    %154 = vmatpush1.msra.mxu0 0.0
    %155 = vmatprep.subr.mxu0 0.0
    %156 = vmatpush1.msra.mxu0 0.0
    %157 = vmatprep.subr.mxu0 0.0
    %158 = vmatpush1.msra.mxu0 0.0
    %159 = vmatprep.subr.mxu0 0.0
    %160 = vmatpush1.msra.mxu0 0.0
    %161 = vmatprep.subr.mxu0 0.0
    %162 = vmatpush1.msra.mxu0 0.0
    %163 = vmatprep.subr.mxu0 0.0
    %164 = vmatpush1.msra.mxu0 0.0
    %165 = vmatprep.subr.mxu0 0.0
    %166 = vmatpush1.msra.mxu0 0.0
    %167 = vmatprep.mubr.f32.mxu0 0.0
    %168 = vmatmul.mubr.f32.gmra.mrb[0].mxu0 %v80
    %v169 = vpop.f32.mrb[0].mxu0
    %v170 = vadd.f32 %v61, %v169
    %v171 = vpop.f32.mrb[0].mxu0
    %v172 = vadd.f32 %v65, %v171
    %173 = vmatprep.mubr.f32.mxu0 0.0
    %174 = vmatmul.mubr.f32.gmra.mrb[0].mxu0 %v83
    %v175 = vpop.f32.mrb[0].mxu0
    %v176 = vadd.f32 %v61, %v175
    %v177 = vpop.f32.mrb[0].mxu0
    %v178 = vadd.f32 %v65, %v177
    %179 = vmatprep.mubr.f32.mxu0 0.0
    %180 = vmatmul.mubr.f32.gmra.mrb[0].mxu0 %v86
    %v181 = vpop.f32.mrb[0].mxu0
    %v182 = vadd.f32 %v61, %v181
    %v183 = vpop.f32.mrb[0].mxu0
    %v184 = vadd.f32 %v65, %v183
    %185 = vmatprep.mubr.f32.mxu0 0.0
    %186 = vmatmul.mubr.f32.gmra.mrb[0].mxu0 %v89
    %v187 = vpop.f32.mrb[0].mxu0
    %v188 = vadd.f32 %v61, %v187
    %v189 = vpop.f32.mrb[0].mxu0
    %v190 = vadd.f32 %v65, %v189
    %191 = vmatprep.mubr.f32.mxu0 0.0
    %192 = vmatmul.mubr.f32.gmra.mrb[0].mxu0 %v92
    %v193 = vpop.f32.mrb[0].mxu0
    %v194 = vadd.f32 %v61, %v193
    %v195 = vpop.f32.mrb[0].mxu0
    %v196 = vadd.f32 %v65, %v195
    %197 = vmatprep.mubr.f32.mxu0 0.0
    %198 = vmatmul.mubr.f32.gmra.mrb[0].mxu0 %v95
    %v199 = vpop.f32.mrb[0].mxu0
    %v200 = vadd.f32 %v61, %v199
    %v201 = vpop.f32.mrb[0].mxu0
    %v202 = vadd.f32 %v65, %v201
    %203 = vmatprep.mubr.f32.mxu0 0.0
    %204 = vmatmul.mubr.f32.gmra.mrb[0].mxu0 %v98
    %v205 = vpop.f32.mrb[0].mxu0
    %v206 = vadd.f32 %v61, %v205
    %v207 = vpop.f32.mrb[0].mxu0
    %v208 = vadd.f32 %v65, %v207
    %209 = vmatprep.mubr.f32.mxu0 0.0
    %210 = vmatmul.mubr.f32.gmra.mrb[0].mxu0 %v101
    %v211 = vpop.f32.mrb[0].mxu0
    %v212 = vadd.f32 %v61, %v211
    %v213 = vpop.f32.mrb[0].mxu0
    %v214 = vadd.f32 %v65, %v213
    %215 = vdwg.mxu0
    %216 = vmatprep.subr.mxu0 %v51
    %217 = vmatpush1.msra.mxu0 %v50
    %218 = vmatprep.subr.mxu0 %v55
    %219 = vmatpush1.msra.mxu0 %v54
    %220 = vmatprep.subr.mxu0 0.0
    %221 = vmatpush1.msra.mxu0 0.0
    %222 = vmatprep.subr.mxu0 0.0
    %223 = vmatpush1.msra.mxu0 0.0
    %224 = vmatprep.subr.mxu0 0.0
    %225 = vmatpush1.msra.mxu0 0.0
    %226 = vmatprep.subr.mxu0 0.0
    %227 = vmatpush1.msra.mxu0 0.0
    %228 = vmatprep.subr.mxu0 0.0
    %229 = vmatpush1.msra.mxu0 0.0
    %230 = vmatprep.subr.mxu0 0.0
    %231 = vmatpush1.msra.mxu0 0.0
    %232 = vmatprep.subr.mxu0 0.0
    %233 = vmatpush1.msra.mxu0 0.0
    %234 = vmatprep.subr.mxu0 0.0
    %235 = vmatpush1.msra.mxu0 0.0
    %236 = vmatprep.subr.mxu0 0.0
    %237 = vmatpush1.msra.mxu0 0.0
    %238 = vmatprep.subr.mxu0 0.0
    %239 = vmatpush1.msra.mxu0 0.0
    %240 = vmatprep.subr.mxu0 0.0
    %241 = vmatpush1.msra.mxu0 0.0
    %242 = vmatprep.subr.mxu0 0.0
    %243 = vmatpush1.msra.mxu0 0.0
    %244 = vmatprep.subr.mxu0 0.0
    %245 = vmatpush1.msra.mxu0 0.0
    %246 = vmatprep.subr.mxu0 0.0
    %247 = vmatpush1.msra.mxu0 0.0
    %248 = vmatprep.subr.mxu0 0.0
    %249 = vmatpush1.msra.mxu0 0.0
    %250 = vmatprep.subr.mxu0 0.0
    %251 = vmatpush1.msra.mxu0 0.0
    %252 = vmatprep.subr.mxu0 0.0
    %253 = vmatpush1.msra.mxu0 0.0
    %254 = vmatprep.subr.mxu0 0.0
    %255 = vmatpush1.msra.mxu0 0.0
    %256 = vmatprep.subr.mxu0 0.0
    %257 = vmatpush1.msra.mxu0 0.0
    %258 = vmatprep.subr.mxu0 0.0
    %259 = vmatpush1.msra.mxu0 0.0
    %260 = vmatprep.subr.mxu0 0.0
    %261 = vmatpush1.msra.mxu0 0.0
    %262 = vmatprep.subr.mxu0 0.0
    %263 = vmatpush1.msra.mxu0 0.0
    %264 = vmatprep.subr.mxu0 0.0
    %265 = vmatpush1.msra.mxu0 0.0
    %266 = vmatprep.subr.mxu0 0.0
    %267 = vmatpush1.msra.mxu0 0.0
    %268 = vmatprep.subr.mxu0 0.0
    %269 = vmatpush1.msra.mxu0 0.0
    %270 = vmatprep.subr.mxu0 0.0
    %271 = vmatpush1.msra.mxu0 0.0
    %272 = vmatprep.subr.mxu0 0.0
    %273 = vmatpush1.msra.mxu0 0.0
    %274 = vmatprep.subr.mxu0 0.0
    %275 = vmatpush1.msra.mxu0 0.0
    %276 = vmatprep.subr.mxu0 0.0
    %277 = vmatpush1.msra.mxu0 0.0
    %278 = vmatprep.subr.mxu0 0.0
    %279 = vmatpush1.msra.mxu0 0.0
    %280 = vmatprep.mubr.f32.mxu0 0.0
    %281 = vmatmul.mubr.f32.gmra.mrb[0].mxu0 %v80
    %v282 = vpop.f32.mrb[0].mxu0
    %v283 = vadd.f32 %v69, %v282
    %v284 = vpop.f32.mrb[0].mxu0
    %v285 = vadd.f32 %v73, %v284
    %286 = vmatprep.mubr.f32.mxu0 0.0
    %287 = vmatmul.mubr.f32.gmra.mrb[0].mxu0 %v83
    %v288 = vpop.f32.mrb[0].mxu0
    %v289 = vadd.f32 %v69, %v288
    %v290 = vpop.f32.mrb[0].mxu0
    %v291 = vadd.f32 %v73, %v290
    %292 = vmatprep.mubr.f32.mxu0 0.0
    %293 = vmatmul.mubr.f32.gmra.mrb[0].mxu0 %v86
    %v294 = vpop.f32.mrb[0].mxu0
    %v295 = vadd.f32 %v69, %v294
    %v296 = vpop.f32.mrb[0].mxu0
    %v297 = vadd.f32 %v73, %v296
    %298 = vmatprep.mubr.f32.mxu0 0.0
    %299 = vmatmul.mubr.f32.gmra.mrb[0].mxu0 %v89
    %v300 = vpop.f32.mrb[0].mxu0
    %v301 = vadd.f32 %v69, %v300
    %v302 = vpop.f32.mrb[0].mxu0
    %v303 = vadd.f32 %v73, %v302
    %304 = vmatprep.mubr.f32.mxu0 0.0
    %305 = vmatmul.mubr.f32.gmra.mrb[0].mxu0 %v92
    %v306 = vpop.f32.mrb[0].mxu0
    %v307 = vadd.f32 %v69, %v306
    %v308 = vpop.f32.mrb[0].mxu0
    %v309 = vadd.f32 %v73, %v308
    %310 = vmatprep.mubr.f32.mxu0 0.0
    %311 = vmatmul.mubr.f32.gmra.mrb[0].mxu0 %v95
    %v312 = vpop.f32.mrb[0].mxu0
    %v313 = vadd.f32 %v69, %v312
    %v314 = vpop.f32.mrb[0].mxu0
    %v315 = vadd.f32 %v73, %v314
    %316 = vmatprep.mubr.f32.mxu0 0.0
    %317 = vmatmul.mubr.f32.gmra.mrb[0].mxu0 %v98
    %v318 = vpop.f32.mrb[0].mxu0
    %v319 = vadd.f32 %v69, %v318
    %v320 = vpop.f32.mrb[0].mxu0
    %v321 = vadd.f32 %v73, %v320
    %322 = vmatprep.mubr.f32.mxu0 0.0
    %323 = vmatmul.mubr.f32.gmra.mrb[0].mxu0 %v101
    %v324 = vpop.f32.mrb[0].mxu0
    %v325 = vadd.f32 %v69, %v324
    %v326 = vpop.f32.mrb[0].mxu0
    %v327 = vadd.f32 %v73, %v326
    %328 = vdwg.mxu0
    %329 = vst [vmem:[%s3] sm:$0xff] %v170
    %330 = vst [vmem:[%s3 + $0x8] sm:$0xff] %v172
    %331 = vst [vmem:[%s3 + $0x10] sm:$0xff] %v283
    %332 = vst [vmem:[%s3 + $0x18] sm:$0xff] %v285
    %333 = vst [vmem:[%s3 + $0x20] sm:$0xff] %v176
    %334 = vst [vmem:[%s3 + $0x28] sm:$0xff] %v178
    %335 = vst [vmem:[%s3 + $0x30] sm:$0xff] %v289
    %336 = vst [vmem:[%s3 + $0x38] sm:$0xff] %v291
    %337 = vst [vmem:[%s3 + $0x40] sm:$0xff] %v182
    %338 = vst [vmem:[%s3 + $0x48] sm:$0xff] %v184
    %339 = vst [vmem:[%s3 + $0x50] sm:$0xff] %v295
    %340 = vst [vmem:[%s3 + $0x58] sm:$0xff] %v297
    %341 = vst [vmem:[%s3 + $0x60] sm:$0xff] %v188
    %342 = vst [vmem:[%s3 + $0x68] sm:$0xff] %v190
    %343 = vst [vmem:[%s3 + $0x70] sm:$0xff] %v301
    %344 = vst [vmem:[%s3 + $0x78] sm:$0xff] %v303
    %345 = vst [vmem:[%s3 + $0x80] sm:$0xff] %v194
    %346 = vst [vmem:[%s3 + $0x88] sm:$0xff] %v196
    %347 = vst [vmem:[%s3 + $0x90] sm:$0xff] %v307
    %348 = vst [vmem:[%s3 + $0x98] sm:$0xff] %v309
    %349 = vst [vmem:[%s3 + $0xa0] sm:$0xff] %v200
    %350 = vst [vmem:[%s3 + $0xa8] sm:$0xff] %v202
    %351 = vst [vmem:[%s3 + $0xb0] sm:$0xff] %v313
    %352 = vst [vmem:[%s3 + $0xb8] sm:$0xff] %v315
    %353 = vst [vmem:[%s3 + $0xc0] sm:$0xff] %v206
    %354 = vst [vmem:[%s3 + $0xc8] sm:$0xff] %v208
    %355 = vst [vmem:[%s3 + $0xd0] sm:$0xff] %v319
    %356 = vst [vmem:[%s3 + $0xd8] sm:$0xff] %v321
    %357 = vst [vmem:[%s3 + $0xe0] sm:$0xff] %v212
    %358 = vst [vmem:[%s3 + $0xe8] sm:$0xff] %v214
    %359 = vst [vmem:[%s3 + $0xf0] sm:$0xff] %v325
    %360 = vst [vmem:[%s3 + $0xf8] sm:$0xff] %v327
    // Predicated region
    $region22: #{lstm_model_forward.2} parent=1 // pred_check
      _
    $region23: #{lstm_model_forward.2} parent=1 // pred_check_branch
      %362 = sbr.rel (0) target = $region25
    $region24: #{lstm_model_forward.2} parent=1 // pred_region
      _
    $region25: #{lstm_model_forward.2} parent=1 // pred_fallthru
      _
    // Predicated region
    $region26: #{lstm_model_forward.2} parent=1 // pred_check
      _
    $region27: #{lstm_model_forward.2} parent=1 // pred_check_branch
      %364 = sbr.rel (0) target = $region29
    $region28: #{lstm_model_forward.2} parent=1 // pred_region
      _
    $region29: #{lstm_model_forward.2} parent=1 // pred_fallthru
      _
    %365 = vsyncpa [#allocation3], 1
    %366 = vsyncpa [#allocation5], 1

// kernel: lstm_model_forward.3
$region0: #{lstm_model_forward.3}
  #allocation0 [shape = 'u32[]', space=smem, size = 0x4, offset = 0x4, fixed_abs, tag = 'smem constant byte address 0x4 - core index']
  #allocation1 [shape = 'u32[144,128]{1,0:T(1,128)}', space=vmem, size = 0x12000, scoped, tag = 'internal scratch']
  #allocation2 [shape = 'f32[2,8,128]{2,1,0:T(8,128)}', space=vmem, size = 0x2000, scoped, tag = 'scratch operand']
  #allocation3 [shape = 'f32[2,8,128]{2,1,0:T(8,128)}', space=vmem, size = 0x2000, scoped, tag = 'scratch operand']
  #allocation4 [shape = 'f32[4,8,128]{2,1,0:T(8,128)}', space=vmem, size = 0x4000, scoped, tag = 'scratch operand']
  #allocation5 [shape = 'f32[4,8,512]{2,1,0:T(8,128)}', space=vmem, size = 0x10000, scoped, tag = 'scratch operand']
  %s0 = inlined_call_operand.vmem [shape: f32[8,8,512], index: 0, kind: input, shape index: {}]
  %s1 = inlined_call_operand.vmem [shape: f32[1,128,512], index: 1, kind: input, shape index: {}]
  %s2 = inlined_call_operand.vmem [shape: f32[1,1,512], index: 2, kind: input, shape index: {}]
  %s3 = inlined_call_operand.hbm [shape: f32[2,128,512], index: 3, kind: input, shape index: {}]
  %s4 = inlined_call_operand.hbm [shape: f32[128,128], index: 4, kind: input, shape index: {}]
  %s5 = inlined_call_operand.vmem [shape: f32[1,128], index: 5, kind: input, shape index: {}]
  %s6 = inlined_call_operand.vmem [shape: f32[8,128], index: 6, kind: output, shape index: {}]
  %s7 = sld [smem:[#allocation0]]
  $region73: #{lstm_model_forward.3} parent=0
    _
  %s9 = ssub.s32 1, %s7
  %s10 = scalar_select 0, %s9, %s7
  $region1: #{lstm_model_forward.3} parent=0
    #allocation6 [shape = 'u8[524288]{0}', space=vmem, size = 0x80000, scoped, tag = 'input window, operand 3, single buffered']
    #allocation7 [shape = 's32[2]{0}', space=sflag, size = 0x8, scoped, tag = 'scoped memory for lstm_model_forward.3']
    #allocation8 [shape = 'u8[65536]{0}', space=vmem, size = 0x10000, scoped, tag = 'input window, operand 4, single buffered']
    #allocation9 [shape = 's32[1]{0}', space=sflag, size = 0x4, scoped, tag = 'scoped memory for lstm_model_forward.3']
    %11 = vsyncpa [#allocation7], 0
    %12 = vsyncpa [#allocation9], 0
    loop: start=0, step=1, limit=4
    $region2: #{lstm_model_forward.3} parent=1 // loop_pre_header
      _
    $region3: #{lstm_model_forward.3} parent=1 // loop_header
      %s14 = sphi 0, %s18
      %p15 = scmp.ge.s32.totalorder %s14, 4
      %s24 = sphi 0, %s26
      %s27 = sphi 0, %s24
      %s28 = sphi 0, %s27
      %s44 = sphi 0, %s28
      %s48 = sphi 0, %s48
      %s50 = sphi 0, %s48
      %s51 = sphi 0, %s50
      %s65 = sphi 0, %s51
      %s69 = sphi 0, %s69
      %s71 = sphi 0, %s69
      %s72 = sphi 0, %s71
      %s86 = sphi 0, %s72
      %s90 = sphi 0, %s90
      %s92 = sphi 0, %s90
      %s93 = sphi 0, %s92
      %s107 = sphi 0, %s93
      %s111 = sphi 0, %s111
      %s113 = sphi 0, %s111
      %s114 = sphi 0, %s113
      %s128 = sphi 0, %s114
      %s132 = sphi 0, %s132
      %s134 = sphi 0, %s132
      %s135 = sphi 0, %s134
      %s149 = sphi 0, %s135
      %s153 = sphi 0, %s153
      %s155 = sphi 0, %s153
      %s156 = sphi 0, %s155
      %s170 = sphi 0, %s156
    $region4: #{lstm_model_forward.3} parent=1 // loop_header_branch
      %17 = sbr.rel (%p15) target = $region8
    $region5: #{lstm_model_forward.3} parent=1 // loop_body
      %s19 = ssub.s32 %s14, 1
      %s20 = ssub.s32 %s14, 2
      %s21 = sadd.s32 %s14, 1
      %s22 = ssub.s32 %s14, %s21
      %p23 = scmp.eq.s32.totalorder %s22, 0
      %s25 = sadd.s32 %s24, 1
      %s26 = scalar_select %p23, %s24, %s25
      %p29 = pneg %p23
      %p30 = scmp.eq.s32.totalorder %s14, 1
      %p31 = por %p29, %p30
      %p32 = scmp.ne.s32.totalorder %s24, %s27
      %p33 = scmp.eq.s32.totalorder %s14, 0
      %p34 = por %p32, %p33
      %p35 = scmp.ne.s32.totalorder %s24, %s27
      %p36 = scmp.eq.s32.totalorder %s19, 1
      %p37 = por %p35, %p36
      %p38 = scmp.ne.s32.totalorder %s27, %s28
      %p39 = scmp.eq.s32.totalorder %s19, 0
      %p40 = por %p38, %p39
      %p41 = scmp.ne.s32.totalorder %s27, %s28
      %p42 = scmp.eq.s32.totalorder %s20, 1
      %p43 = por %p41, %p42
      %p45 = scmp.ne.s32.totalorder %s28, %s44
      %p46 = scmp.eq.s32.totalorder %s20, 0
      %p47 = por %p45, %p46
      %s49 = sadd.s32 %s48, 1
      %p52 = scmp.eq.s32.totalorder %s14, 1
      %p53 = scmp.ne.s32.totalorder %s48, %s50
      %p54 = scmp.eq.s32.totalorder %s14, 0
      %p55 = por %p53, %p54
      %p56 = scmp.ne.s32.totalorder %s48, %s50
      %p57 = scmp.eq.s32.totalorder %s19, 1
      %p58 = por %p56, %p57
      %p59 = scmp.ne.s32.totalorder %s50, %s51
      %p60 = scmp.eq.s32.totalorder %s19, 0
      %p61 = por %p59, %p60
      %p62 = scmp.ne.s32.totalorder %s50, %s51
      %p63 = scmp.eq.s32.totalorder %s20, 1
      %p64 = por %p62, %p63
      %p66 = scmp.ne.s32.totalorder %s51, %s65
      %p67 = scmp.eq.s32.totalorder %s20, 0
      %p68 = por %p66, %p67
      %s70 = sadd.s32 %s69, 1
      %p73 = scmp.eq.s32.totalorder %s14, 1
      %p74 = scmp.ne.s32.totalorder %s69, %s71
      %p75 = scmp.eq.s32.totalorder %s14, 0
      %p76 = por %p74, %p75
      %p77 = scmp.ne.s32.totalorder %s69, %s71
      %p78 = scmp.eq.s32.totalorder %s19, 1
      %p79 = por %p77, %p78
      %p80 = scmp.ne.s32.totalorder %s71, %s72
      %p81 = scmp.eq.s32.totalorder %s19, 0
      %p82 = por %p80, %p81
      %p83 = scmp.ne.s32.totalorder %s71, %s72
      %p84 = scmp.eq.s32.totalorder %s20, 1
      %p85 = por %p83, %p84
      %p87 = scmp.ne.s32.totalorder %s72, %s86
      %p88 = scmp.eq.s32.totalorder %s20, 0
      %p89 = por %p87, %p88
      %s91 = sadd.s32 %s90, 1
      %p94 = scmp.eq.s32.totalorder %s14, 1
      %p95 = scmp.ne.s32.totalorder %s90, %s92
      %p96 = scmp.eq.s32.totalorder %s14, 0
      %p97 = por %p95, %p96
      %p98 = scmp.ne.s32.totalorder %s90, %s92
      %p99 = scmp.eq.s32.totalorder %s19, 1
      %p100 = por %p98, %p99
      %p101 = scmp.ne.s32.totalorder %s92, %s93
      %p102 = scmp.eq.s32.totalorder %s19, 0
      %p103 = por %p101, %p102
      %p104 = scmp.ne.s32.totalorder %s92, %s93
      %p105 = scmp.eq.s32.totalorder %s20, 1
      %p106 = por %p104, %p105
      %p108 = scmp.ne.s32.totalorder %s93, %s107
      %p109 = scmp.eq.s32.totalorder %s20, 0
      %p110 = por %p108, %p109
      %s112 = sadd.s32 %s111, 1
      %p115 = scmp.eq.s32.totalorder %s14, 1
      %p116 = scmp.ne.s32.totalorder %s111, %s113
      %p117 = scmp.eq.s32.totalorder %s14, 0
      %p118 = por %p116, %p117
      %p119 = scmp.ne.s32.totalorder %s111, %s113
      %p120 = scmp.eq.s32.totalorder %s19, 1
      %p121 = por %p119, %p120
      %p122 = scmp.ne.s32.totalorder %s113, %s114
      %p123 = scmp.eq.s32.totalorder %s19, 0
      %p124 = por %p122, %p123
      %p125 = scmp.ne.s32.totalorder %s113, %s114
      %p126 = scmp.eq.s32.totalorder %s20, 1
      %p127 = por %p125, %p126
      %p129 = scmp.ne.s32.totalorder %s114, %s128
      %p130 = scmp.eq.s32.totalorder %s20, 0
      %p131 = por %p129, %p130
      %s133 = sadd.s32 %s132, 1
      %p136 = scmp.eq.s32.totalorder %s14, 1
      %p137 = scmp.ne.s32.totalorder %s132, %s134
      %p138 = scmp.eq.s32.totalorder %s14, 0
      %p139 = por %p137, %p138
      %p140 = scmp.ne.s32.totalorder %s132, %s134
      %p141 = scmp.eq.s32.totalorder %s19, 1
      %p142 = por %p140, %p141
      %p143 = scmp.ne.s32.totalorder %s134, %s135
      %p144 = scmp.eq.s32.totalorder %s19, 0
      %p145 = por %p143, %p144
      %p146 = scmp.ne.s32.totalorder %s134, %s135
      %p147 = scmp.eq.s32.totalorder %s20, 1
      %p148 = por %p146, %p147
      %p150 = scmp.ne.s32.totalorder %s135, %s149
      %p151 = scmp.eq.s32.totalorder %s20, 0
      %p152 = por %p150, %p151
      %s154 = sadd.s32 %s153, 1
      %p157 = scmp.eq.s32.totalorder %s14, 1
      %p158 = scmp.ne.s32.totalorder %s153, %s155
      %p159 = scmp.eq.s32.totalorder %s14, 0
      %p160 = por %p158, %p159
      %p161 = scmp.ne.s32.totalorder %s153, %s155
      %p162 = scmp.eq.s32.totalorder %s19, 1
      %p163 = por %p161, %p162
      %p164 = scmp.ne.s32.totalorder %s155, %s156
      %p165 = scmp.eq.s32.totalorder %s19, 0
      %p166 = por %p164, %p165
      %p167 = scmp.ne.s32.totalorder %s155, %s156
      %p168 = scmp.eq.s32.totalorder %s20, 1
      %p169 = por %p167, %p168
      %p171 = scmp.ne.s32.totalorder %s156, %s170
      %p172 = scmp.eq.s32.totalorder %s20, 0
      %p173 = por %p171, %p172
      %p174 = scmp.le.s32.totalorder 1, %s14
      %p175 = scmp.lt.s32.totalorder %s14, 3
      %p176 = pnand %p174, %p175
      %p177 = pneg %p176
      // Predicated region
      $region9: #{lstm_model_forward.3} parent=5 // pred_check
        _
      $region10: #{lstm_model_forward.3} parent=5 // pred_check_branch
        %179 = sbr.rel (%p176) target = $region12
      $region11: #{lstm_model_forward.3} parent=5 // pred_region
        %s180 = ssub.s32 %s14, 1
        // Predicated region
        $region13: #{lstm_model_forward.3} parent=11 // pred_check
          %p181 = pneg %p61
        $region14: #{lstm_model_forward.3} parent=11 // pred_check_branch
          %183 = sbr.rel (%p181) target = $region16
        $region15: #{lstm_model_forward.3} parent=11 // pred_region
          _
        $region16: #{lstm_model_forward.3} parent=11 // pred_fallthru
          _
        // Predicated region
        $region17: #{lstm_model_forward.3} parent=11 // pred_check
          %p184 = pneg %p82
        $region18: #{lstm_model_forward.3} parent=11 // pred_check_branch
          %186 = sbr.rel (%p184) target = $region20
        $region19: #{lstm_model_forward.3} parent=11 // pred_region
          _
        $region20: #{lstm_model_forward.3} parent=11 // pred_fallthru
          _
        // Predicated region
        $region21: #{lstm_model_forward.3} parent=11 // pred_check
          %p187 = pneg %p103
        $region22: #{lstm_model_forward.3} parent=11 // pred_check_branch
          %189 = sbr.rel (%p187) target = $region24
        $region23: #{lstm_model_forward.3} parent=11 // pred_region
          %s191 = ssub.s32 16384, 16384
          %192 = vsyncadd [#allocation7], %s191
          %s193 = sshll.u32 [#allocation6], 4
          %s194 = int_to_ptr.vmem [resolvable:$true] %s193
          %199 = dma.hbm_to_vmem [thread:$0]  %s3, 16384, %s194, [#allocation7], 512, 512, 32
        $region24: #{lstm_model_forward.3} parent=11 // pred_fallthru
          _
        // Predicated region
        $region25: #{lstm_model_forward.3} parent=11 // pred_check
          %p200 = pneg %p124
        $region26: #{lstm_model_forward.3} parent=11 // pred_check_branch
          %202 = sbr.rel (%p200) target = $region28
        $region27: #{lstm_model_forward.3} parent=11 // pred_region
          %s204 = ssub.s32 2048, 2048
          %205 = vsyncadd [#allocation9], %s204
          %s206 = sshll.u32 [#allocation8], 4
          %s207 = int_to_ptr.vmem [resolvable:$true] %s206
          %212 = dma.hbm_to_vmem [thread:$0]  %s4, 2048, %s207, [#allocation9], 128, 128, 8
        $region28: #{lstm_model_forward.3} parent=11 // pred_fallthru
          _
        // Predicated region
        $region29: #{lstm_model_forward.3} parent=11 // pred_check
          %p213 = pneg %p145
        $region30: #{lstm_model_forward.3} parent=11 // pred_check_branch
          %215 = sbr.rel (%p213) target = $region32
        $region31: #{lstm_model_forward.3} parent=11 // pred_region
          _
        $region32: #{lstm_model_forward.3} parent=11 // pred_fallthru
          _
      $region12: #{lstm_model_forward.3} parent=5 // pred_fallthru
        _
      %p216 = scmp.lt.s32.totalorder %s14, 2
      // Predicated region
      $region33: #{lstm_model_forward.3} parent=5 // pred_check
        %p217 = pneg %p216
      $region34: #{lstm_model_forward.3} parent=5 // pred_check_branch
        %219 = sbr.rel (%p217) target = $region36
      $region35: #{lstm_model_forward.3} parent=5 // pred_region
        // Predicated region
        $region37: #{lstm_model_forward.3} parent=35 // pred_check
          %p220 = pneg %p34
        $region38: #{lstm_model_forward.3} parent=35 // pred_check_branch
          %222 = sbr.rel (%p220) target = $region40
        $region39: #{lstm_model_forward.3} parent=35 // pred_region
          %s223 = smul.u32 4, %s14
          %p224 = scmp.lt.s32.totalorder %s223, 7
          %s225 = scalar_select %p224, %s223, 7
          %s226 = smul.addr %s225, 4
          %s227 = smul.addr %s226, 8
          %s228 = scalar_lea.vmem %s0, %s227
          %s229 = smul.u32 4, %s14
        $region40: #{lstm_model_forward.3} parent=35 // pred_fallthru
          _
      $region36: #{lstm_model_forward.3} parent=5 // pred_fallthru
        _
      %p230 = scmp.le.s32.totalorder 1, %s14
      %p231 = scmp.lt.s32.totalorder %s14, 3
      %p232 = pnand %p230, %p231
      %p233 = pneg %p232
      // Predicated region
      $region41: #{lstm_model_forward.3} parent=5 // pred_check
        _
      $region42: #{lstm_model_forward.3} parent=5 // pred_check_branch
        %235 = sbr.rel (%p232) target = $region44
      $region43: #{lstm_model_forward.3} parent=5 // pred_region
        %s236 = ssub.s32 %s14, 1
        // Predicated region
        $region45: #{lstm_model_forward.3} parent=43 // pred_check
          %p237 = pneg %p103
        $region46: #{lstm_model_forward.3} parent=43 // pred_check_branch
          %239 = sbr.rel (%p237) target = $region48
        $region47: #{lstm_model_forward.3} parent=43 // pred_region
          %240 = dma.done [#allocation7], 16384
        $region48: #{lstm_model_forward.3} parent=43 // pred_fallthru
          _
        // Predicated region
        $region49: #{lstm_model_forward.3} parent=43 // pred_check
          %p241 = pneg %p124
        $region50: #{lstm_model_forward.3} parent=43 // pred_check_branch
          %243 = sbr.rel (%p241) target = $region52
        $region51: #{lstm_model_forward.3} parent=43 // pred_region
          %244 = dma.done [#allocation9], 2048
        $region52: #{lstm_model_forward.3} parent=43 // pred_fallthru
          _
        %s245 = smul.u32 4, %s19
        %p246 = scmp.lt.s32.totalorder %s245, 7
        %s247 = scalar_select %p246, %s245, 7
        %s248 = smul.addr %s247, 4
        %s249 = smul.addr %s248, 8
        %s250 = scalar_lea.vmem %s0, %s249
        %p251 = pneg %p40
        %p252 = pneg %p37
        %p253 = pneg %p61
        %p254 = pneg %p58
        %p255 = pneg %p82
        %p256 = pneg %p79
        %p257 = pneg %p103
        %p258 = pneg %p100
        %p259 = pneg %p124
        %p260 = pneg %p121
        %p261 = pneg %p145
        %p262 = pneg %p142
        %p263 = pneg %p166
        %p264 = pneg %p163
        %s265 = smul.u32 4, %s19
        %p266 = scmp.lt.s32.totalorder %s265, 7
        %s267 = scalar_select %p266, %s265, 7
        %s268 = smul.addr %s267, 4
        %s269 = smul.addr %s268, 8
        %s270 = scalar_lea.vmem %s0, %s269
        %s271 = smul.u32 4, %s19
        %p272 = scmp.eq.s32.totalorder %s19, 0
        // Predicated region
        $region53: #{lstm_model_forward.3} parent=43 // pred_check
          %p273 = pneg %p272
        $region54: #{lstm_model_forward.3} parent=43 // pred_check_branch
          %275 = sbr.rel (%p273) target = $region56
        $region55: #{lstm_model_forward.3} parent=43 // pred_region
          %276 = vst [vmem:[#allocation2] sm:$0xff] 0.0
          %277 = vst [vmem:[#allocation2 + $0x8] sm:$0xff] 0.0
          %278 = vst [vmem:[#allocation3] sm:$0xff] 0.0
          %279 = vst [vmem:[#allocation3 + $0x8] sm:$0xff] 0.0
        $region56: #{lstm_model_forward.3} parent=43 // pred_fallthru
          _
        %v280 = vld [vmem:[#allocation2] sm:$0xff]
        %v281 = vld [vmem:[#allocation3] sm:$0xff]
        %v282 = vld [vmem:[%s270] sm:$0xff]
        %v283 = vld [vmem:[%s270 + $0x8] sm:$0xff]
        %v284 = vld [vmem:[%s270 + $0x10] sm:$0xff]
        %v285 = vld [vmem:[%s270 + $0x18] sm:$0xff]
        %v286 = vld [vmem:[#allocation6] sm:$0xff]
        %v287 = vld [vmem:[#allocation6 + $0x8] sm:$0xff]
        %v288 = vld [vmem:[#allocation6 + $0x10] sm:$0xff]
        %v289 = vld [vmem:[#allocation6 + $0x18] sm:$0xff]
        %v290 = vld [vmem:[#allocation6 + $0x20] sm:$0xff]
        %v291 = vld [vmem:[#allocation6 + $0x28] sm:$0xff]
        %v292 = vld [vmem:[#allocation6 + $0x30] sm:$0xff]
        %v293 = vld [vmem:[#allocation6 + $0x38] sm:$0xff]
        %v294 = vld [vmem:[#allocation6 + $0x40] sm:$0xff]
        %v295 = vld [vmem:[#allocation6 + $0x48] sm:$0xff]
        %v296 = vld [vmem:[#allocation6 + $0x50] sm:$0xff]
        %v297 = vld [vmem:[#allocation6 + $0x58] sm:$0xff]
        %v298 = vld [vmem:[#allocation6 + $0x60] sm:$0xff]
        %v299 = vld [vmem:[#allocation6 + $0x68] sm:$0xff]
        %v300 = vld [vmem:[#allocation6 + $0x70] sm:$0xff]
        %v301 = vld [vmem:[#allocation6 + $0x78] sm:$0xff]
        %v302 = vld [vmem:[#allocation6 + $0x80] sm:$0xff]
        %v303 = vld [vmem:[#allocation6 + $0x88] sm:$0xff]
        %v304 = vld [vmem:[#allocation6 + $0x90] sm:$0xff]
        %v305 = vld [vmem:[#allocation6 + $0x98] sm:$0xff]
        %v306 = vld [vmem:[#allocation6 + $0xa0] sm:$0xff]
        %v307 = vld [vmem:[#allocation6 + $0xa8] sm:$0xff]
        %v308 = vld [vmem:[#allocation6 + $0xb0] sm:$0xff]
        %v309 = vld [vmem:[#allocation6 + $0xb8] sm:$0xff]
        %v310 = vld [vmem:[#allocation6 + $0xc0] sm:$0xff]
        %v311 = vld [vmem:[#allocation6 + $0xc8] sm:$0xff]
        %v312 = vld [vmem:[#allocation6 + $0xd0] sm:$0xff]
        %v313 = vld [vmem:[#allocation6 + $0xd8] sm:$0xff]
        %v314 = vld [vmem:[#allocation6 + $0xe0] sm:$0xff]
        %v315 = vld [vmem:[#allocation6 + $0xe8] sm:$0xff]
        %v316 = vld [vmem:[#allocation6 + $0xf0] sm:$0xff]
        %v317 = vld [vmem:[#allocation6 + $0xf8] sm:$0xff]
        %v318 = vld [vmem:[#allocation6 + $0x100] sm:$0xff]
        %v319 = vld [vmem:[#allocation6 + $0x108] sm:$0xff]
        %v320 = vld [vmem:[#allocation6 + $0x110] sm:$0xff]
        %v321 = vld [vmem:[#allocation6 + $0x118] sm:$0xff]
        %v322 = vld [vmem:[#allocation6 + $0x120] sm:$0xff]
        %v323 = vld [vmem:[#allocation6 + $0x128] sm:$0xff]
        %v324 = vld [vmem:[#allocation6 + $0x130] sm:$0xff]
        %v325 = vld [vmem:[#allocation6 + $0x138] sm:$0xff]
        %v326 = vld [vmem:[#allocation6 + $0x140] sm:$0xff]
        %v327 = vld [vmem:[#allocation6 + $0x148] sm:$0xff]
        %v328 = vld [vmem:[#allocation6 + $0x150] sm:$0xff]
        %v329 = vld [vmem:[#allocation6 + $0x158] sm:$0xff]
        %v330 = vld [vmem:[#allocation6 + $0x160] sm:$0xff]
        %v331 = vld [vmem:[#allocation6 + $0x168] sm:$0xff]
        %v332 = vld [vmem:[#allocation6 + $0x170] sm:$0xff]
        %v333 = vld [vmem:[#allocation6 + $0x178] sm:$0xff]
        %v334 = vld [vmem:[#allocation6 + $0x180] sm:$0xff]
        %v335 = vld [vmem:[#allocation6 + $0x188] sm:$0xff]
        %v336 = vld [vmem:[#allocation6 + $0x190] sm:$0xff]
        %v337 = vld [vmem:[#allocation6 + $0x198] sm:$0xff]
        %v338 = vld [vmem:[#allocation6 + $0x1a0] sm:$0xff]
        %v339 = vld [vmem:[#allocation6 + $0x1a8] sm:$0xff]
        %v340 = vld [vmem:[#allocation6 + $0x1b0] sm:$0xff]
        %v341 = vld [vmem:[#allocation6 + $0x1b8] sm:$0xff]
        %v342 = vld [vmem:[#allocation6 + $0x1c0] sm:$0xff]
        %v343 = vld [vmem:[#allocation6 + $0x1c8] sm:$0xff]
        %v344 = vld [vmem:[#allocation6 + $0x1d0] sm:$0xff]
        %v345 = vld [vmem:[#allocation6 + $0x1d8] sm:$0xff]
        %v346 = vld [vmem:[#allocation6 + $0x1e0] sm:$0xff]
        %v347 = vld [vmem:[#allocation6 + $0x1e8] sm:$0xff]
        %v348 = vld [vmem:[#allocation6 + $0x1f0] sm:$0xff]
        %v349 = vld [vmem:[#allocation6 + $0x1f8] sm:$0xff]
        %350 = vmatprep.subr.mxu0 %v287
        %351 = vmatpush1.msra.mxu0 %v286
        %352 = vmatprep.subr.mxu0 %v291
        %353 = vmatpush1.msra.mxu0 %v290
        %354 = vmatprep.subr.mxu0 %v295
        %355 = vmatpush1.msra.mxu0 %v294
        %356 = vmatprep.subr.mxu0 %v299
        %357 = vmatpush1.msra.mxu0 %v298
        %358 = vmatprep.subr.mxu0 %v303
        %359 = vmatpush1.msra.mxu0 %v302
        %360 = vmatprep.subr.mxu0 %v307
        %361 = vmatpush1.msra.mxu0 %v306
        %362 = vmatprep.subr.mxu0 %v311
        %363 = vmatpush1.msra.mxu0 %v310
        %364 = vmatprep.subr.mxu0 %v315
        %365 = vmatpush1.msra.mxu0 %v314
        %366 = vmatprep.subr.mxu0 %v319
        %367 = vmatpush1.msra.mxu0 %v318
        %368 = vmatprep.subr.mxu0 %v323
        %369 = vmatpush1.msra.mxu0 %v322
        %370 = vmatprep.subr.mxu0 %v327
        %371 = vmatpush1.msra.mxu0 %v326
        %372 = vmatprep.subr.mxu0 %v331
        %373 = vmatpush1.msra.mxu0 %v330
        %374 = vmatprep.subr.mxu0 %v335
        %375 = vmatpush1.msra.mxu0 %v334
        %376 = vmatprep.subr.mxu0 %v339
        %377 = vmatpush1.msra.mxu0 %v338
        %378 = vmatprep.subr.mxu0 %v343
        %379 = vmatpush1.msra.mxu0 %v342
        %380 = vmatprep.subr.mxu0 %v347
        %381 = vmatpush1.msra.mxu0 %v346
        %382 = vmatprep.subr.mxu0 0.0
        %383 = vmatpush1.msra.mxu0 0.0
        %384 = vmatprep.subr.mxu0 0.0
        %385 = vmatpush1.msra.mxu0 0.0
        %386 = vmatprep.subr.mxu0 0.0
        %387 = vmatpush1.msra.mxu0 0.0
        %388 = vmatprep.subr.mxu0 0.0
        %389 = vmatpush1.msra.mxu0 0.0
        %390 = vmatprep.subr.mxu0 0.0
        %391 = vmatpush1.msra.mxu0 0.0
        %392 = vmatprep.subr.mxu0 0.0
        %393 = vmatpush1.msra.mxu0 0.0
        %394 = vmatprep.subr.mxu0 0.0
        %395 = vmatpush1.msra.mxu0 0.0
        %396 = vmatprep.subr.mxu0 0.0
        %397 = vmatpush1.msra.mxu0 0.0
        %398 = vmatprep.subr.mxu0 0.0
        %399 = vmatpush1.msra.mxu0 0.0
        %400 = vmatprep.subr.mxu0 0.0
        %401 = vmatpush1.msra.mxu0 0.0
        %402 = vmatprep.subr.mxu0 0.0
        %403 = vmatpush1.msra.mxu0 0.0
        %404 = vmatprep.subr.mxu0 0.0
        %405 = vmatpush1.msra.mxu0 0.0
        %406 = vmatprep.subr.mxu0 0.0
        %407 = vmatpush1.msra.mxu0 0.0
        %408 = vmatprep.subr.mxu0 0.0
        %409 = vmatpush1.msra.mxu0 0.0
        %410 = vmatprep.subr.mxu0 0.0
        %411 = vmatpush1.msra.mxu0 0.0
        %412 = vmatprep.subr.mxu0 0.0
        %413 = vmatpush1.msra.mxu0 0.0
        %414 = vmatprep.mubr.f32.mxu0 0.0
        %415 = vmatmul.mubr.f32.gmra.mrb[0].mxu0 %v280
        %v416 = vpop.f32.mrb[0].mxu0
        %v417 = vadd.f32 0.0, %v416
        %v418 = vpop.f32.mrb[0].mxu0
        %v419 = vadd.f32 0.0, %v418
        %420 = vdwg.mxu0
        %421 = vmatprep.subr.mxu0 %v289
        %422 = vmatpush1.msra.mxu0 %v288
        %423 = vmatprep.subr.mxu0 %v293
        %424 = vmatpush1.msra.mxu0 %v292
        %425 = vmatprep.subr.mxu0 %v297
        %426 = vmatpush1.msra.mxu0 %v296
        %427 = vmatprep.subr.mxu0 %v301
        %428 = vmatpush1.msra.mxu0 %v300
        %429 = vmatprep.subr.mxu0 %v305
        %430 = vmatpush1.msra.mxu0 %v304
        %431 = vmatprep.subr.mxu0 %v309
        %432 = vmatpush1.msra.mxu0 %v308
        %433 = vmatprep.subr.mxu0 %v313
        %434 = vmatpush1.msra.mxu0 %v312
        %435 = vmatprep.subr.mxu0 %v317
        %436 = vmatpush1.msra.mxu0 %v316
        %437 = vmatprep.subr.mxu0 %v321
        %438 = vmatpush1.msra.mxu0 %v320
        %439 = vmatprep.subr.mxu0 %v325
        %440 = vmatpush1.msra.mxu0 %v324
        %441 = vmatprep.subr.mxu0 %v329
        %442 = vmatpush1.msra.mxu0 %v328
        %443 = vmatprep.subr.mxu0 %v333
        %444 = vmatpush1.msra.mxu0 %v332
        %445 = vmatprep.subr.mxu0 %v337
        %446 = vmatpush1.msra.mxu0 %v336
        %447 = vmatprep.subr.mxu0 %v341
        %448 = vmatpush1.msra.mxu0 %v340
        %449 = vmatprep.subr.mxu0 %v345
        %450 = vmatpush1.msra.mxu0 %v344
        %451 = vmatprep.subr.mxu0 %v349
        %452 = vmatpush1.msra.mxu0 %v348
        %453 = vmatprep.subr.mxu0 0.0
        %454 = vmatpush1.msra.mxu0 0.0
        %455 = vmatprep.subr.mxu0 0.0
        %456 = vmatpush1.msra.mxu0 0.0
        %457 = vmatprep.subr.mxu0 0.0
        %458 = vmatpush1.msra.mxu0 0.0
        %459 = vmatprep.subr.mxu0 0.0
        %460 = vmatpush1.msra.mxu0 0.0
        %461 = vmatprep.subr.mxu0 0.0
        %462 = vmatpush1.msra.mxu0 0.0
        %463 = vmatprep.subr.mxu0 0.0
        %464 = vmatpush1.msra.mxu0 0.0
        %465 = vmatprep.subr.mxu0 0.0
        %466 = vmatpush1.msra.mxu0 0.0
        %467 = vmatprep.subr.mxu0 0.0
        %468 = vmatpush1.msra.mxu0 0.0
        %469 = vmatprep.subr.mxu0 0.0
        %470 = vmatpush1.msra.mxu0 0.0
        %471 = vmatprep.subr.mxu0 0.0
        %472 = vmatpush1.msra.mxu0 0.0
        %473 = vmatprep.subr.mxu0 0.0
        %474 = vmatpush1.msra.mxu0 0.0
        %475 = vmatprep.subr.mxu0 0.0
        %476 = vmatpush1.msra.mxu0 0.0
        %477 = vmatprep.subr.mxu0 0.0
        %478 = vmatpush1.msra.mxu0 0.0
        %479 = vmatprep.subr.mxu0 0.0
        %480 = vmatpush1.msra.mxu0 0.0
        %481 = vmatprep.subr.mxu0 0.0
        %482 = vmatpush1.msra.mxu0 0.0
        %483 = vmatprep.subr.mxu0 0.0
        %484 = vmatpush1.msra.mxu0 0.0
        %485 = vmatprep.mubr.f32.mxu0 0.0
        %486 = vmatmul.mubr.f32.gmra.mrb[0].mxu0 %v280
        %v487 = vpop.f32.mrb[0].mxu0
        %v488 = vadd.f32 0.0, %v487
        %v489 = vpop.f32.mrb[0].mxu0
        %v490 = vadd.f32 0.0, %v489
        %491 = vdwg.mxu0
        %v492 = vadd.f32 %v282, %v417
        %v493 = vadd.f32 %v283, %v419
        %v494 = vadd.f32 %v284, %v488
        %v495 = vadd.f32 %v285, %v490
        %v496 = vxor.u32 %v492, 2147483648
        %v497 = vmul.f32 %v496, 1.442695
        %v498 = vpow.pop %v497
        %v499 = vadd.f32 %v498, 1.0
        %v500 = vrcp.pop %v499
        %v501 = vmul.f32 1.0, %v500
        %v502 = vxor.u32 %v493, 2147483648
        %v503 = vmul.f32 %v502, 1.442695
        %v504 = vpow.pop %v503
        %v505 = vadd.f32 %v504, 1.0
        %v506 = vrcp.pop %v505
        %v507 = vmul.f32 1.0, %v506
        %v508 = vtanh.pop %v494
        %v509 = vxor.u32 %v495, 2147483648
        %v510 = vmul.f32 %v509, 1.442695
        %v511 = vpow.pop %v510
        %v512 = vadd.f32 %v511, 1.0
        %v513 = vrcp.pop %v512
        %v514 = vmul.f32 1.0, %v513
        %v515 = vmul.f32 %v507, %v281
        %v516 = vmul.f32 %v501, %v508
        %v517 = vadd.f32 %v515, %v516
        %v518 = vtanh.pop %v517
        %v519 = vmul.f32 %v514, %v518
        %520 = vst [vmem:[#allocation4] sm:$0xff] %v519
        %s521 = scalar_lea.vmem %s270, 32
        %v522 = vld [vmem:[%s521] sm:$0xff]
        %v523 = vld [vmem:[%s521 + $0x8] sm:$0xff]
        %v524 = vld [vmem:[%s521 + $0x10] sm:$0xff]
        %v525 = vld [vmem:[%s521 + $0x18] sm:$0xff]
        %v526 = vld [vmem:[#allocation6] sm:$0xff]
        %v527 = vld [vmem:[#allocation6 + $0x8] sm:$0xff]
        %v528 = vld [vmem:[#allocation6 + $0x10] sm:$0xff]
        %v529 = vld [vmem:[#allocation6 + $0x18] sm:$0xff]
        %v530 = vld [vmem:[#allocation6 + $0x20] sm:$0xff]
        %v531 = vld [vmem:[#allocation6 + $0x28] sm:$0xff]
        %v532 = vld [vmem:[#allocation6 + $0x30] sm:$0xff]
        %v533 = vld [vmem:[#allocation6 + $0x38] sm:$0xff]
        %v534 = vld [vmem:[#allocation6 + $0x40] sm:$0xff]
        %v535 = vld [vmem:[#allocation6 + $0x48] sm:$0xff]
        %v536 = vld [vmem:[#allocation6 + $0x50] sm:$0xff]
        %v537 = vld [vmem:[#allocation6 + $0x58] sm:$0xff]
        %v538 = vld [vmem:[#allocation6 + $0x60] sm:$0xff]
        %v539 = vld [vmem:[#allocation6 + $0x68] sm:$0xff]
        %v540 = vld [vmem:[#allocation6 + $0x70] sm:$0xff]
        %v541 = vld [vmem:[#allocation6 + $0x78] sm:$0xff]
        %v542 = vld [vmem:[#allocation6 + $0x80] sm:$0xff]
        %v543 = vld [vmem:[#allocation6 + $0x88] sm:$0xff]
        %v544 = vld [vmem:[#allocation6 + $0x90] sm:$0xff]
        %v545 = vld [vmem:[#allocation6 + $0x98] sm:$0xff]
        %v546 = vld [vmem:[#allocation6 + $0xa0] sm:$0xff]
        %v547 = vld [vmem:[#allocation6 + $0xa8] sm:$0xff]
        %v548 = vld [vmem:[#allocation6 + $0xb0] sm:$0xff]
        %v549 = vld [vmem:[#allocation6 + $0xb8] sm:$0xff]
        %v550 = vld [vmem:[#allocation6 + $0xc0] sm:$0xff]
        %v551 = vld [vmem:[#allocation6 + $0xc8] sm:$0xff]
        %v552 = vld [vmem:[#allocation6 + $0xd0] sm:$0xff]
        %v553 = vld [vmem:[#allocation6 + $0xd8] sm:$0xff]
        %v554 = vld [vmem:[#allocation6 + $0xe0] sm:$0xff]
        %v555 = vld [vmem:[#allocation6 + $0xe8] sm:$0xff]
        %v556 = vld [vmem:[#allocation6 + $0xf0] sm:$0xff]
        %v557 = vld [vmem:[#allocation6 + $0xf8] sm:$0xff]
        %v558 = vld [vmem:[#allocation6 + $0x100] sm:$0xff]
        %v559 = vld [vmem:[#allocation6 + $0x108] sm:$0xff]
        %v560 = vld [vmem:[#allocation6 + $0x110] sm:$0xff]
        %v561 = vld [vmem:[#allocation6 + $0x118] sm:$0xff]
        %v562 = vld [vmem:[#allocation6 + $0x120] sm:$0xff]
        %v563 = vld [vmem:[#allocation6 + $0x128] sm:$0xff]
        %v564 = vld [vmem:[#allocation6 + $0x130] sm:$0xff]
        %v565 = vld [vmem:[#allocation6 + $0x138] sm:$0xff]
        %v566 = vld [vmem:[#allocation6 + $0x140] sm:$0xff]
        %v567 = vld [vmem:[#allocation6 + $0x148] sm:$0xff]
        %v568 = vld [vmem:[#allocation6 + $0x150] sm:$0xff]
        %v569 = vld [vmem:[#allocation6 + $0x158] sm:$0xff]
        %v570 = vld [vmem:[#allocation6 + $0x160] sm:$0xff]
        %v571 = vld [vmem:[#allocation6 + $0x168] sm:$0xff]
        %v572 = vld [vmem:[#allocation6 + $0x170] sm:$0xff]
        %v573 = vld [vmem:[#allocation6 + $0x178] sm:$0xff]
        %v574 = vld [vmem:[#allocation6 + $0x180] sm:$0xff]
        %v575 = vld [vmem:[#allocation6 + $0x188] sm:$0xff]
        %v576 = vld [vmem:[#allocation6 + $0x190] sm:$0xff]
        %v577 = vld [vmem:[#allocation6 + $0x198] sm:$0xff]
        %v578 = vld [vmem:[#allocation6 + $0x1a0] sm:$0xff]
        %v579 = vld [vmem:[#allocation6 + $0x1a8] sm:$0xff]
        %v580 = vld [vmem:[#allocation6 + $0x1b0] sm:$0xff]
        %v581 = vld [vmem:[#allocation6 + $0x1b8] sm:$0xff]
        %v582 = vld [vmem:[#allocation6 + $0x1c0] sm:$0xff]
        %v583 = vld [vmem:[#allocation6 + $0x1c8] sm:$0xff]
        %v584 = vld [vmem:[#allocation6 + $0x1d0] sm:$0xff]
        %v585 = vld [vmem:[#allocation6 + $0x1d8] sm:$0xff]
        %v586 = vld [vmem:[#allocation6 + $0x1e0] sm:$0xff]
        %v587 = vld [vmem:[#allocation6 + $0x1e8] sm:$0xff]
        %v588 = vld [vmem:[#allocation6 + $0x1f0] sm:$0xff]
        %v589 = vld [vmem:[#allocation6 + $0x1f8] sm:$0xff]
        %590 = vmatprep.subr.mxu0 %v527
        %591 = vmatpush1.msra.mxu0 %v526
        %592 = vmatprep.subr.mxu0 %v531
        %593 = vmatpush1.msra.mxu0 %v530
        %594 = vmatprep.subr.mxu0 %v535
        %595 = vmatpush1.msra.mxu0 %v534
        %596 = vmatprep.subr.mxu0 %v539
        %597 = vmatpush1.msra.mxu0 %v538
        %598 = vmatprep.subr.mxu0 %v543
        %599 = vmatpush1.msra.mxu0 %v542
        %600 = vmatprep.subr.mxu0 %v547
        %601 = vmatpush1.msra.mxu0 %v546
        %602 = vmatprep.subr.mxu0 %v551
        %603 = vmatpush1.msra.mxu0 %v550
        %604 = vmatprep.subr.mxu0 %v555
        %605 = vmatpush1.msra.mxu0 %v554
        %606 = vmatprep.subr.mxu0 %v559
        %607 = vmatpush1.msra.mxu0 %v558
        %608 = vmatprep.subr.mxu0 %v563
        %609 = vmatpush1.msra.mxu0 %v562
        %610 = vmatprep.subr.mxu0 %v567
        %611 = vmatpush1.msra.mxu0 %v566
        %612 = vmatprep.subr.mxu0 %v571
        %613 = vmatpush1.msra.mxu0 %v570
        %614 = vmatprep.subr.mxu0 %v575
        %615 = vmatpush1.msra.mxu0 %v574
        %616 = vmatprep.subr.mxu0 %v579
        %617 = vmatpush1.msra.mxu0 %v578
        %618 = vmatprep.subr.mxu0 %v583
        %619 = vmatpush1.msra.mxu0 %v582
        %620 = vmatprep.subr.mxu0 %v587
        %621 = vmatpush1.msra.mxu0 %v586
        %622 = vmatprep.subr.mxu0 0.0
        %623 = vmatpush1.msra.mxu0 0.0
        %624 = vmatprep.subr.mxu0 0.0
        %625 = vmatpush1.msra.mxu0 0.0
        %626 = vmatprep.subr.mxu0 0.0
        %627 = vmatpush1.msra.mxu0 0.0
        %628 = vmatprep.subr.mxu0 0.0
        %629 = vmatpush1.msra.mxu0 0.0
        %630 = vmatprep.subr.mxu0 0.0
        %631 = vmatpush1.msra.mxu0 0.0
        %632 = vmatprep.subr.mxu0 0.0
        %633 = vmatpush1.msra.mxu0 0.0
        %634 = vmatprep.subr.mxu0 0.0
        %635 = vmatpush1.msra.mxu0 0.0
        %636 = vmatprep.subr.mxu0 0.0
        %637 = vmatpush1.msra.mxu0 0.0
        %638 = vmatprep.subr.mxu0 0.0
        %639 = vmatpush1.msra.mxu0 0.0
        %640 = vmatprep.subr.mxu0 0.0
        %641 = vmatpush1.msra.mxu0 0.0
        %642 = vmatprep.subr.mxu0 0.0
        %643 = vmatpush1.msra.mxu0 0.0
        %644 = vmatprep.subr.mxu0 0.0
        %645 = vmatpush1.msra.mxu0 0.0
        %646 = vmatprep.subr.mxu0 0.0
        %647 = vmatpush1.msra.mxu0 0.0
        %648 = vmatprep.subr.mxu0 0.0
        %649 = vmatpush1.msra.mxu0 0.0
        %650 = vmatprep.subr.mxu0 0.0
        %651 = vmatpush1.msra.mxu0 0.0
        %652 = vmatprep.subr.mxu0 0.0
        %653 = vmatpush1.msra.mxu0 0.0
        %654 = vmatprep.mubr.f32.mxu0 0.0
        %655 = vmatmul.mubr.f32.gmra.mrb[0].mxu0 %v519
        %v656 = vpop.f32.mrb[0].mxu0
        %v657 = vadd.f32 0.0, %v656
        %v658 = vpop.f32.mrb[0].mxu0
        %v659 = vadd.f32 0.0, %v658
        %660 = vdwg.mxu0
        %661 = vmatprep.subr.mxu0 %v529
        %662 = vmatpush1.msra.mxu0 %v528
        %663 = vmatprep.subr.mxu0 %v533
        %664 = vmatpush1.msra.mxu0 %v532
        %665 = vmatprep.subr.mxu0 %v537
        %666 = vmatpush1.msra.mxu0 %v536
        %667 = vmatprep.subr.mxu0 %v541
        %668 = vmatpush1.msra.mxu0 %v540
        %669 = vmatprep.subr.mxu0 %v545
        %670 = vmatpush1.msra.mxu0 %v544
        %671 = vmatprep.subr.mxu0 %v549
        %672 = vmatpush1.msra.mxu0 %v548
        %673 = vmatprep.subr.mxu0 %v553
        %674 = vmatpush1.msra.mxu0 %v552
        %675 = vmatprep.subr.mxu0 %v557
        %676 = vmatpush1.msra.mxu0 %v556
        %677 = vmatprep.subr.mxu0 %v561
        %678 = vmatpush1.msra.mxu0 %v560
        %679 = vmatprep.subr.mxu0 %v565
        %680 = vmatpush1.msra.mxu0 %v564
        %681 = vmatprep.subr.mxu0 %v569
        %682 = vmatpush1.msra.mxu0 %v568
        %683 = vmatprep.subr.mxu0 %v573
        %684 = vmatpush1.msra.mxu0 %v572
        %685 = vmatprep.subr.mxu0 %v577
        %686 = vmatpush1.msra.mxu0 %v576
        %687 = vmatprep.subr.mxu0 %v581
        %688 = vmatpush1.msra.mxu0 %v580
        %689 = vmatprep.subr.mxu0 %v585
        %690 = vmatpush1.msra.mxu0 %v584
        %691 = vmatprep.subr.mxu0 %v589
        %692 = vmatpush1.msra.mxu0 %v588
        %693 = vmatprep.subr.mxu0 0.0
        %694 = vmatpush1.msra.mxu0 0.0
        %695 = vmatprep.subr.mxu0 0.0
        %696 = vmatpush1.msra.mxu0 0.0
        %697 = vmatprep.subr.mxu0 0.0
        %698 = vmatpush1.msra.mxu0 0.0
        %699 = vmatprep.subr.mxu0 0.0
        %700 = vmatpush1.msra.mxu0 0.0
        %701 = vmatprep.subr.mxu0 0.0
        %702 = vmatpush1.msra.mxu0 0.0
        %703 = vmatprep.subr.mxu0 0.0
        %704 = vmatpush1.msra.mxu0 0.0
        %705 = vmatprep.subr.mxu0 0.0
        %706 = vmatpush1.msra.mxu0 0.0
        %707 = vmatprep.subr.mxu0 0.0
        %708 = vmatpush1.msra.mxu0 0.0
        %709 = vmatprep.subr.mxu0 0.0
        %710 = vmatpush1.msra.mxu0 0.0
        %711 = vmatprep.subr.mxu0 0.0
        %712 = vmatpush1.msra.mxu0 0.0
        %713 = vmatprep.subr.mxu0 0.0
        %714 = vmatpush1.msra.mxu0 0.0
        %715 = vmatprep.subr.mxu0 0.0
        %716 = vmatpush1.msra.mxu0 0.0
        %717 = vmatprep.subr.mxu0 0.0
        %718 = vmatpush1.msra.mxu0 0.0
        %719 = vmatprep.subr.mxu0 0.0
        %720 = vmatpush1.msra.mxu0 0.0
        %721 = vmatprep.subr.mxu0 0.0
        %722 = vmatpush1.msra.mxu0 0.0
        %723 = vmatprep.subr.mxu0 0.0
        %724 = vmatpush1.msra.mxu0 0.0
        %725 = vmatprep.mubr.f32.mxu0 0.0
        %726 = vmatmul.mubr.f32.gmra.mrb[0].mxu0 %v519
        %v727 = vpop.f32.mrb[0].mxu0
        %v728 = vadd.f32 0.0, %v727
        %v729 = vpop.f32.mrb[0].mxu0
        %v730 = vadd.f32 0.0, %v729
        %731 = vdwg.mxu0
        %v732 = vadd.f32 %v522, %v657
        %v733 = vadd.f32 %v523, %v659
        %v734 = vadd.f32 %v524, %v728
        %v735 = vadd.f32 %v525, %v730
        %v736 = vxor.u32 %v732, 2147483648
        %v737 = vmul.f32 %v736, 1.442695
        %v738 = vpow.pop %v737
        %v739 = vadd.f32 %v738, 1.0
        %v740 = vrcp.pop %v739
        %v741 = vmul.f32 1.0, %v740
        %v742 = vxor.u32 %v733, 2147483648
        %v743 = vmul.f32 %v742, 1.442695
        %v744 = vpow.pop %v743
        %v745 = vadd.f32 %v744, 1.0
        %v746 = vrcp.pop %v745
        %v747 = vmul.f32 1.0, %v746
        %v748 = vtanh.pop %v734
        %v749 = vxor.u32 %v735, 2147483648
        %v750 = vmul.f32 %v749, 1.442695
        %v751 = vpow.pop %v750
        %v752 = vadd.f32 %v751, 1.0
        %v753 = vrcp.pop %v752
        %v754 = vmul.f32 1.0, %v753
        %v755 = vmul.f32 %v747, %v517
        %v756 = vmul.f32 %v741, %v748
        %v757 = vadd.f32 %v755, %v756
        %v758 = vtanh.pop %v757
        %v759 = vmul.f32 %v754, %v758
        %s760 = scalar_lea.vmem [#allocation4], 8
        %761 = vst [vmem:[%s760] sm:$0xff] %v759
        %s762 = scalar_lea.vmem %s270, 64
        %v763 = vld [vmem:[%s762] sm:$0xff]
        %v764 = vld [vmem:[%s762 + $0x8] sm:$0xff]
        %v765 = vld [vmem:[%s762 + $0x10] sm:$0xff]
        %v766 = vld [vmem:[%s762 + $0x18] sm:$0xff]
        %v767 = vld [vmem:[#allocation6] sm:$0xff]
        %v768 = vld [vmem:[#allocation6 + $0x8] sm:$0xff]
        %v769 = vld [vmem:[#allocation6 + $0x10] sm:$0xff]
        %v770 = vld [vmem:[#allocation6 + $0x18] sm:$0xff]
        %v771 = vld [vmem:[#allocation6 + $0x20] sm:$0xff]
        %v772 = vld [vmem:[#allocation6 + $0x28] sm:$0xff]
        %v773 = vld [vmem:[#allocation6 + $0x30] sm:$0xff]
        %v774 = vld [vmem:[#allocation6 + $0x38] sm:$0xff]
        %v775 = vld [vmem:[#allocation6 + $0x40] sm:$0xff]
        %v776 = vld [vmem:[#allocation6 + $0x48] sm:$0xff]
        %v777 = vld [vmem:[#allocation6 + $0x50] sm:$0xff]
        %v778 = vld [vmem:[#allocation6 + $0x58] sm:$0xff]
        %v779 = vld [vmem:[#allocation6 + $0x60] sm:$0xff]
        %v780 = vld [vmem:[#allocation6 + $0x68] sm:$0xff]
        %v781 = vld [vmem:[#allocation6 + $0x70] sm:$0xff]
        %v782 = vld [vmem:[#allocation6 + $0x78] sm:$0xff]
        %v783 = vld [vmem:[#allocation6 + $0x80] sm:$0xff]
        %v784 = vld [vmem:[#allocation6 + $0x88] sm:$0xff]
        %v785 = vld [vmem:[#allocation6 + $0x90] sm:$0xff]
        %v786 = vld [vmem:[#allocation6 + $0x98] sm:$0xff]
        %v787 = vld [vmem:[#allocation6 + $0xa0] sm:$0xff]
        %v788 = vld [vmem:[#allocation6 + $0xa8] sm:$0xff]
        %v789 = vld [vmem:[#allocation6 + $0xb0] sm:$0xff]
        %v790 = vld [vmem:[#allocation6 + $0xb8] sm:$0xff]
        %v791 = vld [vmem:[#allocation6 + $0xc0] sm:$0xff]
        %v792 = vld [vmem:[#allocation6 + $0xc8] sm:$0xff]
        %v793 = vld [vmem:[#allocation6 + $0xd0] sm:$0xff]
        %v794 = vld [vmem:[#allocation6 + $0xd8] sm:$0xff]
        %v795 = vld [vmem:[#allocation6 + $0xe0] sm:$0xff]
        %v796 = vld [vmem:[#allocation6 + $0xe8] sm:$0xff]
        %v797 = vld [vmem:[#allocation6 + $0xf0] sm:$0xff]
        %v798 = vld [vmem:[#allocation6 + $0xf8] sm:$0xff]
        %v799 = vld [vmem:[#allocation6 + $0x100] sm:$0xff]
        %v800 = vld [vmem:[#allocation6 + $0x108] sm:$0xff]
        %v801 = vld [vmem:[#allocation6 + $0x110] sm:$0xff]
        %v802 = vld [vmem:[#allocation6 + $0x118] sm:$0xff]
        %v803 = vld [vmem:[#allocation6 + $0x120] sm:$0xff]
        %v804 = vld [vmem:[#allocation6 + $0x128] sm:$0xff]
        %v805 = vld [vmem:[#allocation6 + $0x130] sm:$0xff]
        %v806 = vld [vmem:[#allocation6 + $0x138] sm:$0xff]
        %v807 = vld [vmem:[#allocation6 + $0x140] sm:$0xff]
        %v808 = vld [vmem:[#allocation6 + $0x148] sm:$0xff]
        %v809 = vld [vmem:[#allocation6 + $0x150] sm:$0xff]
        %v810 = vld [vmem:[#allocation6 + $0x158] sm:$0xff]
        %v811 = vld [vmem:[#allocation6 + $0x160] sm:$0xff]
        %v812 = vld [vmem:[#allocation6 + $0x168] sm:$0xff]
        %v813 = vld [vmem:[#allocation6 + $0x170] sm:$0xff]
        %v814 = vld [vmem:[#allocation6 + $0x178] sm:$0xff]
        %v815 = vld [vmem:[#allocation6 + $0x180] sm:$0xff]
        %v816 = vld [vmem:[#allocation6 + $0x188] sm:$0xff]
        %v817 = vld [vmem:[#allocation6 + $0x190] sm:$0xff]
        %v818 = vld [vmem:[#allocation6 + $0x198] sm:$0xff]
        %v819 = vld [vmem:[#allocation6 + $0x1a0] sm:$0xff]
        %v820 = vld [vmem:[#allocation6 + $0x1a8] sm:$0xff]
        %v821 = vld [vmem:[#allocation6 + $0x1b0] sm:$0xff]
        %v822 = vld [vmem:[#allocation6 + $0x1b8] sm:$0xff]
        %v823 = vld [vmem:[#allocation6 + $0x1c0] sm:$0xff]
        %v824 = vld [vmem:[#allocation6 + $0x1c8] sm:$0xff]
        %v825 = vld [vmem:[#allocation6 + $0x1d0] sm:$0xff]
        %v826 = vld [vmem:[#allocation6 + $0x1d8] sm:$0xff]
        %v827 = vld [vmem:[#allocation6 + $0x1e0] sm:$0xff]
        %v828 = vld [vmem:[#allocation6 + $0x1e8] sm:$0xff]
        %v829 = vld [vmem:[#allocation6 + $0x1f0] sm:$0xff]
        %v830 = vld [vmem:[#allocation6 + $0x1f8] sm:$0xff]
        %831 = vmatprep.subr.mxu0 %v768
        %832 = vmatpush1.msra.mxu0 %v767
        %833 = vmatprep.subr.mxu0 %v772
        %834 = vmatpush1.msra.mxu0 %v771
        %835 = vmatprep.subr.mxu0 %v776
        %836 = vmatpush1.msra.mxu0 %v775
        %837 = vmatprep.subr.mxu0 %v780
        %838 = vmatpush1.msra.mxu0 %v779
        %839 = vmatprep.subr.mxu0 %v784
        %840 = vmatpush1.msra.mxu0 %v783
        %841 = vmatprep.subr.mxu0 %v788
        %842 = vmatpush1.msra.mxu0 %v787
        %843 = vmatprep.subr.mxu0 %v792
        %844 = vmatpush1.msra.mxu0 %v791
        %845 = vmatprep.subr.mxu0 %v796
        %846 = vmatpush1.msra.mxu0 %v795
        %847 = vmatprep.subr.mxu0 %v800
        %848 = vmatpush1.msra.mxu0 %v799
        %849 = vmatprep.subr.mxu0 %v804
        %850 = vmatpush1.msra.mxu0 %v803
        %851 = vmatprep.subr.mxu0 %v808
        %852 = vmatpush1.msra.mxu0 %v807
        %853 = vmatprep.subr.mxu0 %v812
        %854 = vmatpush1.msra.mxu0 %v811
        %855 = vmatprep.subr.mxu0 %v816
        %856 = vmatpush1.msra.mxu0 %v815
        %857 = vmatprep.subr.mxu0 %v820
        %858 = vmatpush1.msra.mxu0 %v819
        %859 = vmatprep.subr.mxu0 %v824
        %860 = vmatpush1.msra.mxu0 %v823
        %861 = vmatprep.subr.mxu0 %v828
        %862 = vmatpush1.msra.mxu0 %v827
        %863 = vmatprep.subr.mxu0 0.0
        %864 = vmatpush1.msra.mxu0 0.0
        %865 = vmatprep.subr.mxu0 0.0
        %866 = vmatpush1.msra.mxu0 0.0
        %867 = vmatprep.subr.mxu0 0.0
        %868 = vmatpush1.msra.mxu0 0.0
        %869 = vmatprep.subr.mxu0 0.0
        %870 = vmatpush1.msra.mxu0 0.0
        %871 = vmatprep.subr.mxu0 0.0
        %872 = vmatpush1.msra.mxu0 0.0
        %873 = vmatprep.subr.mxu0 0.0
        %874 = vmatpush1.msra.mxu0 0.0
        %875 = vmatprep.subr.mxu0 0.0
        %876 = vmatpush1.msra.mxu0 0.0
        %877 = vmatprep.subr.mxu0 0.0
        %878 = vmatpush1.msra.mxu0 0.0
        %879 = vmatprep.subr.mxu0 0.0
        %880 = vmatpush1.msra.mxu0 0.0
        %881 = vmatprep.subr.mxu0 0.0
        %882 = vmatpush1.msra.mxu0 0.0
        %883 = vmatprep.subr.mxu0 0.0
        %884 = vmatpush1.msra.mxu0 0.0
        %885 = vmatprep.subr.mxu0 0.0
        %886 = vmatpush1.msra.mxu0 0.0
        %887 = vmatprep.subr.mxu0 0.0
        %888 = vmatpush1.msra.mxu0 0.0
        %889 = vmatprep.subr.mxu0 0.0
        %890 = vmatpush1.msra.mxu0 0.0
        %891 = vmatprep.subr.mxu0 0.0
        %892 = vmatpush1.msra.mxu0 0.0
        %893 = vmatprep.subr.mxu0 0.0
        %894 = vmatpush1.msra.mxu0 0.0
        %895 = vmatprep.mubr.f32.mxu0 0.0
        %896 = vmatmul.mubr.f32.gmra.mrb[0].mxu0 %v759
        %v897 = vpop.f32.mrb[0].mxu0
        %v898 = vadd.f32 0.0, %v897
        %v899 = vpop.f32.mrb[0].mxu0
        %v900 = vadd.f32 0.0, %v899
        %901 = vdwg.mxu0
        %902 = vmatprep.subr.mxu0 %v770
        %903 = vmatpush1.msra.mxu0 %v769
        %904 = vmatprep.subr.mxu0 %v774
        %905 = vmatpush1.msra.mxu0 %v773
        %906 = vmatprep.subr.mxu0 %v778
        %907 = vmatpush1.msra.mxu0 %v777
        %908 = vmatprep.subr.mxu0 %v782
        %909 = vmatpush1.msra.mxu0 %v781
        %910 = vmatprep.subr.mxu0 %v786
        %911 = vmatpush1.msra.mxu0 %v785
        %912 = vmatprep.subr.mxu0 %v790
        %913 = vmatpush1.msra.mxu0 %v789
        %914 = vmatprep.subr.mxu0 %v794
        %915 = vmatpush1.msra.mxu0 %v793
        %916 = vmatprep.subr.mxu0 %v798
        %917 = vmatpush1.msra.mxu0 %v797
        %918 = vmatprep.subr.mxu0 %v802
        %919 = vmatpush1.msra.mxu0 %v801
        %920 = vmatprep.subr.mxu0 %v806
        %921 = vmatpush1.msra.mxu0 %v805
        %922 = vmatprep.subr.mxu0 %v810
        %923 = vmatpush1.msra.mxu0 %v809
        %924 = vmatprep.subr.mxu0 %v814
        %925 = vmatpush1.msra.mxu0 %v813
        %926 = vmatprep.subr.mxu0 %v818
        %927 = vmatpush1.msra.mxu0 %v817
        %928 = vmatprep.subr.mxu0 %v822
        %929 = vmatpush1.msra.mxu0 %v821
        %930 = vmatprep.subr.mxu0 %v826
        %931 = vmatpush1.msra.mxu0 %v825
        %932 = vmatprep.subr.mxu0 %v830
        %933 = vmatpush1.msra.mxu0 %v829
        %934 = vmatprep.subr.mxu0 0.0
        %935 = vmatpush1.msra.mxu0 0.0
        %936 = vmatprep.subr.mxu0 0.0
        %937 = vmatpush1.msra.mxu0 0.0
        %938 = vmatprep.subr.mxu0 0.0
        %939 = vmatpush1.msra.mxu0 0.0
        %940 = vmatprep.subr.mxu0 0.0
        %941 = vmatpush1.msra.mxu0 0.0
        %942 = vmatprep.subr.mxu0 0.0
        %943 = vmatpush1.msra.mxu0 0.0
        %944 = vmatprep.subr.mxu0 0.0
        %945 = vmatpush1.msra.mxu0 0.0
        %946 = vmatprep.subr.mxu0 0.0
        %947 = vmatpush1.msra.mxu0 0.0
        %948 = vmatprep.subr.mxu0 0.0
        %949 = vmatpush1.msra.mxu0 0.0
        %950 = vmatprep.subr.mxu0 0.0
        %951 = vmatpush1.msra.mxu0 0.0
        %952 = vmatprep.subr.mxu0 0.0
        %953 = vmatpush1.msra.mxu0 0.0
        %954 = vmatprep.subr.mxu0 0.0
        %955 = vmatpush1.msra.mxu0 0.0
        %956 = vmatprep.subr.mxu0 0.0
        %957 = vmatpush1.msra.mxu0 0.0
        %958 = vmatprep.subr.mxu0 0.0
        %959 = vmatpush1.msra.mxu0 0.0
        %960 = vmatprep.subr.mxu0 0.0
        %961 = vmatpush1.msra.mxu0 0.0
        %962 = vmatprep.subr.mxu0 0.0
        %963 = vmatpush1.msra.mxu0 0.0
        %964 = vmatprep.subr.mxu0 0.0
        %965 = vmatpush1.msra.mxu0 0.0
        %966 = vmatprep.mubr.f32.mxu0 0.0
        %967 = vmatmul.mubr.f32.gmra.mrb[0].mxu0 %v759
        %v968 = vpop.f32.mrb[0].mxu0
        %v969 = vadd.f32 0.0, %v968
        %v970 = vpop.f32.mrb[0].mxu0
        %v971 = vadd.f32 0.0, %v970
        %972 = vdwg.mxu0
        %v973 = vadd.f32 %v763, %v898
        %v974 = vadd.f32 %v764, %v900
        %v975 = vadd.f32 %v765, %v969
        %v976 = vadd.f32 %v766, %v971
        %v977 = vxor.u32 %v973, 2147483648
        %v978 = vmul.f32 %v977, 1.442695
        %v979 = vpow.pop %v978
        %v980 = vadd.f32 %v979, 1.0
        %v981 = vrcp.pop %v980
        %v982 = vmul.f32 1.0, %v981
        %v983 = vxor.u32 %v974, 2147483648
        %v984 = vmul.f32 %v983, 1.442695
        %v985 = vpow.pop %v984
        %v986 = vadd.f32 %v985, 1.0
        %v987 = vrcp.pop %v986
        %v988 = vmul.f32 1.0, %v987
        %v989 = vtanh.pop %v975
        %v990 = vxor.u32 %v976, 2147483648
        %v991 = vmul.f32 %v990, 1.442695
        %v992 = vpow.pop %v991
        %v993 = vadd.f32 %v992, 1.0
        %v994 = vrcp.pop %v993
        %v995 = vmul.f32 1.0, %v994
        %v996 = vmul.f32 %v988, %v757
        %v997 = vmul.f32 %v982, %v989
        %v998 = vadd.f32 %v996, %v997
        %v999 = vtanh.pop %v998
        %v1000 = vmul.f32 %v995, %v999
        %s1001 = scalar_lea.vmem [#allocation4], 16
        %1002 = vst [vmem:[%s1001] sm:$0xff] %v1000
        %s1003 = scalar_lea.vmem %s270, 96
        %v1004 = vld [vmem:[%s1003] sm:$0xff]
        %v1005 = vld [vmem:[%s1003 + $0x8] sm:$0xff]
        %v1006 = vld [vmem:[%s1003 + $0x10] sm:$0xff]
        %v1007 = vld [vmem:[%s1003 + $0x18] sm:$0xff]
        %v1008 = vld [vmem:[#allocation6] sm:$0xff]
        %v1009 = vld [vmem:[#allocation6 + $0x8] sm:$0xff]
        %v1010 = vld [vmem:[#allocation6 + $0x10] sm:$0xff]
        %v1011 = vld [vmem:[#allocation6 + $0x18] sm:$0xff]
        %v1012 = vld [vmem:[#allocation6 + $0x20] sm:$0xff]
        %v1013 = vld [vmem:[#allocation6 + $0x28] sm:$0xff]
        %v1014 = vld [vmem:[#allocation6 + $0x30] sm:$0xff]
        %v1015 = vld [vmem:[#allocation6 + $0x38] sm:$0xff]
        %v1016 = vld [vmem:[#allocation6 + $0x40] sm:$0xff]
        %v1017 = vld [vmem:[#allocation6 + $0x48] sm:$0xff]
        %v1018 = vld [vmem:[#allocation6 + $0x50] sm:$0xff]
        %v1019 = vld [vmem:[#allocation6 + $0x58] sm:$0xff]
        %v1020 = vld [vmem:[#allocation6 + $0x60] sm:$0xff]
        %v1021 = vld [vmem:[#allocation6 + $0x68] sm:$0xff]
        %v1022 = vld [vmem:[#allocation6 + $0x70] sm:$0xff]
        %v1023 = vld [vmem:[#allocation6 + $0x78] sm:$0xff]
        %v1024 = vld [vmem:[#allocation6 + $0x80] sm:$0xff]
        %v1025 = vld [vmem:[#allocation6 + $0x88] sm:$0xff]
        %v1026 = vld [vmem:[#allocation6 + $0x90] sm:$0xff]
        %v1027 = vld [vmem:[#allocation6 + $0x98] sm:$0xff]
        %v1028 = vld [vmem:[#allocation6 + $0xa0] sm:$0xff]
        %v1029 = vld [vmem:[#allocation6 + $0xa8] sm:$0xff]
        %v1030 = vld [vmem:[#allocation6 + $0xb0] sm:$0xff]
        %v1031 = vld [vmem:[#allocation6 + $0xb8] sm:$0xff]
        %v1032 = vld [vmem:[#allocation6 + $0xc0] sm:$0xff]
        %v1033 = vld [vmem:[#allocation6 + $0xc8] sm:$0xff]
        %v1034 = vld [vmem:[#allocation6 + $0xd0] sm:$0xff]
        %v1035 = vld [vmem:[#allocation6 + $0xd8] sm:$0xff]
        %v1036 = vld [vmem:[#allocation6 + $0xe0] sm:$0xff]
        %v1037 = vld [vmem:[#allocation6 + $0xe8] sm:$0xff]
        %v1038 = vld [vmem:[#allocation6 + $0xf0] sm:$0xff]
        %v1039 = vld [vmem:[#allocation6 + $0xf8] sm:$0xff]
        %v1040 = vld [vmem:[#allocation6 + $0x100] sm:$0xff]
        %v1041 = vld [vmem:[#allocation6 + $0x108] sm:$0xff]
        %v1042 = vld [vmem:[#allocation6 + $0x110] sm:$0xff]
        %v1043 = vld [vmem:[#allocation6 + $0x118] sm:$0xff]
        %v1044 = vld [vmem:[#allocation6 + $0x120] sm:$0xff]
        %v1045 = vld [vmem:[#allocation6 + $0x128] sm:$0xff]
        %v1046 = vld [vmem:[#allocation6 + $0x130] sm:$0xff]
        %v1047 = vld [vmem:[#allocation6 + $0x138] sm:$0xff]
        %v1048 = vld [vmem:[#allocation6 + $0x140] sm:$0xff]
        %v1049 = vld [vmem:[#allocation6 + $0x148] sm:$0xff]
        %v1050 = vld [vmem:[#allocation6 + $0x150] sm:$0xff]
        %v1051 = vld [vmem:[#allocation6 + $0x158] sm:$0xff]
        %v1052 = vld [vmem:[#allocation6 + $0x160] sm:$0xff]
        %v1053 = vld [vmem:[#allocation6 + $0x168] sm:$0xff]
        %v1054 = vld [vmem:[#allocation6 + $0x170] sm:$0xff]
        %v1055 = vld [vmem:[#allocation6 + $0x178] sm:$0xff]
        %v1056 = vld [vmem:[#allocation6 + $0x180] sm:$0xff]
        %v1057 = vld [vmem:[#allocation6 + $0x188] sm:$0xff]
        %v1058 = vld [vmem:[#allocation6 + $0x190] sm:$0xff]
        %v1059 = vld [vmem:[#allocation6 + $0x198] sm:$0xff]
        %v1060 = vld [vmem:[#allocation6 + $0x1a0] sm:$0xff]
        %v1061 = vld [vmem:[#allocation6 + $0x1a8] sm:$0xff]
        %v1062 = vld [vmem:[#allocation6 + $0x1b0] sm:$0xff]
        %v1063 = vld [vmem:[#allocation6 + $0x1b8] sm:$0xff]
        %v1064 = vld [vmem:[#allocation6 + $0x1c0] sm:$0xff]
        %v1065 = vld [vmem:[#allocation6 + $0x1c8] sm:$0xff]
        %v1066 = vld [vmem:[#allocation6 + $0x1d0] sm:$0xff]
        %v1067 = vld [vmem:[#allocation6 + $0x1d8] sm:$0xff]
        %v1068 = vld [vmem:[#allocation6 + $0x1e0] sm:$0xff]
        %v1069 = vld [vmem:[#allocation6 + $0x1e8] sm:$0xff]
        %v1070 = vld [vmem:[#allocation6 + $0x1f0] sm:$0xff]
        %v1071 = vld [vmem:[#allocation6 + $0x1f8] sm:$0xff]
        %1072 = vmatprep.subr.mxu0 %v1009
        %1073 = vmatpush1.msra.mxu0 %v1008
        %1074 = vmatprep.subr.mxu0 %v1013
        %1075 = vmatpush1.msra.mxu0 %v1012
        %1076 = vmatprep.subr.mxu0 %v1017
        %1077 = vmatpush1.msra.mxu0 %v1016
        %1078 = vmatprep.subr.mxu0 %v1021
        %1079 = vmatpush1.msra.mxu0 %v1020
        %1080 = vmatprep.subr.mxu0 %v1025
        %1081 = vmatpush1.msra.mxu0 %v1024
        %1082 = vmatprep.subr.mxu0 %v1029
        %1083 = vmatpush1.msra.mxu0 %v1028
        %1084 = vmatprep.subr.mxu0 %v1033
        %1085 = vmatpush1.msra.mxu0 %v1032
        %1086 = vmatprep.subr.mxu0 %v1037
        %1087 = vmatpush1.msra.mxu0 %v1036
        %1088 = vmatprep.subr.mxu0 %v1041
        %1089 = vmatpush1.msra.mxu0 %v1040
        %1090 = vmatprep.subr.mxu0 %v1045
        %1091 = vmatpush1.msra.mxu0 %v1044
        %1092 = vmatprep.subr.mxu0 %v1049
        %1093 = vmatpush1.msra.mxu0 %v1048
        %1094 = vmatprep.subr.mxu0 %v1053
        %1095 = vmatpush1.msra.mxu0 %v1052
        %1096 = vmatprep.subr.mxu0 %v1057
        %1097 = vmatpush1.msra.mxu0 %v1056
        %1098 = vmatprep.subr.mxu0 %v1061
        %1099 = vmatpush1.msra.mxu0 %v1060
        %1100 = vmatprep.subr.mxu0 %v1065
        %1101 = vmatpush1.msra.mxu0 %v1064
        %1102 = vmatprep.subr.mxu0 %v1069
        %1103 = vmatpush1.msra.mxu0 %v1068
        %1104 = vmatprep.subr.mxu0 0.0
        %1105 = vmatpush1.msra.mxu0 0.0
        %1106 = vmatprep.subr.mxu0 0.0
        %1107 = vmatpush1.msra.mxu0 0.0
        %1108 = vmatprep.subr.mxu0 0.0
        %1109 = vmatpush1.msra.mxu0 0.0
        %1110 = vmatprep.subr.mxu0 0.0
        %1111 = vmatpush1.msra.mxu0 0.0
        %1112 = vmatprep.subr.mxu0 0.0
        %1113 = vmatpush1.msra.mxu0 0.0
        %1114 = vmatprep.subr.mxu0 0.0
        %1115 = vmatpush1.msra.mxu0 0.0
        %1116 = vmatprep.subr.mxu0 0.0
        %1117 = vmatpush1.msra.mxu0 0.0
        %1118 = vmatprep.subr.mxu0 0.0
        %1119 = vmatpush1.msra.mxu0 0.0
        %1120 = vmatprep.subr.mxu0 0.0
        %1121 = vmatpush1.msra.mxu0 0.0
        %1122 = vmatprep.subr.mxu0 0.0
        %1123 = vmatpush1.msra.mxu0 0.0
        %1124 = vmatprep.subr.mxu0 0.0
        %1125 = vmatpush1.msra.mxu0 0.0
        %1126 = vmatprep.subr.mxu0 0.0
        %1127 = vmatpush1.msra.mxu0 0.0
        %1128 = vmatprep.subr.mxu0 0.0
        %1129 = vmatpush1.msra.mxu0 0.0
        %1130 = vmatprep.subr.mxu0 0.0
        %1131 = vmatpush1.msra.mxu0 0.0
        %1132 = vmatprep.subr.mxu0 0.0
        %1133 = vmatpush1.msra.mxu0 0.0
        %1134 = vmatprep.subr.mxu0 0.0
        %1135 = vmatpush1.msra.mxu0 0.0
        %1136 = vmatprep.mubr.f32.mxu0 0.0
        %1137 = vmatmul.mubr.f32.gmra.mrb[0].mxu0 %v1000
        %v1138 = vpop.f32.mrb[0].mxu0
        %v1139 = vadd.f32 0.0, %v1138
        %v1140 = vpop.f32.mrb[0].mxu0
        %v1141 = vadd.f32 0.0, %v1140
        %1142 = vdwg.mxu0
        %1143 = vmatprep.subr.mxu0 %v1011
        %1144 = vmatpush1.msra.mxu0 %v1010
        %1145 = vmatprep.subr.mxu0 %v1015
        %1146 = vmatpush1.msra.mxu0 %v1014
        %1147 = vmatprep.subr.mxu0 %v1019
        %1148 = vmatpush1.msra.mxu0 %v1018
        %1149 = vmatprep.subr.mxu0 %v1023
        %1150 = vmatpush1.msra.mxu0 %v1022
        %1151 = vmatprep.subr.mxu0 %v1027
        %1152 = vmatpush1.msra.mxu0 %v1026
        %1153 = vmatprep.subr.mxu0 %v1031
        %1154 = vmatpush1.msra.mxu0 %v1030
        %1155 = vmatprep.subr.mxu0 %v1035
        %1156 = vmatpush1.msra.mxu0 %v1034
        %1157 = vmatprep.subr.mxu0 %v1039
        %1158 = vmatpush1.msra.mxu0 %v1038
        %1159 = vmatprep.subr.mxu0 %v1043
        %1160 = vmatpush1.msra.mxu0 %v1042
        %1161 = vmatprep.subr.mxu0 %v1047
        %1162 = vmatpush1.msra.mxu0 %v1046
        %1163 = vmatprep.subr.mxu0 %v1051
        %1164 = vmatpush1.msra.mxu0 %v1050
        %1165 = vmatprep.subr.mxu0 %v1055
        %1166 = vmatpush1.msra.mxu0 %v1054
        %1167 = vmatprep.subr.mxu0 %v1059
        %1168 = vmatpush1.msra.mxu0 %v1058
        %1169 = vmatprep.subr.mxu0 %v1063
        %1170 = vmatpush1.msra.mxu0 %v1062
        %1171 = vmatprep.subr.mxu0 %v1067
        %1172 = vmatpush1.msra.mxu0 %v1066
        %1173 = vmatprep.subr.mxu0 %v1071
        %1174 = vmatpush1.msra.mxu0 %v1070
        %1175 = vmatprep.subr.mxu0 0.0
        %1176 = vmatpush1.msra.mxu0 0.0
        %1177 = vmatprep.subr.mxu0 0.0
        %1178 = vmatpush1.msra.mxu0 0.0
        %1179 = vmatprep.subr.mxu0 0.0
        %1180 = vmatpush1.msra.mxu0 0.0
        %1181 = vmatprep.subr.mxu0 0.0
        %1182 = vmatpush1.msra.mxu0 0.0
        %1183 = vmatprep.subr.mxu0 0.0
        %1184 = vmatpush1.msra.mxu0 0.0
        %1185 = vmatprep.subr.mxu0 0.0
        %1186 = vmatpush1.msra.mxu0 0.0
        %1187 = vmatprep.subr.mxu0 0.0
        %1188 = vmatpush1.msra.mxu0 0.0
        %1189 = vmatprep.subr.mxu0 0.0
        %1190 = vmatpush1.msra.mxu0 0.0
        %1191 = vmatprep.subr.mxu0 0.0
        %1192 = vmatpush1.msra.mxu0 0.0
        %1193 = vmatprep.subr.mxu0 0.0
        %1194 = vmatpush1.msra.mxu0 0.0
        %1195 = vmatprep.subr.mxu0 0.0
        %1196 = vmatpush1.msra.mxu0 0.0
        %1197 = vmatprep.subr.mxu0 0.0
        %1198 = vmatpush1.msra.mxu0 0.0
        %1199 = vmatprep.subr.mxu0 0.0
        %1200 = vmatpush1.msra.mxu0 0.0
        %1201 = vmatprep.subr.mxu0 0.0
        %1202 = vmatpush1.msra.mxu0 0.0
        %1203 = vmatprep.subr.mxu0 0.0
        %1204 = vmatpush1.msra.mxu0 0.0
        %1205 = vmatprep.subr.mxu0 0.0
        %1206 = vmatpush1.msra.mxu0 0.0
        %1207 = vmatprep.mubr.f32.mxu0 0.0
        %1208 = vmatmul.mubr.f32.gmra.mrb[0].mxu0 %v1000
        %v1209 = vpop.f32.mrb[0].mxu0
        %v1210 = vadd.f32 0.0, %v1209
        %v1211 = vpop.f32.mrb[0].mxu0
        %v1212 = vadd.f32 0.0, %v1211
        %1213 = vdwg.mxu0
        %v1214 = vadd.f32 %v1004, %v1139
        %v1215 = vadd.f32 %v1005, %v1141
        %v1216 = vadd.f32 %v1006, %v1210
        %v1217 = vadd.f32 %v1007, %v1212
        %v1218 = vxor.u32 %v1214, 2147483648
        %v1219 = vmul.f32 %v1218, 1.442695
        %v1220 = vpow.pop %v1219
        %v1221 = vadd.f32 %v1220, 1.0
        %v1222 = vrcp.pop %v1221
        %v1223 = vmul.f32 1.0, %v1222
        %v1224 = vxor.u32 %v1215, 2147483648
        %v1225 = vmul.f32 %v1224, 1.442695
        %v1226 = vpow.pop %v1225
        %v1227 = vadd.f32 %v1226, 1.0
        %v1228 = vrcp.pop %v1227
        %v1229 = vmul.f32 1.0, %v1228
        %v1230 = vtanh.pop %v1216
        %v1231 = vxor.u32 %v1217, 2147483648
        %v1232 = vmul.f32 %v1231, 1.442695
        %v1233 = vpow.pop %v1232
        %v1234 = vadd.f32 %v1233, 1.0
        %v1235 = vrcp.pop %v1234
        %v1236 = vmul.f32 1.0, %v1235
        %v1237 = vmul.f32 %v1229, %v998
        %v1238 = vmul.f32 %v1223, %v1230
        %v1239 = vadd.f32 %v1237, %v1238
        %v1240 = vtanh.pop %v1239
        %v1241 = vmul.f32 %v1236, %v1240
        %s1242 = scalar_lea.vmem [#allocation4], 24
        %1243 = vst [vmem:[%s1242] sm:$0xff] %v1241
        %1244 = vst [vmem:[#allocation2] sm:$0xff] %v1241
        %1245 = vst [vmem:[#allocation3] sm:$0xff] %v1239
        %v1246 = vld [vmem:[#allocation4] sm:$0xff]
        %v1247 = vld [vmem:[#allocation4 + $0x8] sm:$0xff]
        %v1248 = vld [vmem:[#allocation4 + $0x10] sm:$0xff]
        %v1249 = vld [vmem:[#allocation4 + $0x18] sm:$0xff]
        %v1250 = vld [vmem:[%s1] sm:$0xff]
        %v1251 = vld [vmem:[%s1 + $0x8] sm:$0xff]
        %v1252 = vld [vmem:[%s1 + $0x10] sm:$0xff]
        %v1253 = vld [vmem:[%s1 + $0x18] sm:$0xff]
        %v1254 = vld [vmem:[%s1 + $0x20] sm:$0xff]
        %v1255 = vld [vmem:[%s1 + $0x28] sm:$0xff]
        %v1256 = vld [vmem:[%s1 + $0x30] sm:$0xff]
        %v1257 = vld [vmem:[%s1 + $0x38] sm:$0xff]
        %v1258 = vld [vmem:[%s1 + $0x40] sm:$0xff]
        %v1259 = vld [vmem:[%s1 + $0x48] sm:$0xff]
        %v1260 = vld [vmem:[%s1 + $0x50] sm:$0xff]
        %v1261 = vld [vmem:[%s1 + $0x58] sm:$0xff]
        %v1262 = vld [vmem:[%s1 + $0x60] sm:$0xff]
        %v1263 = vld [vmem:[%s1 + $0x68] sm:$0xff]
        %v1264 = vld [vmem:[%s1 + $0x70] sm:$0xff]
        %v1265 = vld [vmem:[%s1 + $0x78] sm:$0xff]
        %v1266 = vld [vmem:[%s1 + $0x80] sm:$0xff]
        %v1267 = vld [vmem:[%s1 + $0x88] sm:$0xff]
        %v1268 = vld [vmem:[%s1 + $0x90] sm:$0xff]
        %v1269 = vld [vmem:[%s1 + $0x98] sm:$0xff]
        %v1270 = vld [vmem:[%s1 + $0xa0] sm:$0xff]
        %v1271 = vld [vmem:[%s1 + $0xa8] sm:$0xff]
        %v1272 = vld [vmem:[%s1 + $0xb0] sm:$0xff]
        %v1273 = vld [vmem:[%s1 + $0xb8] sm:$0xff]
        %v1274 = vld [vmem:[%s1 + $0xc0] sm:$0xff]
        %v1275 = vld [vmem:[%s1 + $0xc8] sm:$0xff]
        %v1276 = vld [vmem:[%s1 + $0xd0] sm:$0xff]
        %v1277 = vld [vmem:[%s1 + $0xd8] sm:$0xff]
        %v1278 = vld [vmem:[%s1 + $0xe0] sm:$0xff]
        %v1279 = vld [vmem:[%s1 + $0xe8] sm:$0xff]
        %v1280 = vld [vmem:[%s1 + $0xf0] sm:$0xff]
        %v1281 = vld [vmem:[%s1 + $0xf8] sm:$0xff]
        %v1282 = vld [vmem:[%s1 + $0x100] sm:$0xff]
        %v1283 = vld [vmem:[%s1 + $0x108] sm:$0xff]
        %v1284 = vld [vmem:[%s1 + $0x110] sm:$0xff]
        %v1285 = vld [vmem:[%s1 + $0x118] sm:$0xff]
        %v1286 = vld [vmem:[%s1 + $0x120] sm:$0xff]
        %v1287 = vld [vmem:[%s1 + $0x128] sm:$0xff]
        %v1288 = vld [vmem:[%s1 + $0x130] sm:$0xff]
        %v1289 = vld [vmem:[%s1 + $0x138] sm:$0xff]
        %v1290 = vld [vmem:[%s1 + $0x140] sm:$0xff]
        %v1291 = vld [vmem:[%s1 + $0x148] sm:$0xff]
        %v1292 = vld [vmem:[%s1 + $0x150] sm:$0xff]
        %v1293 = vld [vmem:[%s1 + $0x158] sm:$0xff]
        %v1294 = vld [vmem:[%s1 + $0x160] sm:$0xff]
        %v1295 = vld [vmem:[%s1 + $0x168] sm:$0xff]
        %v1296 = vld [vmem:[%s1 + $0x170] sm:$0xff]
        %v1297 = vld [vmem:[%s1 + $0x178] sm:$0xff]
        %v1298 = vld [vmem:[%s1 + $0x180] sm:$0xff]
        %v1299 = vld [vmem:[%s1 + $0x188] sm:$0xff]
        %v1300 = vld [vmem:[%s1 + $0x190] sm:$0xff]
        %v1301 = vld [vmem:[%s1 + $0x198] sm:$0xff]
        %v1302 = vld [vmem:[%s1 + $0x1a0] sm:$0xff]
        %v1303 = vld [vmem:[%s1 + $0x1a8] sm:$0xff]
        %v1304 = vld [vmem:[%s1 + $0x1b0] sm:$0xff]
        %v1305 = vld [vmem:[%s1 + $0x1b8] sm:$0xff]
        %v1306 = vld [vmem:[%s1 + $0x1c0] sm:$0xff]
        %v1307 = vld [vmem:[%s1 + $0x1c8] sm:$0xff]
        %v1308 = vld [vmem:[%s1 + $0x1d0] sm:$0xff]
        %v1309 = vld [vmem:[%s1 + $0x1d8] sm:$0xff]
        %v1310 = vld [vmem:[%s1 + $0x1e0] sm:$0xff]
        %v1311 = vld [vmem:[%s1 + $0x1e8] sm:$0xff]
        %v1312 = vld [vmem:[%s1 + $0x1f0] sm:$0xff]
        %v1313 = vld [vmem:[%s1 + $0x1f8] sm:$0xff]
        %v1314 = vld [vmem:[%s2] sm:$0xf]
        %v1316 = vlaneseq
        %v1317 = vshrl.u32 %v1316, 7
        %v1318 = vsub.s32 0, %v1317
        %v1319 = vrot.slane %v1314, %v1318
        %v1320 = vlaneseq
        %v1321 = vshrl.u32 %v1320, 7
        %v1322 = vsub.s32 1, %v1321
        %v1323 = vrot.slane %v1314, %v1322
        %v1324 = vlaneseq
        %v1325 = vshrl.u32 %v1324, 7
        %v1326 = vsub.s32 2, %v1325
        %v1327 = vrot.slane %v1314, %v1326
        %v1328 = vlaneseq
        %v1329 = vshrl.u32 %v1328, 7
        %v1330 = vsub.s32 3, %v1329
        %v1331 = vrot.slane %v1314, %v1330
        %1336 = vmatprep.subr.mxu0 %v1251
        %1337 = vmatpush1.msra.mxu0 %v1250
        %1338 = vmatprep.subr.mxu0 %v1255
        %1339 = vmatpush1.msra.mxu0 %v1254
        %1340 = vmatprep.subr.mxu0 %v1259
        %1341 = vmatpush1.msra.mxu0 %v1258
        %1342 = vmatprep.subr.mxu0 %v1263
        %1343 = vmatpush1.msra.mxu0 %v1262
        %1344 = vmatprep.subr.mxu0 %v1267
        %1345 = vmatpush1.msra.mxu0 %v1266
        %1346 = vmatprep.subr.mxu0 %v1271
        %1347 = vmatpush1.msra.mxu0 %v1270
        %1348 = vmatprep.subr.mxu0 %v1275
        %1349 = vmatpush1.msra.mxu0 %v1274
        %1350 = vmatprep.subr.mxu0 %v1279
        %1351 = vmatpush1.msra.mxu0 %v1278
        %1352 = vmatprep.subr.mxu0 %v1283
        %1353 = vmatpush1.msra.mxu0 %v1282
        %1354 = vmatprep.subr.mxu0 %v1287
        %1355 = vmatpush1.msra.mxu0 %v1286
        %1356 = vmatprep.subr.mxu0 %v1291
        %1357 = vmatpush1.msra.mxu0 %v1290
        %1358 = vmatprep.subr.mxu0 %v1295
        %1359 = vmatpush1.msra.mxu0 %v1294
        %1360 = vmatprep.subr.mxu0 %v1299
        %1361 = vmatpush1.msra.mxu0 %v1298
        %1362 = vmatprep.subr.mxu0 %v1303
        %1363 = vmatpush1.msra.mxu0 %v1302
        %1364 = vmatprep.subr.mxu0 %v1307
        %1365 = vmatpush1.msra.mxu0 %v1306
        %1366 = vmatprep.subr.mxu0 %v1311
        %1367 = vmatpush1.msra.mxu0 %v1310
        %1368 = vmatprep.subr.mxu0 0.0
        %1369 = vmatpush1.msra.mxu0 0.0
        %1370 = vmatprep.subr.mxu0 0.0
        %1371 = vmatpush1.msra.mxu0 0.0
        %1372 = vmatprep.subr.mxu0 0.0
        %1373 = vmatpush1.msra.mxu0 0.0
        %1374 = vmatprep.subr.mxu0 0.0
        %1375 = vmatpush1.msra.mxu0 0.0
        %1376 = vmatprep.subr.mxu0 0.0
        %1377 = vmatpush1.msra.mxu0 0.0
        %1378 = vmatprep.subr.mxu0 0.0
        %1379 = vmatpush1.msra.mxu0 0.0
        %1380 = vmatprep.subr.mxu0 0.0
        %1381 = vmatpush1.msra.mxu0 0.0
        %1382 = vmatprep.subr.mxu0 0.0
        %1383 = vmatpush1.msra.mxu0 0.0
        %1384 = vmatprep.subr.mxu0 0.0
        %1385 = vmatpush1.msra.mxu0 0.0
        %1386 = vmatprep.subr.mxu0 0.0
        %1387 = vmatpush1.msra.mxu0 0.0
        %1388 = vmatprep.subr.mxu0 0.0
        %1389 = vmatpush1.msra.mxu0 0.0
        %1390 = vmatprep.subr.mxu0 0.0
        %1391 = vmatpush1.msra.mxu0 0.0
        %1392 = vmatprep.subr.mxu0 0.0
        %1393 = vmatpush1.msra.mxu0 0.0
        %1394 = vmatprep.subr.mxu0 0.0
        %1395 = vmatpush1.msra.mxu0 0.0
        %1396 = vmatprep.subr.mxu0 0.0
        %1397 = vmatpush1.msra.mxu0 0.0
        %1398 = vmatprep.subr.mxu0 0.0
        %1399 = vmatpush1.msra.mxu0 0.0
        %1400 = vmatprep.mubr.f32.mxu0 0.0
        %1401 = vmatmul.mubr.f32.gmra.mrb[0].mxu0 %v1246
        %v1402 = vpop.f32.mrb[0].mxu0
        %v1403 = vadd.f32 %v1319, %v1402
        %v1404 = vpop.f32.mrb[0].mxu0
        %v1405 = vadd.f32 %v1323, %v1404
        %1406 = vmatprep.mubr.f32.mxu0 0.0
        %1407 = vmatmul.mubr.f32.gmra.mrb[0].mxu0 %v1247
        %v1408 = vpop.f32.mrb[0].mxu0
        %v1409 = vadd.f32 %v1319, %v1408
        %v1410 = vpop.f32.mrb[0].mxu0
        %v1411 = vadd.f32 %v1323, %v1410
        %1412 = vmatprep.mubr.f32.mxu0 0.0
        %1413 = vmatmul.mubr.f32.gmra.mrb[0].mxu0 %v1248
        %v1414 = vpop.f32.mrb[0].mxu0
        %v1415 = vadd.f32 %v1319, %v1414
        %v1416 = vpop.f32.mrb[0].mxu0
        %v1417 = vadd.f32 %v1323, %v1416
        %1418 = vmatprep.mubr.f32.mxu0 0.0
        %1419 = vmatmul.mubr.f32.gmra.mrb[0].mxu0 %v1249
        %v1420 = vpop.f32.mrb[0].mxu0
        %v1421 = vadd.f32 %v1319, %v1420
        %v1422 = vpop.f32.mrb[0].mxu0
        %v1423 = vadd.f32 %v1323, %v1422
        %1424 = vdwg.mxu0
        %1425 = vmatprep.subr.mxu0 %v1253
        %1426 = vmatpush1.msra.mxu0 %v1252
        %1427 = vmatprep.subr.mxu0 %v1257
        %1428 = vmatpush1.msra.mxu0 %v1256
        %1429 = vmatprep.subr.mxu0 %v1261
        %1430 = vmatpush1.msra.mxu0 %v1260
        %1431 = vmatprep.subr.mxu0 %v1265
        %1432 = vmatpush1.msra.mxu0 %v1264
        %1433 = vmatprep.subr.mxu0 %v1269
        %1434 = vmatpush1.msra.mxu0 %v1268
        %1435 = vmatprep.subr.mxu0 %v1273
        %1436 = vmatpush1.msra.mxu0 %v1272
        %1437 = vmatprep.subr.mxu0 %v1277
        %1438 = vmatpush1.msra.mxu0 %v1276
        %1439 = vmatprep.subr.mxu0 %v1281
        %1440 = vmatpush1.msra.mxu0 %v1280
        %1441 = vmatprep.subr.mxu0 %v1285
        %1442 = vmatpush1.msra.mxu0 %v1284
        %1443 = vmatprep.subr.mxu0 %v1289
        %1444 = vmatpush1.msra.mxu0 %v1288
        %1445 = vmatprep.subr.mxu0 %v1293
        %1446 = vmatpush1.msra.mxu0 %v1292
        %1447 = vmatprep.subr.mxu0 %v1297
        %1448 = vmatpush1.msra.mxu0 %v1296
        %1449 = vmatprep.subr.mxu0 %v1301
        %1450 = vmatpush1.msra.mxu0 %v1300
        %1451 = vmatprep.subr.mxu0 %v1305
        %1452 = vmatpush1.msra.mxu0 %v1304
        %1453 = vmatprep.subr.mxu0 %v1309
        %1454 = vmatpush1.msra.mxu0 %v1308
        %1455 = vmatprep.subr.mxu0 %v1313
        %1456 = vmatpush1.msra.mxu0 %v1312
        %1457 = vmatprep.subr.mxu0 0.0
        %1458 = vmatpush1.msra.mxu0 0.0
        %1459 = vmatprep.subr.mxu0 0.0
        %1460 = vmatpush1.msra.mxu0 0.0
        %1461 = vmatprep.subr.mxu0 0.0
        %1462 = vmatpush1.msra.mxu0 0.0
        %1463 = vmatprep.subr.mxu0 0.0
        %1464 = vmatpush1.msra.mxu0 0.0
        %1465 = vmatprep.subr.mxu0 0.0
        %1466 = vmatpush1.msra.mxu0 0.0
        %1467 = vmatprep.subr.mxu0 0.0
        %1468 = vmatpush1.msra.mxu0 0.0
        %1469 = vmatprep.subr.mxu0 0.0
        %1470 = vmatpush1.msra.mxu0 0.0
        %1471 = vmatprep.subr.mxu0 0.0
        %1472 = vmatpush1.msra.mxu0 0.0
        %1473 = vmatprep.subr.mxu0 0.0
        %1474 = vmatpush1.msra.mxu0 0.0
        %1475 = vmatprep.subr.mxu0 0.0
        %1476 = vmatpush1.msra.mxu0 0.0
        %1477 = vmatprep.subr.mxu0 0.0
        %1478 = vmatpush1.msra.mxu0 0.0
        %1479 = vmatprep.subr.mxu0 0.0
        %1480 = vmatpush1.msra.mxu0 0.0
        %1481 = vmatprep.subr.mxu0 0.0
        %1482 = vmatpush1.msra.mxu0 0.0
        %1483 = vmatprep.subr.mxu0 0.0
        %1484 = vmatpush1.msra.mxu0 0.0
        %1485 = vmatprep.subr.mxu0 0.0
        %1486 = vmatpush1.msra.mxu0 0.0
        %1487 = vmatprep.subr.mxu0 0.0
        %1488 = vmatpush1.msra.mxu0 0.0
        %1489 = vmatprep.mubr.f32.mxu0 0.0
        %1490 = vmatmul.mubr.f32.gmra.mrb[0].mxu0 %v1246
        %v1491 = vpop.f32.mrb[0].mxu0
        %v1492 = vadd.f32 %v1327, %v1491
        %v1493 = vpop.f32.mrb[0].mxu0
        %v1494 = vadd.f32 %v1331, %v1493
        %1495 = vmatprep.mubr.f32.mxu0 0.0
        %1496 = vmatmul.mubr.f32.gmra.mrb[0].mxu0 %v1247
        %v1497 = vpop.f32.mrb[0].mxu0
        %v1498 = vadd.f32 %v1327, %v1497
        %v1499 = vpop.f32.mrb[0].mxu0
        %v1500 = vadd.f32 %v1331, %v1499
        %1501 = vmatprep.mubr.f32.mxu0 0.0
        %1502 = vmatmul.mubr.f32.gmra.mrb[0].mxu0 %v1248
        %v1503 = vpop.f32.mrb[0].mxu0
        %v1504 = vadd.f32 %v1327, %v1503
        %v1505 = vpop.f32.mrb[0].mxu0
        %v1506 = vadd.f32 %v1331, %v1505
        %1507 = vmatprep.mubr.f32.mxu0 0.0
        %1508 = vmatmul.mubr.f32.gmra.mrb[0].mxu0 %v1249
        %v1509 = vpop.f32.mrb[0].mxu0
        %v1510 = vadd.f32 %v1327, %v1509
        %v1511 = vpop.f32.mrb[0].mxu0
        %v1512 = vadd.f32 %v1331, %v1511
        %1513 = vdwg.mxu0
        %1514 = vst [vmem:[#allocation5] sm:$0xff] %v1403
        %1515 = vst [vmem:[#allocation5 + $0x8] sm:$0xff] %v1405
        %1516 = vst [vmem:[#allocation5 + $0x10] sm:$0xff] %v1492
        %1517 = vst [vmem:[#allocation5 + $0x18] sm:$0xff] %v1494
        %1518 = vst [vmem:[#allocation5 + $0x20] sm:$0xff] %v1409
        %1519 = vst [vmem:[#allocation5 + $0x28] sm:$0xff] %v1411
        %1520 = vst [vmem:[#allocation5 + $0x30] sm:$0xff] %v1498
        %1521 = vst [vmem:[#allocation5 + $0x38] sm:$0xff] %v1500
        %1522 = vst [vmem:[#allocation5 + $0x40] sm:$0xff] %v1415
        %1523 = vst [vmem:[#allocation5 + $0x48] sm:$0xff] %v1417
        %1524 = vst [vmem:[#allocation5 + $0x50] sm:$0xff] %v1504
        %1525 = vst [vmem:[#allocation5 + $0x58] sm:$0xff] %v1506
        %1526 = vst [vmem:[#allocation5 + $0x60] sm:$0xff] %v1421
        %1527 = vst [vmem:[#allocation5 + $0x68] sm:$0xff] %v1423
        %1528 = vst [vmem:[#allocation5 + $0x70] sm:$0xff] %v1510
        %1529 = vst [vmem:[#allocation5 + $0x78] sm:$0xff] %v1512
        %s1530 = scalar_lea.vmem [#allocation2], 8
        %v1531 = vld [vmem:[%s1530] sm:$0xff]
        %s1532 = scalar_lea.vmem [#allocation3], 8
        %v1533 = vld [vmem:[%s1532] sm:$0xff]
        %v1534 = vld [vmem:[#allocation5] sm:$0xff]
        %v1535 = vld [vmem:[#allocation5 + $0x8] sm:$0xff]
        %v1536 = vld [vmem:[#allocation5 + $0x10] sm:$0xff]
        %v1537 = vld [vmem:[#allocation5 + $0x18] sm:$0xff]
        %s1538 = scalar_lea.vmem [#allocation6], 512
        %v1539 = vld [vmem:[%s1538] sm:$0xff]
        %v1540 = vld [vmem:[%s1538 + $0x8] sm:$0xff]
        %v1541 = vld [vmem:[%s1538 + $0x10] sm:$0xff]
        %v1542 = vld [vmem:[%s1538 + $0x18] sm:$0xff]
        %v1543 = vld [vmem:[%s1538 + $0x20] sm:$0xff]
        %v1544 = vld [vmem:[%s1538 + $0x28] sm:$0xff]
        %v1545 = vld [vmem:[%s1538 + $0x30] sm:$0xff]
        %v1546 = vld [vmem:[%s1538 + $0x38] sm:$0xff]
        %v1547 = vld [vmem:[%s1538 + $0x40] sm:$0xff]
        %v1548 = vld [vmem:[%s1538 + $0x48] sm:$0xff]
        %v1549 = vld [vmem:[%s1538 + $0x50] sm:$0xff]
        %v1550 = vld [vmem:[%s1538 + $0x58] sm:$0xff]
        %v1551 = vld [vmem:[%s1538 + $0x60] sm:$0xff]
        %v1552 = vld [vmem:[%s1538 + $0x68] sm:$0xff]
        %v1553 = vld [vmem:[%s1538 + $0x70] sm:$0xff]
        %v1554 = vld [vmem:[%s1538 + $0x78] sm:$0xff]
        %v1555 = vld [vmem:[%s1538 + $0x80] sm:$0xff]
        %v1556 = vld [vmem:[%s1538 + $0x88] sm:$0xff]
        %v1557 = vld [vmem:[%s1538 + $0x90] sm:$0xff]
        %v1558 = vld [vmem:[%s1538 + $0x98] sm:$0xff]
        %v1559 = vld [vmem:[%s1538 + $0xa0] sm:$0xff]
        %v1560 = vld [vmem:[%s1538 + $0xa8] sm:$0xff]
        %v1561 = vld [vmem:[%s1538 + $0xb0] sm:$0xff]
        %v1562 = vld [vmem:[%s1538 + $0xb8] sm:$0xff]
        %v1563 = vld [vmem:[%s1538 + $0xc0] sm:$0xff]
        %v1564 = vld [vmem:[%s1538 + $0xc8] sm:$0xff]
        %v1565 = vld [vmem:[%s1538 + $0xd0] sm:$0xff]
        %v1566 = vld [vmem:[%s1538 + $0xd8] sm:$0xff]
        %v1567 = vld [vmem:[%s1538 + $0xe0] sm:$0xff]
        %v1568 = vld [vmem:[%s1538 + $0xe8] sm:$0xff]
        %v1569 = vld [vmem:[%s1538 + $0xf0] sm:$0xff]
        %v1570 = vld [vmem:[%s1538 + $0xf8] sm:$0xff]
        %v1571 = vld [vmem:[%s1538 + $0x100] sm:$0xff]
        %v1572 = vld [vmem:[%s1538 + $0x108] sm:$0xff]
        %v1573 = vld [vmem:[%s1538 + $0x110] sm:$0xff]
        %v1574 = vld [vmem:[%s1538 + $0x118] sm:$0xff]
        %v1575 = vld [vmem:[%s1538 + $0x120] sm:$0xff]
        %v1576 = vld [vmem:[%s1538 + $0x128] sm:$0xff]
        %v1577 = vld [vmem:[%s1538 + $0x130] sm:$0xff]
        %v1578 = vld [vmem:[%s1538 + $0x138] sm:$0xff]
        %v1579 = vld [vmem:[%s1538 + $0x140] sm:$0xff]
        %v1580 = vld [vmem:[%s1538 + $0x148] sm:$0xff]
        %v1581 = vld [vmem:[%s1538 + $0x150] sm:$0xff]
        %v1582 = vld [vmem:[%s1538 + $0x158] sm:$0xff]
        %v1583 = vld [vmem:[%s1538 + $0x160] sm:$0xff]
        %v1584 = vld [vmem:[%s1538 + $0x168] sm:$0xff]
        %v1585 = vld [vmem:[%s1538 + $0x170] sm:$0xff]
        %v1586 = vld [vmem:[%s1538 + $0x178] sm:$0xff]
        %v1587 = vld [vmem:[%s1538 + $0x180] sm:$0xff]
        %v1588 = vld [vmem:[%s1538 + $0x188] sm:$0xff]
        %v1589 = vld [vmem:[%s1538 + $0x190] sm:$0xff]
        %v1590 = vld [vmem:[%s1538 + $0x198] sm:$0xff]
        %v1591 = vld [vmem:[%s1538 + $0x1a0] sm:$0xff]
        %v1592 = vld [vmem:[%s1538 + $0x1a8] sm:$0xff]
        %v1593 = vld [vmem:[%s1538 + $0x1b0] sm:$0xff]
        %v1594 = vld [vmem:[%s1538 + $0x1b8] sm:$0xff]
        %v1595 = vld [vmem:[%s1538 + $0x1c0] sm:$0xff]
        %v1596 = vld [vmem:[%s1538 + $0x1c8] sm:$0xff]
        %v1597 = vld [vmem:[%s1538 + $0x1d0] sm:$0xff]
        %v1598 = vld [vmem:[%s1538 + $0x1d8] sm:$0xff]
        %v1599 = vld [vmem:[%s1538 + $0x1e0] sm:$0xff]
        %v1600 = vld [vmem:[%s1538 + $0x1e8] sm:$0xff]
        %v1601 = vld [vmem:[%s1538 + $0x1f0] sm:$0xff]
        %v1602 = vld [vmem:[%s1538 + $0x1f8] sm:$0xff]
        %1603 = vmatprep.subr.mxu0 %v1540
        %1604 = vmatpush1.msra.mxu0 %v1539
        %1605 = vmatprep.subr.mxu0 %v1544
        %1606 = vmatpush1.msra.mxu0 %v1543
        %1607 = vmatprep.subr.mxu0 %v1548
        %1608 = vmatpush1.msra.mxu0 %v1547
        %1609 = vmatprep.subr.mxu0 %v1552
        %1610 = vmatpush1.msra.mxu0 %v1551
        %1611 = vmatprep.subr.mxu0 %v1556
        %1612 = vmatpush1.msra.mxu0 %v1555
        %1613 = vmatprep.subr.mxu0 %v1560
        %1614 = vmatpush1.msra.mxu0 %v1559
        %1615 = vmatprep.subr.mxu0 %v1564
        %1616 = vmatpush1.msra.mxu0 %v1563
        %1617 = vmatprep.subr.mxu0 %v1568
        %1618 = vmatpush1.msra.mxu0 %v1567
        %1619 = vmatprep.subr.mxu0 %v1572
        %1620 = vmatpush1.msra.mxu0 %v1571
        %1621 = vmatprep.subr.mxu0 %v1576
        %1622 = vmatpush1.msra.mxu0 %v1575
        %1623 = vmatprep.subr.mxu0 %v1580
        %1624 = vmatpush1.msra.mxu0 %v1579
        %1625 = vmatprep.subr.mxu0 %v1584
        %1626 = vmatpush1.msra.mxu0 %v1583
        %1627 = vmatprep.subr.mxu0 %v1588
        %1628 = vmatpush1.msra.mxu0 %v1587
        %1629 = vmatprep.subr.mxu0 %v1592
        %1630 = vmatpush1.msra.mxu0 %v1591
        %1631 = vmatprep.subr.mxu0 %v1596
        %1632 = vmatpush1.msra.mxu0 %v1595
        %1633 = vmatprep.subr.mxu0 %v1600
        %1634 = vmatpush1.msra.mxu0 %v1599
        %1635 = vmatprep.subr.mxu0 0.0
        %1636 = vmatpush1.msra.mxu0 0.0
        %1637 = vmatprep.subr.mxu0 0.0
        %1638 = vmatpush1.msra.mxu0 0.0
        %1639 = vmatprep.subr.mxu0 0.0
        %1640 = vmatpush1.msra.mxu0 0.0
        %1641 = vmatprep.subr.mxu0 0.0
        %1642 = vmatpush1.msra.mxu0 0.0
        %1643 = vmatprep.subr.mxu0 0.0
        %1644 = vmatpush1.msra.mxu0 0.0
        %1645 = vmatprep.subr.mxu0 0.0
        %1646 = vmatpush1.msra.mxu0 0.0
        %1647 = vmatprep.subr.mxu0 0.0
        %1648 = vmatpush1.msra.mxu0 0.0
        %1649 = vmatprep.subr.mxu0 0.0
        %1650 = vmatpush1.msra.mxu0 0.0
        %1651 = vmatprep.subr.mxu0 0.0
        %1652 = vmatpush1.msra.mxu0 0.0
        %1653 = vmatprep.subr.mxu0 0.0
        %1654 = vmatpush1.msra.mxu0 0.0
        %1655 = vmatprep.subr.mxu0 0.0
        %1656 = vmatpush1.msra.mxu0 0.0
        %1657 = vmatprep.subr.mxu0 0.0
        %1658 = vmatpush1.msra.mxu0 0.0
        %1659 = vmatprep.subr.mxu0 0.0
        %1660 = vmatpush1.msra.mxu0 0.0
        %1661 = vmatprep.subr.mxu0 0.0
        %1662 = vmatpush1.msra.mxu0 0.0
        %1663 = vmatprep.subr.mxu0 0.0
        %1664 = vmatpush1.msra.mxu0 0.0
        %1665 = vmatprep.subr.mxu0 0.0
        %1666 = vmatpush1.msra.mxu0 0.0
        %1667 = vmatprep.mubr.f32.mxu0 0.0
        %1668 = vmatmul.mubr.f32.gmra.mrb[0].mxu0 %v1531
        %v1669 = vpop.f32.mrb[0].mxu0
        %v1670 = vadd.f32 0.0, %v1669
        %v1671 = vpop.f32.mrb[0].mxu0
        %v1672 = vadd.f32 0.0, %v1671
        %1673 = vdwg.mxu0
        %1674 = vmatprep.subr.mxu0 %v1542
        %1675 = vmatpush1.msra.mxu0 %v1541
        %1676 = vmatprep.subr.mxu0 %v1546
        %1677 = vmatpush1.msra.mxu0 %v1545
        %1678 = vmatprep.subr.mxu0 %v1550
        %1679 = vmatpush1.msra.mxu0 %v1549
        %1680 = vmatprep.subr.mxu0 %v1554
        %1681 = vmatpush1.msra.mxu0 %v1553
        %1682 = vmatprep.subr.mxu0 %v1558
        %1683 = vmatpush1.msra.mxu0 %v1557
        %1684 = vmatprep.subr.mxu0 %v1562
        %1685 = vmatpush1.msra.mxu0 %v1561
        %1686 = vmatprep.subr.mxu0 %v1566
        %1687 = vmatpush1.msra.mxu0 %v1565
        %1688 = vmatprep.subr.mxu0 %v1570
        %1689 = vmatpush1.msra.mxu0 %v1569
        %1690 = vmatprep.subr.mxu0 %v1574
        %1691 = vmatpush1.msra.mxu0 %v1573
        %1692 = vmatprep.subr.mxu0 %v1578
        %1693 = vmatpush1.msra.mxu0 %v1577
        %1694 = vmatprep.subr.mxu0 %v1582
        %1695 = vmatpush1.msra.mxu0 %v1581
        %1696 = vmatprep.subr.mxu0 %v1586
        %1697 = vmatpush1.msra.mxu0 %v1585
        %1698 = vmatprep.subr.mxu0 %v1590
        %1699 = vmatpush1.msra.mxu0 %v1589
        %1700 = vmatprep.subr.mxu0 %v1594
        %1701 = vmatpush1.msra.mxu0 %v1593
        %1702 = vmatprep.subr.mxu0 %v1598
        %1703 = vmatpush1.msra.mxu0 %v1597
        %1704 = vmatprep.subr.mxu0 %v1602
        %1705 = vmatpush1.msra.mxu0 %v1601
        %1706 = vmatprep.subr.mxu0 0.0
        %1707 = vmatpush1.msra.mxu0 0.0
        %1708 = vmatprep.subr.mxu0 0.0
        %1709 = vmatpush1.msra.mxu0 0.0
        %1710 = vmatprep.subr.mxu0 0.0
        %1711 = vmatpush1.msra.mxu0 0.0
        %1712 = vmatprep.subr.mxu0 0.0
        %1713 = vmatpush1.msra.mxu0 0.0
        %1714 = vmatprep.subr.mxu0 0.0
        %1715 = vmatpush1.msra.mxu0 0.0
        %1716 = vmatprep.subr.mxu0 0.0
        %1717 = vmatpush1.msra.mxu0 0.0
        %1718 = vmatprep.subr.mxu0 0.0
        %1719 = vmatpush1.msra.mxu0 0.0
        %1720 = vmatprep.subr.mxu0 0.0
        %1721 = vmatpush1.msra.mxu0 0.0
        %1722 = vmatprep.subr.mxu0 0.0
        %1723 = vmatpush1.msra.mxu0 0.0
        %1724 = vmatprep.subr.mxu0 0.0
        %1725 = vmatpush1.msra.mxu0 0.0
        %1726 = vmatprep.subr.mxu0 0.0
        %1727 = vmatpush1.msra.mxu0 0.0
        %1728 = vmatprep.subr.mxu0 0.0
        %1729 = vmatpush1.msra.mxu0 0.0
        %1730 = vmatprep.subr.mxu0 0.0
        %1731 = vmatpush1.msra.mxu0 0.0
        %1732 = vmatprep.subr.mxu0 0.0
        %1733 = vmatpush1.msra.mxu0 0.0
        %1734 = vmatprep.subr.mxu0 0.0
        %1735 = vmatpush1.msra.mxu0 0.0
        %1736 = vmatprep.subr.mxu0 0.0
        %1737 = vmatpush1.msra.mxu0 0.0
        %1738 = vmatprep.mubr.f32.mxu0 0.0
        %1739 = vmatmul.mubr.f32.gmra.mrb[0].mxu0 %v1531
        %v1740 = vpop.f32.mrb[0].mxu0
        %v1741 = vadd.f32 0.0, %v1740
        %v1742 = vpop.f32.mrb[0].mxu0
        %v1743 = vadd.f32 0.0, %v1742
        %1744 = vdwg.mxu0
        %v1745 = vadd.f32 %v1534, %v1670
        %v1746 = vadd.f32 %v1535, %v1672
        %v1747 = vadd.f32 %v1536, %v1741
        %v1748 = vadd.f32 %v1537, %v1743
        %v1749 = vxor.u32 %v1745, 2147483648
        %v1750 = vmul.f32 %v1749, 1.442695
        %v1751 = vpow.pop %v1750
        %v1752 = vadd.f32 %v1751, 1.0
        %v1753 = vrcp.pop %v1752
        %v1754 = vmul.f32 1.0, %v1753
        %v1755 = vxor.u32 %v1746, 2147483648
        %v1756 = vmul.f32 %v1755, 1.442695
        %v1757 = vpow.pop %v1756
        %v1758 = vadd.f32 %v1757, 1.0
        %v1759 = vrcp.pop %v1758
        %v1760 = vmul.f32 1.0, %v1759
        %v1761 = vtanh.pop %v1747
        %v1762 = vxor.u32 %v1748, 2147483648
        %v1763 = vmul.f32 %v1762, 1.442695
        %v1764 = vpow.pop %v1763
        %v1765 = vadd.f32 %v1764, 1.0
        %v1766 = vrcp.pop %v1765
        %v1767 = vmul.f32 1.0, %v1766
        %v1768 = vmul.f32 %v1760, %v1533
        %v1769 = vmul.f32 %v1754, %v1761
        %v1770 = vadd.f32 %v1768, %v1769
        %v1771 = vtanh.pop %v1770
        %v1772 = vmul.f32 %v1767, %v1771
        %1773 = vst [vmem:[#allocation4] sm:$0xff] %v1772
        %s1774 = scalar_lea.vmem [#allocation5], 32
        %v1775 = vld [vmem:[%s1774] sm:$0xff]
        %v1776 = vld [vmem:[%s1774 + $0x8] sm:$0xff]
        %v1777 = vld [vmem:[%s1774 + $0x10] sm:$0xff]
        %v1778 = vld [vmem:[%s1774 + $0x18] sm:$0xff]
        %v1779 = vld [vmem:[%s1538] sm:$0xff]
        %v1780 = vld [vmem:[%s1538 + $0x8] sm:$0xff]
        %v1781 = vld [vmem:[%s1538 + $0x10] sm:$0xff]
        %v1782 = vld [vmem:[%s1538 + $0x18] sm:$0xff]
        %v1783 = vld [vmem:[%s1538 + $0x20] sm:$0xff]
        %v1784 = vld [vmem:[%s1538 + $0x28] sm:$0xff]
        %v1785 = vld [vmem:[%s1538 + $0x30] sm:$0xff]
        %v1786 = vld [vmem:[%s1538 + $0x38] sm:$0xff]
        %v1787 = vld [vmem:[%s1538 + $0x40] sm:$0xff]
        %v1788 = vld [vmem:[%s1538 + $0x48] sm:$0xff]
        %v1789 = vld [vmem:[%s1538 + $0x50] sm:$0xff]
        %v1790 = vld [vmem:[%s1538 + $0x58] sm:$0xff]
        %v1791 = vld [vmem:[%s1538 + $0x60] sm:$0xff]
        %v1792 = vld [vmem:[%s1538 + $0x68] sm:$0xff]
        %v1793 = vld [vmem:[%s1538 + $0x70] sm:$0xff]
        %v1794 = vld [vmem:[%s1538 + $0x78] sm:$0xff]
        %v1795 = vld [vmem:[%s1538 + $0x80] sm:$0xff]
        %v1796 = vld [vmem:[%s1538 + $0x88] sm:$0xff]
        %v1797 = vld [vmem:[%s1538 + $0x90] sm:$0xff]
        %v1798 = vld [vmem:[%s1538 + $0x98] sm:$0xff]
        %v1799 = vld [vmem:[%s1538 + $0xa0] sm:$0xff]
        %v1800 = vld [vmem:[%s1538 + $0xa8] sm:$0xff]
        %v1801 = vld [vmem:[%s1538 + $0xb0] sm:$0xff]
        %v1802 = vld [vmem:[%s1538 + $0xb8] sm:$0xff]
        %v1803 = vld [vmem:[%s1538 + $0xc0] sm:$0xff]
        %v1804 = vld [vmem:[%s1538 + $0xc8] sm:$0xff]
        %v1805 = vld [vmem:[%s1538 + $0xd0] sm:$0xff]
        %v1806 = vld [vmem:[%s1538 + $0xd8] sm:$0xff]
        %v1807 = vld [vmem:[%s1538 + $0xe0] sm:$0xff]
        %v1808 = vld [vmem:[%s1538 + $0xe8] sm:$0xff]
        %v1809 = vld [vmem:[%s1538 + $0xf0] sm:$0xff]
        %v1810 = vld [vmem:[%s1538 + $0xf8] sm:$0xff]
        %v1811 = vld [vmem:[%s1538 + $0x100] sm:$0xff]
        %v1812 = vld [vmem:[%s1538 + $0x108] sm:$0xff]
        %v1813 = vld [vmem:[%s1538 + $0x110] sm:$0xff]
        %v1814 = vld [vmem:[%s1538 + $0x118] sm:$0xff]
        %v1815 = vld [vmem:[%s1538 + $0x120] sm:$0xff]
        %v1816 = vld [vmem:[%s1538 + $0x128] sm:$0xff]
        %v1817 = vld [vmem:[%s1538 + $0x130] sm:$0xff]
        %v1818 = vld [vmem:[%s1538 + $0x138] sm:$0xff]
        %v1819 = vld [vmem:[%s1538 + $0x140] sm:$0xff]
        %v1820 = vld [vmem:[%s1538 + $0x148] sm:$0xff]
        %v1821 = vld [vmem:[%s1538 + $0x150] sm:$0xff]
        %v1822 = vld [vmem:[%s1538 + $0x158] sm:$0xff]
        %v1823 = vld [vmem:[%s1538 + $0x160] sm:$0xff]
        %v1824 = vld [vmem:[%s1538 + $0x168] sm:$0xff]
        %v1825 = vld [vmem:[%s1538 + $0x170] sm:$0xff]
        %v1826 = vld [vmem:[%s1538 + $0x178] sm:$0xff]
        %v1827 = vld [vmem:[%s1538 + $0x180] sm:$0xff]
        %v1828 = vld [vmem:[%s1538 + $0x188] sm:$0xff]
        %v1829 = vld [vmem:[%s1538 + $0x190] sm:$0xff]
        %v1830 = vld [vmem:[%s1538 + $0x198] sm:$0xff]
        %v1831 = vld [vmem:[%s1538 + $0x1a0] sm:$0xff]
        %v1832 = vld [vmem:[%s1538 + $0x1a8] sm:$0xff]
        %v1833 = vld [vmem:[%s1538 + $0x1b0] sm:$0xff]
        %v1834 = vld [vmem:[%s1538 + $0x1b8] sm:$0xff]
        %v1835 = vld [vmem:[%s1538 + $0x1c0] sm:$0xff]
        %v1836 = vld [vmem:[%s1538 + $0x1c8] sm:$0xff]
        %v1837 = vld [vmem:[%s1538 + $0x1d0] sm:$0xff]
        %v1838 = vld [vmem:[%s1538 + $0x1d8] sm:$0xff]
        %v1839 = vld [vmem:[%s1538 + $0x1e0] sm:$0xff]
        %v1840 = vld [vmem:[%s1538 + $0x1e8] sm:$0xff]
        %v1841 = vld [vmem:[%s1538 + $0x1f0] sm:$0xff]
        %v1842 = vld [vmem:[%s1538 + $0x1f8] sm:$0xff]
        %1843 = vmatprep.subr.mxu0 %v1780
        %1844 = vmatpush1.msra.mxu0 %v1779
        %1845 = vmatprep.subr.mxu0 %v1784
        %1846 = vmatpush1.msra.mxu0 %v1783
        %1847 = vmatprep.subr.mxu0 %v1788
        %1848 = vmatpush1.msra.mxu0 %v1787
        %1849 = vmatprep.subr.mxu0 %v1792
        %1850 = vmatpush1.msra.mxu0 %v1791
        %1851 = vmatprep.subr.mxu0 %v1796
        %1852 = vmatpush1.msra.mxu0 %v1795
        %1853 = vmatprep.subr.mxu0 %v1800
        %1854 = vmatpush1.msra.mxu0 %v1799
        %1855 = vmatprep.subr.mxu0 %v1804
        %1856 = vmatpush1.msra.mxu0 %v1803
        %1857 = vmatprep.subr.mxu0 %v1808
        %1858 = vmatpush1.msra.mxu0 %v1807
        %1859 = vmatprep.subr.mxu0 %v1812
        %1860 = vmatpush1.msra.mxu0 %v1811
        %1861 = vmatprep.subr.mxu0 %v1816
        %1862 = vmatpush1.msra.mxu0 %v1815
        %1863 = vmatprep.subr.mxu0 %v1820
        %1864 = vmatpush1.msra.mxu0 %v1819
        %1865 = vmatprep.subr.mxu0 %v1824
        %1866 = vmatpush1.msra.mxu0 %v1823
        %1867 = vmatprep.subr.mxu0 %v1828
        %1868 = vmatpush1.msra.mxu0 %v1827
        %1869 = vmatprep.subr.mxu0 %v1832
        %1870 = vmatpush1.msra.mxu0 %v1831
        %1871 = vmatprep.subr.mxu0 %v1836
        %1872 = vmatpush1.msra.mxu0 %v1835
        %1873 = vmatprep.subr.mxu0 %v1840
        %1874 = vmatpush1.msra.mxu0 %v1839
        %1875 = vmatprep.subr.mxu0 0.0
        %1876 = vmatpush1.msra.mxu0 0.0
        %1877 = vmatprep.subr.mxu0 0.0
        %1878 = vmatpush1.msra.mxu0 0.0
        %1879 = vmatprep.subr.mxu0 0.0
        %1880 = vmatpush1.msra.mxu0 0.0
        %1881 = vmatprep.subr.mxu0 0.0
        %1882 = vmatpush1.msra.mxu0 0.0
        %1883 = vmatprep.subr.mxu0 0.0
        %1884 = vmatpush1.msra.mxu0 0.0
        %1885 = vmatprep.subr.mxu0 0.0
        %1886 = vmatpush1.msra.mxu0 0.0
        %1887 = vmatprep.subr.mxu0 0.0
        %1888 = vmatpush1.msra.mxu0 0.0
        %1889 = vmatprep.subr.mxu0 0.0
        %1890 = vmatpush1.msra.mxu0 0.0
        %1891 = vmatprep.subr.mxu0 0.0
        %1892 = vmatpush1.msra.mxu0 0.0
        %1893 = vmatprep.subr.mxu0 0.0
        %1894 = vmatpush1.msra.mxu0 0.0
        %1895 = vmatprep.subr.mxu0 0.0
        %1896 = vmatpush1.msra.mxu0 0.0
        %1897 = vmatprep.subr.mxu0 0.0
        %1898 = vmatpush1.msra.mxu0 0.0
        %1899 = vmatprep.subr.mxu0 0.0
        %1900 = vmatpush1.msra.mxu0 0.0
        %1901 = vmatprep.subr.mxu0 0.0
        %1902 = vmatpush1.msra.mxu0 0.0
        %1903 = vmatprep.subr.mxu0 0.0
        %1904 = vmatpush1.msra.mxu0 0.0
        %1905 = vmatprep.subr.mxu0 0.0
        %1906 = vmatpush1.msra.mxu0 0.0
        %1907 = vmatprep.mubr.f32.mxu0 0.0
        %1908 = vmatmul.mubr.f32.gmra.mrb[0].mxu0 %v1772
        %v1909 = vpop.f32.mrb[0].mxu0
        %v1910 = vadd.f32 0.0, %v1909
        %v1911 = vpop.f32.mrb[0].mxu0
        %v1912 = vadd.f32 0.0, %v1911
        %1913 = vdwg.mxu0
        %1914 = vmatprep.subr.mxu0 %v1782
        %1915 = vmatpush1.msra.mxu0 %v1781
        %1916 = vmatprep.subr.mxu0 %v1786
        %1917 = vmatpush1.msra.mxu0 %v1785
        %1918 = vmatprep.subr.mxu0 %v1790
        %1919 = vmatpush1.msra.mxu0 %v1789
        %1920 = vmatprep.subr.mxu0 %v1794
        %1921 = vmatpush1.msra.mxu0 %v1793
        %1922 = vmatprep.subr.mxu0 %v1798
        %1923 = vmatpush1.msra.mxu0 %v1797
        %1924 = vmatprep.subr.mxu0 %v1802
        %1925 = vmatpush1.msra.mxu0 %v1801
        %1926 = vmatprep.subr.mxu0 %v1806
        %1927 = vmatpush1.msra.mxu0 %v1805
        %1928 = vmatprep.subr.mxu0 %v1810
        %1929 = vmatpush1.msra.mxu0 %v1809
        %1930 = vmatprep.subr.mxu0 %v1814
        %1931 = vmatpush1.msra.mxu0 %v1813
        %1932 = vmatprep.subr.mxu0 %v1818
        %1933 = vmatpush1.msra.mxu0 %v1817
        %1934 = vmatprep.subr.mxu0 %v1822
        %1935 = vmatpush1.msra.mxu0 %v1821
        %1936 = vmatprep.subr.mxu0 %v1826
        %1937 = vmatpush1.msra.mxu0 %v1825
        %1938 = vmatprep.subr.mxu0 %v1830
        %1939 = vmatpush1.msra.mxu0 %v1829
        %1940 = vmatprep.subr.mxu0 %v1834
        %1941 = vmatpush1.msra.mxu0 %v1833
        %1942 = vmatprep.subr.mxu0 %v1838
        %1943 = vmatpush1.msra.mxu0 %v1837
        %1944 = vmatprep.subr.mxu0 %v1842
        %1945 = vmatpush1.msra.mxu0 %v1841
        %1946 = vmatprep.subr.mxu0 0.0
        %1947 = vmatpush1.msra.mxu0 0.0
        %1948 = vmatprep.subr.mxu0 0.0
        %1949 = vmatpush1.msra.mxu0 0.0
        %1950 = vmatprep.subr.mxu0 0.0
        %1951 = vmatpush1.msra.mxu0 0.0
        %1952 = vmatprep.subr.mxu0 0.0
        %1953 = vmatpush1.msra.mxu0 0.0
        %1954 = vmatprep.subr.mxu0 0.0
        %1955 = vmatpush1.msra.mxu0 0.0
        %1956 = vmatprep.subr.mxu0 0.0
        %1957 = vmatpush1.msra.mxu0 0.0
        %1958 = vmatprep.subr.mxu0 0.0
        %1959 = vmatpush1.msra.mxu0 0.0
        %1960 = vmatprep.subr.mxu0 0.0
        %1961 = vmatpush1.msra.mxu0 0.0
        %1962 = vmatprep.subr.mxu0 0.0
        %1963 = vmatpush1.msra.mxu0 0.0
        %1964 = vmatprep.subr.mxu0 0.0
        %1965 = vmatpush1.msra.mxu0 0.0
        %1966 = vmatprep.subr.mxu0 0.0
        %1967 = vmatpush1.msra.mxu0 0.0
        %1968 = vmatprep.subr.mxu0 0.0
        %1969 = vmatpush1.msra.mxu0 0.0
        %1970 = vmatprep.subr.mxu0 0.0
        %1971 = vmatpush1.msra.mxu0 0.0
        %1972 = vmatprep.subr.mxu0 0.0
        %1973 = vmatpush1.msra.mxu0 0.0
        %1974 = vmatprep.subr.mxu0 0.0
        %1975 = vmatpush1.msra.mxu0 0.0
        %1976 = vmatprep.subr.mxu0 0.0
        %1977 = vmatpush1.msra.mxu0 0.0
        %1978 = vmatprep.mubr.f32.mxu0 0.0
        %1979 = vmatmul.mubr.f32.gmra.mrb[0].mxu0 %v1772
        %v1980 = vpop.f32.mrb[0].mxu0
        %v1981 = vadd.f32 0.0, %v1980
        %v1982 = vpop.f32.mrb[0].mxu0
        %v1983 = vadd.f32 0.0, %v1982
        %1984 = vdwg.mxu0
        %v1985 = vadd.f32 %v1775, %v1910
        %v1986 = vadd.f32 %v1776, %v1912
        %v1987 = vadd.f32 %v1777, %v1981
        %v1988 = vadd.f32 %v1778, %v1983
        %v1989 = vxor.u32 %v1985, 2147483648
        %v1990 = vmul.f32 %v1989, 1.442695
        %v1991 = vpow.pop %v1990
        %v1992 = vadd.f32 %v1991, 1.0
        %v1993 = vrcp.pop %v1992
        %v1994 = vmul.f32 1.0, %v1993
        %v1995 = vxor.u32 %v1986, 2147483648
        %v1996 = vmul.f32 %v1995, 1.442695
        %v1997 = vpow.pop %v1996
        %v1998 = vadd.f32 %v1997, 1.0
        %v1999 = vrcp.pop %v1998
        %v2000 = vmul.f32 1.0, %v1999
        %v2001 = vtanh.pop %v1987
        %v2002 = vxor.u32 %v1988, 2147483648
        %v2003 = vmul.f32 %v2002, 1.442695
        %v2004 = vpow.pop %v2003
        %v2005 = vadd.f32 %v2004, 1.0
        %v2006 = vrcp.pop %v2005
        %v2007 = vmul.f32 1.0, %v2006
        %v2008 = vmul.f32 %v2000, %v1770
        %v2009 = vmul.f32 %v1994, %v2001
        %v2010 = vadd.f32 %v2008, %v2009
        %v2011 = vtanh.pop %v2010
        %v2012 = vmul.f32 %v2007, %v2011
        %2013 = vst [vmem:[%s760] sm:$0xff] %v2012
        %s2014 = scalar_lea.vmem [#allocation5], 64
        %v2015 = vld [vmem:[%s2014] sm:$0xff]
        %v2016 = vld [vmem:[%s2014 + $0x8] sm:$0xff]
        %v2017 = vld [vmem:[%s2014 + $0x10] sm:$0xff]
        %v2018 = vld [vmem:[%s2014 + $0x18] sm:$0xff]
        %v2019 = vld [vmem:[%s1538] sm:$0xff]
        %v2020 = vld [vmem:[%s1538 + $0x8] sm:$0xff]
        %v2021 = vld [vmem:[%s1538 + $0x10] sm:$0xff]
        %v2022 = vld [vmem:[%s1538 + $0x18] sm:$0xff]
        %v2023 = vld [vmem:[%s1538 + $0x20] sm:$0xff]
        %v2024 = vld [vmem:[%s1538 + $0x28] sm:$0xff]
        %v2025 = vld [vmem:[%s1538 + $0x30] sm:$0xff]
        %v2026 = vld [vmem:[%s1538 + $0x38] sm:$0xff]
        %v2027 = vld [vmem:[%s1538 + $0x40] sm:$0xff]
        %v2028 = vld [vmem:[%s1538 + $0x48] sm:$0xff]
        %v2029 = vld [vmem:[%s1538 + $0x50] sm:$0xff]
        %v2030 = vld [vmem:[%s1538 + $0x58] sm:$0xff]
        %v2031 = vld [vmem:[%s1538 + $0x60] sm:$0xff]
        %v2032 = vld [vmem:[%s1538 + $0x68] sm:$0xff]
        %v2033 = vld [vmem:[%s1538 + $0x70] sm:$0xff]
        %v2034 = vld [vmem:[%s1538 + $0x78] sm:$0xff]
        %v2035 = vld [vmem:[%s1538 + $0x80] sm:$0xff]
        %v2036 = vld [vmem:[%s1538 + $0x88] sm:$0xff]
        %v2037 = vld [vmem:[%s1538 + $0x90] sm:$0xff]
        %v2038 = vld [vmem:[%s1538 + $0x98] sm:$0xff]
        %v2039 = vld [vmem:[%s1538 + $0xa0] sm:$0xff]
        %v2040 = vld [vmem:[%s1538 + $0xa8] sm:$0xff]
        %v2041 = vld [vmem:[%s1538 + $0xb0] sm:$0xff]
        %v2042 = vld [vmem:[%s1538 + $0xb8] sm:$0xff]
        %v2043 = vld [vmem:[%s1538 + $0xc0] sm:$0xff]
        %v2044 = vld [vmem:[%s1538 + $0xc8] sm:$0xff]
        %v2045 = vld [vmem:[%s1538 + $0xd0] sm:$0xff]
        %v2046 = vld [vmem:[%s1538 + $0xd8] sm:$0xff]
        %v2047 = vld [vmem:[%s1538 + $0xe0] sm:$0xff]
        %v2048 = vld [vmem:[%s1538 + $0xe8] sm:$0xff]
        %v2049 = vld [vmem:[%s1538 + $0xf0] sm:$0xff]
        %v2050 = vld [vmem:[%s1538 + $0xf8] sm:$0xff]
        %v2051 = vld [vmem:[%s1538 + $0x100] sm:$0xff]
        %v2052 = vld [vmem:[%s1538 + $0x108] sm:$0xff]
        %v2053 = vld [vmem:[%s1538 + $0x110] sm:$0xff]
        %v2054 = vld [vmem:[%s1538 + $0x118] sm:$0xff]
        %v2055 = vld [vmem:[%s1538 + $0x120] sm:$0xff]
        %v2056 = vld [vmem:[%s1538 + $0x128] sm:$0xff]
        %v2057 = vld [vmem:[%s1538 + $0x130] sm:$0xff]
        %v2058 = vld [vmem:[%s1538 + $0x138] sm:$0xff]
        %v2059 = vld [vmem:[%s1538 + $0x140] sm:$0xff]
        %v2060 = vld [vmem:[%s1538 + $0x148] sm:$0xff]
        %v2061 = vld [vmem:[%s1538 + $0x150] sm:$0xff]
        %v2062 = vld [vmem:[%s1538 + $0x158] sm:$0xff]
        %v2063 = vld [vmem:[%s1538 + $0x160] sm:$0xff]
        %v2064 = vld [vmem:[%s1538 + $0x168] sm:$0xff]
        %v2065 = vld [vmem:[%s1538 + $0x170] sm:$0xff]
        %v2066 = vld [vmem:[%s1538 + $0x178] sm:$0xff]
        %v2067 = vld [vmem:[%s1538 + $0x180] sm:$0xff]
        %v2068 = vld [vmem:[%s1538 + $0x188] sm:$0xff]
        %v2069 = vld [vmem:[%s1538 + $0x190] sm:$0xff]
        %v2070 = vld [vmem:[%s1538 + $0x198] sm:$0xff]
        %v2071 = vld [vmem:[%s1538 + $0x1a0] sm:$0xff]
        %v2072 = vld [vmem:[%s1538 + $0x1a8] sm:$0xff]
        %v2073 = vld [vmem:[%s1538 + $0x1b0] sm:$0xff]
        %v2074 = vld [vmem:[%s1538 + $0x1b8] sm:$0xff]
        %v2075 = vld [vmem:[%s1538 + $0x1c0] sm:$0xff]
        %v2076 = vld [vmem:[%s1538 + $0x1c8] sm:$0xff]
        %v2077 = vld [vmem:[%s1538 + $0x1d0] sm:$0xff]
        %v2078 = vld [vmem:[%s1538 + $0x1d8] sm:$0xff]
        %v2079 = vld [vmem:[%s1538 + $0x1e0] sm:$0xff]
        %v2080 = vld [vmem:[%s1538 + $0x1e8] sm:$0xff]
        %v2081 = vld [vmem:[%s1538 + $0x1f0] sm:$0xff]
        %v2082 = vld [vmem:[%s1538 + $0x1f8] sm:$0xff]
        %2083 = vmatprep.subr.mxu0 %v2020
        %2084 = vmatpush1.msra.mxu0 %v2019
        %2085 = vmatprep.subr.mxu0 %v2024
        %2086 = vmatpush1.msra.mxu0 %v2023
        %2087 = vmatprep.subr.mxu0 %v2028
        %2088 = vmatpush1.msra.mxu0 %v2027
        %2089 = vmatprep.subr.mxu0 %v2032
        %2090 = vmatpush1.msra.mxu0 %v2031
        %2091 = vmatprep.subr.mxu0 %v2036
        %2092 = vmatpush1.msra.mxu0 %v2035
        %2093 = vmatprep.subr.mxu0 %v2040
        %2094 = vmatpush1.msra.mxu0 %v2039
        %2095 = vmatprep.subr.mxu0 %v2044
        %2096 = vmatpush1.msra.mxu0 %v2043
        %2097 = vmatprep.subr.mxu0 %v2048
        %2098 = vmatpush1.msra.mxu0 %v2047
        %2099 = vmatprep.subr.mxu0 %v2052
        %2100 = vmatpush1.msra.mxu0 %v2051
        %2101 = vmatprep.subr.mxu0 %v2056
        %2102 = vmatpush1.msra.mxu0 %v2055
        %2103 = vmatprep.subr.mxu0 %v2060
        %2104 = vmatpush1.msra.mxu0 %v2059
        %2105 = vmatprep.subr.mxu0 %v2064
        %2106 = vmatpush1.msra.mxu0 %v2063
        %2107 = vmatprep.subr.mxu0 %v2068
        %2108 = vmatpush1.msra.mxu0 %v2067
        %2109 = vmatprep.subr.mxu0 %v2072
        %2110 = vmatpush1.msra.mxu0 %v2071
        %2111 = vmatprep.subr.mxu0 %v2076
        %2112 = vmatpush1.msra.mxu0 %v2075
        %2113 = vmatprep.subr.mxu0 %v2080
        %2114 = vmatpush1.msra.mxu0 %v2079
        %2115 = vmatprep.subr.mxu0 0.0
        %2116 = vmatpush1.msra.mxu0 0.0
        %2117 = vmatprep.subr.mxu0 0.0
        %2118 = vmatpush1.msra.mxu0 0.0
        %2119 = vmatprep.subr.mxu0 0.0
        %2120 = vmatpush1.msra.mxu0 0.0
        %2121 = vmatprep.subr.mxu0 0.0
        %2122 = vmatpush1.msra.mxu0 0.0
        %2123 = vmatprep.subr.mxu0 0.0
        %2124 = vmatpush1.msra.mxu0 0.0
        %2125 = vmatprep.subr.mxu0 0.0
        %2126 = vmatpush1.msra.mxu0 0.0
        %2127 = vmatprep.subr.mxu0 0.0
        %2128 = vmatpush1.msra.mxu0 0.0
        %2129 = vmatprep.subr.mxu0 0.0
        %2130 = vmatpush1.msra.mxu0 0.0
        %2131 = vmatprep.subr.mxu0 0.0
        %2132 = vmatpush1.msra.mxu0 0.0
        %2133 = vmatprep.subr.mxu0 0.0
        %2134 = vmatpush1.msra.mxu0 0.0
        %2135 = vmatprep.subr.mxu0 0.0
        %2136 = vmatpush1.msra.mxu0 0.0
        %2137 = vmatprep.subr.mxu0 0.0
        %2138 = vmatpush1.msra.mxu0 0.0
        %2139 = vmatprep.subr.mxu0 0.0
        %2140 = vmatpush1.msra.mxu0 0.0
        %2141 = vmatprep.subr.mxu0 0.0
        %2142 = vmatpush1.msra.mxu0 0.0
        %2143 = vmatprep.subr.mxu0 0.0
        %2144 = vmatpush1.msra.mxu0 0.0
        %2145 = vmatprep.subr.mxu0 0.0
        %2146 = vmatpush1.msra.mxu0 0.0
        %2147 = vmatprep.mubr.f32.mxu0 0.0
        %2148 = vmatmul.mubr.f32.gmra.mrb[0].mxu0 %v2012
        %v2149 = vpop.f32.mrb[0].mxu0
        %v2150 = vadd.f32 0.0, %v2149
        %v2151 = vpop.f32.mrb[0].mxu0
        %v2152 = vadd.f32 0.0, %v2151
        %2153 = vdwg.mxu0
        %2154 = vmatprep.subr.mxu0 %v2022
        %2155 = vmatpush1.msra.mxu0 %v2021
        %2156 = vmatprep.subr.mxu0 %v2026
        %2157 = vmatpush1.msra.mxu0 %v2025
        %2158 = vmatprep.subr.mxu0 %v2030
        %2159 = vmatpush1.msra.mxu0 %v2029
        %2160 = vmatprep.subr.mxu0 %v2034
        %2161 = vmatpush1.msra.mxu0 %v2033
        %2162 = vmatprep.subr.mxu0 %v2038
        %2163 = vmatpush1.msra.mxu0 %v2037
        %2164 = vmatprep.subr.mxu0 %v2042
        %2165 = vmatpush1.msra.mxu0 %v2041
        %2166 = vmatprep.subr.mxu0 %v2046
        %2167 = vmatpush1.msra.mxu0 %v2045
        %2168 = vmatprep.subr.mxu0 %v2050
        %2169 = vmatpush1.msra.mxu0 %v2049
        %2170 = vmatprep.subr.mxu0 %v2054
        %2171 = vmatpush1.msra.mxu0 %v2053
        %2172 = vmatprep.subr.mxu0 %v2058
        %2173 = vmatpush1.msra.mxu0 %v2057
        %2174 = vmatprep.subr.mxu0 %v2062
        %2175 = vmatpush1.msra.mxu0 %v2061
        %2176 = vmatprep.subr.mxu0 %v2066
        %2177 = vmatpush1.msra.mxu0 %v2065
        %2178 = vmatprep.subr.mxu0 %v2070
        %2179 = vmatpush1.msra.mxu0 %v2069
        %2180 = vmatprep.subr.mxu0 %v2074
        %2181 = vmatpush1.msra.mxu0 %v2073
        %2182 = vmatprep.subr.mxu0 %v2078
        %2183 = vmatpush1.msra.mxu0 %v2077
        %2184 = vmatprep.subr.mxu0 %v2082
        %2185 = vmatpush1.msra.mxu0 %v2081
        %2186 = vmatprep.subr.mxu0 0.0
        %2187 = vmatpush1.msra.mxu0 0.0
        %2188 = vmatprep.subr.mxu0 0.0
        %2189 = vmatpush1.msra.mxu0 0.0
        %2190 = vmatprep.subr.mxu0 0.0
        %2191 = vmatpush1.msra.mxu0 0.0
        %2192 = vmatprep.subr.mxu0 0.0
        %2193 = vmatpush1.msra.mxu0 0.0
        %2194 = vmatprep.subr.mxu0 0.0
        %2195 = vmatpush1.msra.mxu0 0.0
        %2196 = vmatprep.subr.mxu0 0.0
        %2197 = vmatpush1.msra.mxu0 0.0
        %2198 = vmatprep.subr.mxu0 0.0
        %2199 = vmatpush1.msra.mxu0 0.0
        %2200 = vmatprep.subr.mxu0 0.0
        %2201 = vmatpush1.msra.mxu0 0.0
        %2202 = vmatprep.subr.mxu0 0.0
        %2203 = vmatpush1.msra.mxu0 0.0
        %2204 = vmatprep.subr.mxu0 0.0
        %2205 = vmatpush1.msra.mxu0 0.0
        %2206 = vmatprep.subr.mxu0 0.0
        %2207 = vmatpush1.msra.mxu0 0.0
        %2208 = vmatprep.subr.mxu0 0.0
        %2209 = vmatpush1.msra.mxu0 0.0
        %2210 = vmatprep.subr.mxu0 0.0
        %2211 = vmatpush1.msra.mxu0 0.0
        %2212 = vmatprep.subr.mxu0 0.0
        %2213 = vmatpush1.msra.mxu0 0.0
        %2214 = vmatprep.subr.mxu0 0.0
        %2215 = vmatpush1.msra.mxu0 0.0
        %2216 = vmatprep.subr.mxu0 0.0
        %2217 = vmatpush1.msra.mxu0 0.0
        %2218 = vmatprep.mubr.f32.mxu0 0.0
        %2219 = vmatmul.mubr.f32.gmra.mrb[0].mxu0 %v2012
        %v2220 = vpop.f32.mrb[0].mxu0
        %v2221 = vadd.f32 0.0, %v2220
        %v2222 = vpop.f32.mrb[0].mxu0
        %v2223 = vadd.f32 0.0, %v2222
        %2224 = vdwg.mxu0
        %v2225 = vadd.f32 %v2015, %v2150
        %v2226 = vadd.f32 %v2016, %v2152
        %v2227 = vadd.f32 %v2017, %v2221
        %v2228 = vadd.f32 %v2018, %v2223
        %v2229 = vxor.u32 %v2225, 2147483648
        %v2230 = vmul.f32 %v2229, 1.442695
        %v2231 = vpow.pop %v2230
        %v2232 = vadd.f32 %v2231, 1.0
        %v2233 = vrcp.pop %v2232
        %v2234 = vmul.f32 1.0, %v2233
        %v2235 = vxor.u32 %v2226, 2147483648
        %v2236 = vmul.f32 %v2235, 1.442695
        %v2237 = vpow.pop %v2236
        %v2238 = vadd.f32 %v2237, 1.0
        %v2239 = vrcp.pop %v2238
        %v2240 = vmul.f32 1.0, %v2239
        %v2241 = vtanh.pop %v2227
        %v2242 = vxor.u32 %v2228, 2147483648
        %v2243 = vmul.f32 %v2242, 1.442695
        %v2244 = vpow.pop %v2243
        %v2245 = vadd.f32 %v2244, 1.0
        %v2246 = vrcp.pop %v2245
        %v2247 = vmul.f32 1.0, %v2246
        %v2248 = vmul.f32 %v2240, %v2010
        %v2249 = vmul.f32 %v2234, %v2241
        %v2250 = vadd.f32 %v2248, %v2249
        %v2251 = vtanh.pop %v2250
        %v2252 = vmul.f32 %v2247, %v2251
        %2253 = vst [vmem:[%s1001] sm:$0xff] %v2252
        %s2254 = scalar_lea.vmem [#allocation5], 96
        %v2255 = vld [vmem:[%s2254] sm:$0xff]
        %v2256 = vld [vmem:[%s2254 + $0x8] sm:$0xff]
        %v2257 = vld [vmem:[%s2254 + $0x10] sm:$0xff]
        %v2258 = vld [vmem:[%s2254 + $0x18] sm:$0xff]
        %v2259 = vld [vmem:[%s1538] sm:$0xff]
        %v2260 = vld [vmem:[%s1538 + $0x8] sm:$0xff]
        %v2261 = vld [vmem:[%s1538 + $0x10] sm:$0xff]
        %v2262 = vld [vmem:[%s1538 + $0x18] sm:$0xff]
        %v2263 = vld [vmem:[%s1538 + $0x20] sm:$0xff]
        %v2264 = vld [vmem:[%s1538 + $0x28] sm:$0xff]
        %v2265 = vld [vmem:[%s1538 + $0x30] sm:$0xff]
        %v2266 = vld [vmem:[%s1538 + $0x38] sm:$0xff]
        %v2267 = vld [vmem:[%s1538 + $0x40] sm:$0xff]
        %v2268 = vld [vmem:[%s1538 + $0x48] sm:$0xff]
        %v2269 = vld [vmem:[%s1538 + $0x50] sm:$0xff]
        %v2270 = vld [vmem:[%s1538 + $0x58] sm:$0xff]
        %v2271 = vld [vmem:[%s1538 + $0x60] sm:$0xff]
        %v2272 = vld [vmem:[%s1538 + $0x68] sm:$0xff]
        %v2273 = vld [vmem:[%s1538 + $0x70] sm:$0xff]
        %v2274 = vld [vmem:[%s1538 + $0x78] sm:$0xff]
        %v2275 = vld [vmem:[%s1538 + $0x80] sm:$0xff]
        %v2276 = vld [vmem:[%s1538 + $0x88] sm:$0xff]
        %v2277 = vld [vmem:[%s1538 + $0x90] sm:$0xff]
        %v2278 = vld [vmem:[%s1538 + $0x98] sm:$0xff]
        %v2279 = vld [vmem:[%s1538 + $0xa0] sm:$0xff]
        %v2280 = vld [vmem:[%s1538 + $0xa8] sm:$0xff]
        %v2281 = vld [vmem:[%s1538 + $0xb0] sm:$0xff]
        %v2282 = vld [vmem:[%s1538 + $0xb8] sm:$0xff]
        %v2283 = vld [vmem:[%s1538 + $0xc0] sm:$0xff]
        %v2284 = vld [vmem:[%s1538 + $0xc8] sm:$0xff]
        %v2285 = vld [vmem:[%s1538 + $0xd0] sm:$0xff]
        %v2286 = vld [vmem:[%s1538 + $0xd8] sm:$0xff]
        %v2287 = vld [vmem:[%s1538 + $0xe0] sm:$0xff]
        %v2288 = vld [vmem:[%s1538 + $0xe8] sm:$0xff]
        %v2289 = vld [vmem:[%s1538 + $0xf0] sm:$0xff]
        %v2290 = vld [vmem:[%s1538 + $0xf8] sm:$0xff]
        %v2291 = vld [vmem:[%s1538 + $0x100] sm:$0xff]
        %v2292 = vld [vmem:[%s1538 + $0x108] sm:$0xff]
        %v2293 = vld [vmem:[%s1538 + $0x110] sm:$0xff]
        %v2294 = vld [vmem:[%s1538 + $0x118] sm:$0xff]
        %v2295 = vld [vmem:[%s1538 + $0x120] sm:$0xff]
        %v2296 = vld [vmem:[%s1538 + $0x128] sm:$0xff]
        %v2297 = vld [vmem:[%s1538 + $0x130] sm:$0xff]
        %v2298 = vld [vmem:[%s1538 + $0x138] sm:$0xff]
        %v2299 = vld [vmem:[%s1538 + $0x140] sm:$0xff]
        %v2300 = vld [vmem:[%s1538 + $0x148] sm:$0xff]
        %v2301 = vld [vmem:[%s1538 + $0x150] sm:$0xff]
        %v2302 = vld [vmem:[%s1538 + $0x158] sm:$0xff]
        %v2303 = vld [vmem:[%s1538 + $0x160] sm:$0xff]
        %v2304 = vld [vmem:[%s1538 + $0x168] sm:$0xff]
        %v2305 = vld [vmem:[%s1538 + $0x170] sm:$0xff]
        %v2306 = vld [vmem:[%s1538 + $0x178] sm:$0xff]
        %v2307 = vld [vmem:[%s1538 + $0x180] sm:$0xff]
        %v2308 = vld [vmem:[%s1538 + $0x188] sm:$0xff]
        %v2309 = vld [vmem:[%s1538 + $0x190] sm:$0xff]
        %v2310 = vld [vmem:[%s1538 + $0x198] sm:$0xff]
        %v2311 = vld [vmem:[%s1538 + $0x1a0] sm:$0xff]
        %v2312 = vld [vmem:[%s1538 + $0x1a8] sm:$0xff]
        %v2313 = vld [vmem:[%s1538 + $0x1b0] sm:$0xff]
        %v2314 = vld [vmem:[%s1538 + $0x1b8] sm:$0xff]
        %v2315 = vld [vmem:[%s1538 + $0x1c0] sm:$0xff]
        %v2316 = vld [vmem:[%s1538 + $0x1c8] sm:$0xff]
        %v2317 = vld [vmem:[%s1538 + $0x1d0] sm:$0xff]
        %v2318 = vld [vmem:[%s1538 + $0x1d8] sm:$0xff]
        %v2319 = vld [vmem:[%s1538 + $0x1e0] sm:$0xff]
        %v2320 = vld [vmem:[%s1538 + $0x1e8] sm:$0xff]
        %v2321 = vld [vmem:[%s1538 + $0x1f0] sm:$0xff]
        %v2322 = vld [vmem:[%s1538 + $0x1f8] sm:$0xff]
        %2323 = vmatprep.subr.mxu0 %v2260
        %2324 = vmatpush1.msra.mxu0 %v2259
        %2325 = vmatprep.subr.mxu0 %v2264
        %2326 = vmatpush1.msra.mxu0 %v2263
        %2327 = vmatprep.subr.mxu0 %v2268
        %2328 = vmatpush1.msra.mxu0 %v2267
        %2329 = vmatprep.subr.mxu0 %v2272
        %2330 = vmatpush1.msra.mxu0 %v2271
        %2331 = vmatprep.subr.mxu0 %v2276
        %2332 = vmatpush1.msra.mxu0 %v2275
        %2333 = vmatprep.subr.mxu0 %v2280
        %2334 = vmatpush1.msra.mxu0 %v2279
        %2335 = vmatprep.subr.mxu0 %v2284
        %2336 = vmatpush1.msra.mxu0 %v2283
        %2337 = vmatprep.subr.mxu0 %v2288
        %2338 = vmatpush1.msra.mxu0 %v2287
        %2339 = vmatprep.subr.mxu0 %v2292
        %2340 = vmatpush1.msra.mxu0 %v2291
        %2341 = vmatprep.subr.mxu0 %v2296
        %2342 = vmatpush1.msra.mxu0 %v2295
        %2343 = vmatprep.subr.mxu0 %v2300
        %2344 = vmatpush1.msra.mxu0 %v2299
        %2345 = vmatprep.subr.mxu0 %v2304
        %2346 = vmatpush1.msra.mxu0 %v2303
        %2347 = vmatprep.subr.mxu0 %v2308
        %2348 = vmatpush1.msra.mxu0 %v2307
        %2349 = vmatprep.subr.mxu0 %v2312
        %2350 = vmatpush1.msra.mxu0 %v2311
        %2351 = vmatprep.subr.mxu0 %v2316
        %2352 = vmatpush1.msra.mxu0 %v2315
        %2353 = vmatprep.subr.mxu0 %v2320
        %2354 = vmatpush1.msra.mxu0 %v2319
        %2355 = vmatprep.subr.mxu0 0.0
        %2356 = vmatpush1.msra.mxu0 0.0
        %2357 = vmatprep.subr.mxu0 0.0
        %2358 = vmatpush1.msra.mxu0 0.0
        %2359 = vmatprep.subr.mxu0 0.0
        %2360 = vmatpush1.msra.mxu0 0.0
        %2361 = vmatprep.subr.mxu0 0.0
        %2362 = vmatpush1.msra.mxu0 0.0
        %2363 = vmatprep.subr.mxu0 0.0
        %2364 = vmatpush1.msra.mxu0 0.0
        %2365 = vmatprep.subr.mxu0 0.0
        %2366 = vmatpush1.msra.mxu0 0.0
        %2367 = vmatprep.subr.mxu0 0.0
        %2368 = vmatpush1.msra.mxu0 0.0
        %2369 = vmatprep.subr.mxu0 0.0
        %2370 = vmatpush1.msra.mxu0 0.0
        %2371 = vmatprep.subr.mxu0 0.0
        %2372 = vmatpush1.msra.mxu0 0.0
        %2373 = vmatprep.subr.mxu0 0.0
        %2374 = vmatpush1.msra.mxu0 0.0
        %2375 = vmatprep.subr.mxu0 0.0
        %2376 = vmatpush1.msra.mxu0 0.0
        %2377 = vmatprep.subr.mxu0 0.0
        %2378 = vmatpush1.msra.mxu0 0.0
        %2379 = vmatprep.subr.mxu0 0.0
        %2380 = vmatpush1.msra.mxu0 0.0
        %2381 = vmatprep.subr.mxu0 0.0
        %2382 = vmatpush1.msra.mxu0 0.0
        %2383 = vmatprep.subr.mxu0 0.0
        %2384 = vmatpush1.msra.mxu0 0.0
        %2385 = vmatprep.subr.mxu0 0.0
        %2386 = vmatpush1.msra.mxu0 0.0
        %2387 = vmatprep.mubr.f32.mxu0 0.0
        %2388 = vmatmul.mubr.f32.gmra.mrb[0].mxu0 %v2252
        %v2389 = vpop.f32.mrb[0].mxu0
        %v2390 = vadd.f32 0.0, %v2389
        %v2391 = vpop.f32.mrb[0].mxu0
        %v2392 = vadd.f32 0.0, %v2391
        %2393 = vdwg.mxu0
        %2394 = vmatprep.subr.mxu0 %v2262
        %2395 = vmatpush1.msra.mxu0 %v2261
        %2396 = vmatprep.subr.mxu0 %v2266
        %2397 = vmatpush1.msra.mxu0 %v2265
        %2398 = vmatprep.subr.mxu0 %v2270
        %2399 = vmatpush1.msra.mxu0 %v2269
        %2400 = vmatprep.subr.mxu0 %v2274
        %2401 = vmatpush1.msra.mxu0 %v2273
        %2402 = vmatprep.subr.mxu0 %v2278
        %2403 = vmatpush1.msra.mxu0 %v2277
        %2404 = vmatprep.subr.mxu0 %v2282
        %2405 = vmatpush1.msra.mxu0 %v2281
        %2406 = vmatprep.subr.mxu0 %v2286
        %2407 = vmatpush1.msra.mxu0 %v2285
        %2408 = vmatprep.subr.mxu0 %v2290
        %2409 = vmatpush1.msra.mxu0 %v2289
        %2410 = vmatprep.subr.mxu0 %v2294
        %2411 = vmatpush1.msra.mxu0 %v2293
        %2412 = vmatprep.subr.mxu0 %v2298
        %2413 = vmatpush1.msra.mxu0 %v2297
        %2414 = vmatprep.subr.mxu0 %v2302
        %2415 = vmatpush1.msra.mxu0 %v2301
        %2416 = vmatprep.subr.mxu0 %v2306
        %2417 = vmatpush1.msra.mxu0 %v2305
        %2418 = vmatprep.subr.mxu0 %v2310
        %2419 = vmatpush1.msra.mxu0 %v2309
        %2420 = vmatprep.subr.mxu0 %v2314
        %2421 = vmatpush1.msra.mxu0 %v2313
        %2422 = vmatprep.subr.mxu0 %v2318
        %2423 = vmatpush1.msra.mxu0 %v2317
        %2424 = vmatprep.subr.mxu0 %v2322
        %2425 = vmatpush1.msra.mxu0 %v2321
        %2426 = vmatprep.subr.mxu0 0.0
        %2427 = vmatpush1.msra.mxu0 0.0
        %2428 = vmatprep.subr.mxu0 0.0
        %2429 = vmatpush1.msra.mxu0 0.0
        %2430 = vmatprep.subr.mxu0 0.0
        %2431 = vmatpush1.msra.mxu0 0.0
        %2432 = vmatprep.subr.mxu0 0.0
        %2433 = vmatpush1.msra.mxu0 0.0
        %2434 = vmatprep.subr.mxu0 0.0
        %2435 = vmatpush1.msra.mxu0 0.0
        %2436 = vmatprep.subr.mxu0 0.0
        %2437 = vmatpush1.msra.mxu0 0.0
        %2438 = vmatprep.subr.mxu0 0.0
        %2439 = vmatpush1.msra.mxu0 0.0
        %2440 = vmatprep.subr.mxu0 0.0
        %2441 = vmatpush1.msra.mxu0 0.0
        %2442 = vmatprep.subr.mxu0 0.0
        %2443 = vmatpush1.msra.mxu0 0.0
        %2444 = vmatprep.subr.mxu0 0.0
        %2445 = vmatpush1.msra.mxu0 0.0
        %2446 = vmatprep.subr.mxu0 0.0
        %2447 = vmatpush1.msra.mxu0 0.0
        %2448 = vmatprep.subr.mxu0 0.0
        %2449 = vmatpush1.msra.mxu0 0.0
        %2450 = vmatprep.subr.mxu0 0.0
        %2451 = vmatpush1.msra.mxu0 0.0
        %2452 = vmatprep.subr.mxu0 0.0
        %2453 = vmatpush1.msra.mxu0 0.0
        %2454 = vmatprep.subr.mxu0 0.0
        %2455 = vmatpush1.msra.mxu0 0.0
        %2456 = vmatprep.subr.mxu0 0.0
        %2457 = vmatpush1.msra.mxu0 0.0
        %2458 = vmatprep.mubr.f32.mxu0 0.0
        %2459 = vmatmul.mubr.f32.gmra.mrb[0].mxu0 %v2252
        %v2460 = vpop.f32.mrb[0].mxu0
        %v2461 = vadd.f32 0.0, %v2460
        %v2462 = vpop.f32.mrb[0].mxu0
        %v2463 = vadd.f32 0.0, %v2462
        %2464 = vdwg.mxu0
        %v2465 = vadd.f32 %v2255, %v2390
        %v2466 = vadd.f32 %v2256, %v2392
        %v2467 = vadd.f32 %v2257, %v2461
        %v2468 = vadd.f32 %v2258, %v2463
        %v2469 = vxor.u32 %v2465, 2147483648
        %v2470 = vmul.f32 %v2469, 1.442695
        %v2471 = vpow.pop %v2470
        %v2472 = vadd.f32 %v2471, 1.0
        %v2473 = vrcp.pop %v2472
        %v2474 = vmul.f32 1.0, %v2473
        %v2475 = vxor.u32 %v2466, 2147483648
        %v2476 = vmul.f32 %v2475, 1.442695
        %v2477 = vpow.pop %v2476
        %v2478 = vadd.f32 %v2477, 1.0
        %v2479 = vrcp.pop %v2478
        %v2480 = vmul.f32 1.0, %v2479
        %v2481 = vtanh.pop %v2467
        %v2482 = vxor.u32 %v2468, 2147483648
        %v2483 = vmul.f32 %v2482, 1.442695
        %v2484 = vpow.pop %v2483
        %v2485 = vadd.f32 %v2484, 1.0
        %v2486 = vrcp.pop %v2485
        %v2487 = vmul.f32 1.0, %v2486
        %v2488 = vmul.f32 %v2480, %v2250
        %v2489 = vmul.f32 %v2474, %v2481
        %v2490 = vadd.f32 %v2488, %v2489
        %v2491 = vtanh.pop %v2490
        %v2492 = vmul.f32 %v2487, %v2491
        %2493 = vst [vmem:[%s1242] sm:$0xff] %v2492
        %2494 = vst [vmem:[%s1530] sm:$0xff] %v2492
        %2495 = vst [vmem:[%s1532] sm:$0xff] %v2490
        %p2496 = scmp.eq.s32.totalorder %s19, 1
        // Predicated region
        $region57: #{lstm_model_forward.3} parent=43 // pred_check
          %p2497 = pneg %p2496
        $region58: #{lstm_model_forward.3} parent=43 // pred_check_branch
          %2499 = sbr.rel (%p2497) target = $region60
        $region59: #{lstm_model_forward.3} parent=43 // pred_region
          %v2500 = vld [vmem:[#allocation8] sm:$0xff]
          %v2501 = vld [vmem:[#allocation8 + $0x8] sm:$0xff]
          %v2502 = vld [vmem:[#allocation8 + $0x10] sm:$0xff]
          %v2503 = vld [vmem:[#allocation8 + $0x18] sm:$0xff]
          %v2504 = vld [vmem:[#allocation8 + $0x20] sm:$0xff]
          %v2505 = vld [vmem:[#allocation8 + $0x28] sm:$0xff]
          %v2506 = vld [vmem:[#allocation8 + $0x30] sm:$0xff]
          %v2507 = vld [vmem:[#allocation8 + $0x38] sm:$0xff]
          %v2508 = vld [vmem:[#allocation8 + $0x40] sm:$0xff]
          %v2509 = vld [vmem:[#allocation8 + $0x48] sm:$0xff]
          %v2510 = vld [vmem:[#allocation8 + $0x50] sm:$0xff]
          %v2511 = vld [vmem:[#allocation8 + $0x58] sm:$0xff]
          %v2512 = vld [vmem:[#allocation8 + $0x60] sm:$0xff]
          %v2513 = vld [vmem:[#allocation8 + $0x68] sm:$0xff]
          %v2514 = vld [vmem:[#allocation8 + $0x70] sm:$0xff]
          %v2515 = vld [vmem:[#allocation8 + $0x78] sm:$0xff]
          %v2516 = vld [vmem:[%s5] sm:$0x1]
          %v2518 = vlaneseq
          %v2519 = vshrl.u32 %v2518, 7
          %v2520 = vsub.s32 0, %v2519
          %v2521 = vrot.slane %v2516, %v2520
          %2523 = vmatprep.subr.mxu0 0.0
          %2524 = vmatpush1.msra.mxu0 %v2500
          %2525 = vmatprep.subr.mxu0 0.0
          %2526 = vmatpush1.msra.mxu0 %v2501
          %2527 = vmatprep.subr.mxu0 0.0
          %2528 = vmatpush1.msra.mxu0 %v2502
          %2529 = vmatprep.subr.mxu0 0.0
          %2530 = vmatpush1.msra.mxu0 %v2503
          %2531 = vmatprep.subr.mxu0 0.0
          %2532 = vmatpush1.msra.mxu0 %v2504
          %2533 = vmatprep.subr.mxu0 0.0
          %2534 = vmatpush1.msra.mxu0 %v2505
          %2535 = vmatprep.subr.mxu0 0.0
          %2536 = vmatpush1.msra.mxu0 %v2506
          %2537 = vmatprep.subr.mxu0 0.0
          %2538 = vmatpush1.msra.mxu0 %v2507
          %2539 = vmatprep.subr.mxu0 0.0
          %2540 = vmatpush1.msra.mxu0 %v2508
          %2541 = vmatprep.subr.mxu0 0.0
          %2542 = vmatpush1.msra.mxu0 %v2509
          %2543 = vmatprep.subr.mxu0 0.0
          %2544 = vmatpush1.msra.mxu0 %v2510
          %2545 = vmatprep.subr.mxu0 0.0
          %2546 = vmatpush1.msra.mxu0 %v2511
          %2547 = vmatprep.subr.mxu0 0.0
          %2548 = vmatpush1.msra.mxu0 %v2512
          %2549 = vmatprep.subr.mxu0 0.0
          %2550 = vmatpush1.msra.mxu0 %v2513
          %2551 = vmatprep.subr.mxu0 0.0
          %2552 = vmatpush1.msra.mxu0 %v2514
          %2553 = vmatprep.subr.mxu0 0.0
          %2554 = vmatpush1.msra.mxu0 %v2515
          %2555 = vmatprep.subr.mxu0 0.0
          %2556 = vmatpush1.msra.mxu0 0.0
          %2557 = vmatprep.subr.mxu0 0.0
          %2558 = vmatpush1.msra.mxu0 0.0
          %2559 = vmatprep.subr.mxu0 0.0
          %2560 = vmatpush1.msra.mxu0 0.0
          %2561 = vmatprep.subr.mxu0 0.0
          %2562 = vmatpush1.msra.mxu0 0.0
          %2563 = vmatprep.subr.mxu0 0.0
          %2564 = vmatpush1.msra.mxu0 0.0
          %2565 = vmatprep.subr.mxu0 0.0
          %2566 = vmatpush1.msra.mxu0 0.0
          %2567 = vmatprep.subr.mxu0 0.0
          %2568 = vmatpush1.msra.mxu0 0.0
          %2569 = vmatprep.subr.mxu0 0.0
          %2570 = vmatpush1.msra.mxu0 0.0
          %2571 = vmatprep.subr.mxu0 0.0
          %2572 = vmatpush1.msra.mxu0 0.0
          %2573 = vmatprep.subr.mxu0 0.0
          %2574 = vmatpush1.msra.mxu0 0.0
          %2575 = vmatprep.subr.mxu0 0.0
          %2576 = vmatpush1.msra.mxu0 0.0
          %2577 = vmatprep.subr.mxu0 0.0
          %2578 = vmatpush1.msra.mxu0 0.0
          %2579 = vmatprep.subr.mxu0 0.0
          %2580 = vmatpush1.msra.mxu0 0.0
          %2581 = vmatprep.subr.mxu0 0.0
          %2582 = vmatpush1.msra.mxu0 0.0
          %2583 = vmatprep.subr.mxu0 0.0
          %2584 = vmatpush1.msra.mxu0 0.0
          %2585 = vmatprep.subr.mxu0 0.0
          %2586 = vmatpush1.msra.mxu0 0.0
          %2587 = vmatprep.mubr.f32.mxu0 0.0
          %2588 = vmatmul.mubr.f32.gmra.mrb[0].mxu0 %v2492
          %v2589 = vpop.f32.mrb[0].mxu0
          %v2590 = vadd.f32 %v2521, %v2589
          %v2591 = vpop.f32.mrb[0].mxu0
          %2592 = vdwg.mxu0
          %2593 = vst [vmem:[%s6] sm:$0xff] %v2590
        $region60: #{lstm_model_forward.3} parent=43 // pred_fallthru
          _
        // Predicated region
        $region61: #{lstm_model_forward.3} parent=43 // pred_check
          %p2594 = pneg %p163
        $region62: #{lstm_model_forward.3} parent=43 // pred_check_branch
          %2596 = sbr.rel (%p2594) target = $region64
        $region63: #{lstm_model_forward.3} parent=43 // pred_region
          _
        $region64: #{lstm_model_forward.3} parent=43 // pred_fallthru
          _
        // Predicated region
        $region65: #{lstm_model_forward.3} parent=43 // pred_check
          %p2597 = pneg %p163
        $region66: #{lstm_model_forward.3} parent=43 // pred_check_branch
          %2599 = sbr.rel (%p2597) target = $region68
        $region67: #{lstm_model_forward.3} parent=43 // pred_region
          _
        $region68: #{lstm_model_forward.3} parent=43 // pred_fallthru
          _
      $region44: #{lstm_model_forward.3} parent=5 // pred_fallthru
        _
      %p2600 = scmp.le.s32.totalorder 2, %s14
      // Predicated region
      $region69: #{lstm_model_forward.3} parent=5 // pred_check
        %p2601 = pneg %p2600
      $region70: #{lstm_model_forward.3} parent=5 // pred_check_branch
        %2603 = sbr.rel (%p2601) target = $region72
      $region71: #{lstm_model_forward.3} parent=5 // pred_region
        %s2604 = ssub.s32 %s14, 2
      $region72: #{lstm_model_forward.3} parent=5 // pred_fallthru
        _
    $region6: #{lstm_model_forward.3} parent=1 // loop_footer
      %s18 = sadd.s32 1, %s14
    $region7: #{lstm_model_forward.3} parent=1 // loop_footer_branch
      %13 = sbr.rel target = $region3
    $region8: #{lstm_model_forward.3} parent=1 // loop_exit
      _
    %2605 = vsyncpa [#allocation7], 1
    %s2606 = scalar_lea.sflag [#allocation7], 1
    %2607 = vsyncpa %s2606, 1
    %2608 = vsyncpa [#allocation9], 1

</llo_original>
